<compile_context>
chip_gen: v6e
topology: v6e:2x2x1
jax: 0.10.0
libtpu: 0.0.40
codegen_flags: <defaults>
</compile_context>

<pallas_src>
import functools

import jax
import jax.numpy as jnp
from jax.experimental import pallas as pl
from jax.experimental.pallas import tpu as pltpu


# --------------------------------------------------------------------------
# Fused RegularBlock kernel
# --------------------------------------------------------------------------

def _regular_block_kernel(x_ref, *refs, depth, n_vertices):
    # refs layout:
    #   [w1_0, b1_0, ..., w1_{d-1}, b1_{d-1},      (MLP branch 1)
    #    w2_0, b2_0, ..., w2_{d-1}, b2_{d-1},      (MLP branch 2)
    #    w_top, w_bot, b_skip,                      (skip 1x1 conv, split)
    #    out_ref]
    n_mlp = 2 * depth
    stack1 = refs[:n_mlp]
    stack2 = refs[n_mlp:2 * n_mlp]
    wt_ref = refs[2 * n_mlp]
    wb_ref = refs[2 * n_mlp + 1]
    bs_ref = refs[2 * n_mlp + 2]
    out_ref = refs[2 * n_mlp + 3]

    n = n_vertices
    x = x_ref[0].astype(jnp.float32)                 # (N*N, Cin)

    def mlp(stack):
        h = x
        for layer in range(depth):                    # static unroll
            w = stack[2 * layer][...]                 # (Ci, Co)
            b = stack[2 * layer + 1][...]             # (1, Co)
            h = jnp.dot(h, w, preferred_element_type=jnp.float32) + b
            h = jnp.maximum(h, 0.0)
        return h                                      # (N*N, Cout) f32

    h1 = mlp(stack1)
    h2 = mlp(stack2)
    cout = h1.shape[-1]

    # Per-channel vertex product: mult[i,j,c] = sum_k h1[i,k,c] * h2[k,j,c].
    # Channels sit on the lane axis, so each k-step is a lane-dense VPU
    # broadcast-FMA -- no tiny MXU matmuls for N << 128.
    h1_3 = h1.reshape(n, n, cout)                     # leading-dim relayout
    h2_3 = h2.reshape(n, n, cout)
    mult = jnp.zeros((n, n, cout), jnp.float32)
    for k in range(n):                                # static unroll over N
        mult = mult + h1_3[:, k:k + 1, :] * h2_3[k:k + 1, :, :]
    mult_f = mult.reshape(n * n, cout)

    # Skip: 1x1 conv of concat(x, mult)  ==  x @ W_top + mult @ W_bot + bias.
    out = jnp.dot(x, wt_ref[...], preferred_element_type=jnp.float32)
    out = out + jnp.dot(mult_f, wb_ref[...], preferred_element_type=jnp.float32)
    out = out + bs_ref[...]
    out_ref[0] = out.astype(out_ref.dtype)


# --------------------------------------------------------------------------
# Wrapper: one pallas_call per RegularBlock
# --------------------------------------------------------------------------

def _block_vmem_limit_bytes(nn, cin, cout, depth):
    """Rough per-step working-set estimate -> explicit scoped-VMEM limit."""
    itemsize = 4
    act = 2 * nn * cin + 2 * nn * cout              # double-buffered x / out
    live = 6 * nn * max(cin, cout)                  # h1, h2, mult + transients
    wts = 2 * (cin * cout + max(depth - 1, 0) * cout * cout)   # two MLP stacks
    wts += cin * cout + cout * cout + 4 * depth * cout         # skip + biases
    est = itemsize * (act + live + 2 * wts)
    return int(min(max(2 * est, 32 * 1024 * 1024), 96 * 1024 * 1024))


def pallas_regular_block(x_flat, params, n_vertices):
    """Fused RegularBlock.  x_flat: (B, N*N, Cin) channel-last -> (B, N*N, Cout)."""
    b, nn, cin = x_flat.shape
    assert nn == n_vertices * n_vertices
    depth = len(params["mlp1"])
    cout = params["mlp1"][-1][0].shape[1]

    args = [x_flat]
    in_specs = [pl.BlockSpec((1, nn, cin), lambda i: (i, 0, 0))]
    for stack in (params["mlp1"], params["mlp2"]):
        for w, bias in stack:
            ci, co = w.shape
            in_specs.append(pl.BlockSpec((ci, co), lambda i: (0, 0)))
            in_specs.append(pl.BlockSpec((1, co), lambda i: (0, 0)))
            args.append(w)
            args.append(bias.reshape(1, co))
    w_top, w_bot, b_skip = params["skip"]
    in_specs += [
        pl.BlockSpec((cin, cout), lambda i: (0, 0)),
        pl.BlockSpec((cout, cout), lambda i: (0, 0)),
        pl.BlockSpec((1, cout), lambda i: (0, 0)),
    ]
    args += [w_top, w_bot, b_skip.reshape(1, cout)]

    return pl.pallas_call(
        functools.partial(_regular_block_kernel, depth=depth,
                          n_vertices=n_vertices),
        out_shape=jax.ShapeDtypeStruct((b, nn, cout), x_flat.dtype),
        grid_spec=pltpu.PrefetchScalarGridSpec(
            num_scalar_prefetch=0,
            grid=(b,),
            in_specs=in_specs,
            out_specs=pl.BlockSpec((1, nn, cout), lambda i: (i, 0, 0))),
        compiler_params=pltpu.CompilerParams(
            dimension_semantics=("parallel",),
            vmem_limit_bytes=_block_vmem_limit_bytes(nn, cin, cout, depth)),
    )(*args)


# --------------------------------------------------------------------------
# Parameters (channel-last 1x1-conv weights: (Cin, Cout))
# --------------------------------------------------------------------------

def init_mlp_params(key, in_f, out_f, depth):
    layers = []
    f_in = in_f
    for _ in range(depth):
        key, kw, kb = jax.random.split(key, 3)
        w = 0.1 * jax.random.normal(kw, (f_in, out_f), jnp.float32)
        b = 0.1 * jax.random.normal(kb, (out_f,), jnp.float32)
        layers.append((w, b))
        f_in = out_f
    return key, layers


def init_regular_block_params(key, in_f, out_f, depth):
    key, mlp1 = init_mlp_params(key, in_f, out_f, depth)
    key, mlp2 = init_mlp_params(key, in_f, out_f, depth)
    key, kw1, kw2, kb = jax.random.split(key, 4)
    w_top = 0.1 * jax.random.normal(kw1, (in_f, out_f), jnp.float32)
    w_bot = 0.1 * jax.random.normal(kw2, (out_f, out_f), jnp.float32)
    b = 0.1 * jax.random.normal(kb, (out_f,), jnp.float32)
    return key, {"mlp1": mlp1, "mlp2": mlp2, "skip": (w_top, w_bot, b)}


def init_base_model_params(key, original_features_num, num_blocks,
                           in_features, out_features, depth_of_mlp):
    blocks = []
    last = original_features_num
    for _ in range(num_blocks - 1):
        key, p = init_regular_block_params(key, last, in_features, depth_of_mlp)
        blocks.append(p)
        last = in_features
    # Final block takes `in_features` input channels, as in the reference.
    key, p = init_regular_block_params(key, in_features, out_features,
                                       depth_of_mlp)
    blocks.append(p)
    return blocks


# --------------------------------------------------------------------------
# Model forward (only free metadata reshapes outside the kernels)
# --------------------------------------------------------------------------

def base_model_forward(x, params, original_features_num,
                       hbm_dtype=jnp.float32):
    # x: (B, n_vertices, n_vertices, original_features_num), NHWC like torch.
    if x.shape[3] != original_features_num:
        print("expected input feature {} and got {}".format(
            original_features_num, x.shape[3]))
        return None
    bsz, n, _, c = x.shape
    # Channel-last is kept throughout -> no NCHW<->NHWC transposes at all.
    h = x.astype(hbm_dtype).reshape(bsz, n * n, c)     # metadata-only
    for p in params:
        h = pallas_regular_block(h, p, n)
    return h.reshape(bsz, n, n, h.shape[-1]).astype(x.dtype)


# --------------------------------------------------------------------------
# Pure-JAX reference (for correctness check)
# --------------------------------------------------------------------------

_HI = jax.lax.Precision.HIGHEST


def _ref_mlp(h, stack):
    for w, b in stack:
        h = jnp.maximum(jnp.einsum("bijc,co->bijo", h, w, precision=_HI) + b,
                        0.0)
    return h


def reference_forward(x_nhwc, params, original_features_num):
    h = x_nhwc
    for p in params:
        m1 = _ref_mlp(h, p["mlp1"])
        m2 = _ref_mlp(h, p["mlp2"])
        mult = jnp.einsum("bikc,bkjc->bijc", m1, m2, precision=_HI)
        wt, wb, bb = p["skip"]
        h = (jnp.einsum("bijc,co->bijo", h, wt, precision=_HI)
             + jnp.einsum("bijc,co->bijo", mult, wb, precision=_HI)
             + bb)
    return h


# --------------------------------------------------------------------------
# Demo
# --------------------------------------------------------------------------

if __name__ == "__main__":
    original_features_num = 4
    num_blocks = 2
    in_features = 8
    out_features = 8
    depth_of_mlp = 2

    B, N = 2, 8  # batch of graphs, n_vertices (multiple of 8)

    key = jax.random.PRNGKey(0)
    key_params, key_x = jax.random.split(key)
    params = init_base_model_params(
        key_params, original_features_num, num_blocks,
        in_features, out_features, depth_of_mlp)

    x = jax.random.normal(key_x, (B, N, N, original_features_num), jnp.float32)

    fwd = jax.jit(functools.partial(
        base_model_forward, original_features_num=original_features_num))
    out = jax.block_until_ready(fwd(x, params))

    assert out.shape == (B, N, N, out_features), out.shape
    assert jnp.all(jnp.isfinite(out))

    ref = reference_forward(x, params, original_features_num)
    assert jnp.allclose(out, ref, rtol=1e-3, atol=1e-4), \
        float(jnp.max(jnp.abs(out - ref)))

    print("KERNEL_OK")
</pallas_src>

<mosaic_0001>
module attributes {stable_mosaic.version = 11 : i64} {
  func.func @_regular_block_kernel(%arg0: i32, %arg1: memref<1x64x4xf32, #tpu.memory_space<vmem>>, %arg2: memref<4x8xf32, #tpu.memory_space<vmem>>, %arg3: memref<1x8xf32, #tpu.memory_space<vmem>>, %arg4: memref<8x8xf32, #tpu.memory_space<vmem>>, %arg5: memref<1x8xf32, #tpu.memory_space<vmem>>, %arg6: memref<4x8xf32, #tpu.memory_space<vmem>>, %arg7: memref<1x8xf32, #tpu.memory_space<vmem>>, %arg8: memref<8x8xf32, #tpu.memory_space<vmem>>, %arg9: memref<1x8xf32, #tpu.memory_space<vmem>>, %arg10: memref<4x8xf32, #tpu.memory_space<vmem>>, %arg11: memref<8x8xf32, #tpu.memory_space<vmem>>, %arg12: memref<1x8xf32, #tpu.memory_space<vmem>>, %arg13: memref<1x64x8xf32, #tpu.memory_space<vmem>>) attributes {dimension_semantics = [#tpu.dimension_semantics<parallel>], iteration_bounds = array<i64: 2>, scalar_prefetch = 0 : i64, scratch_operands = 0 : i64, tpu.core_type = #tpu.core_type<tc>, window_params = [{transform_indices = @transform_0, window_bounds = array<i64: 1, 64, 4>}, {pipeline_mode = #tpu.pipeline_mode<synchronous>, transform_indices = @transform_1, window_bounds = array<i64: 4, 8>}, {pipeline_mode = #tpu.pipeline_mode<synchronous>, transform_indices = @transform_2, window_bounds = array<i64: 1, 8>}, {pipeline_mode = #tpu.pipeline_mode<synchronous>, transform_indices = @transform_3, window_bounds = array<i64: 8, 8>}, {pipeline_mode = #tpu.pipeline_mode<synchronous>, transform_indices = @transform_4, window_bounds = array<i64: 1, 8>}, {pipeline_mode = #tpu.pipeline_mode<synchronous>, transform_indices = @transform_5, window_bounds = array<i64: 4, 8>}, {pipeline_mode = #tpu.pipeline_mode<synchronous>, transform_indices = @transform_6, window_bounds = array<i64: 1, 8>}, {pipeline_mode = #tpu.pipeline_mode<synchronous>, transform_indices = @transform_7, window_bounds = array<i64: 8, 8>}, {pipeline_mode = #tpu.pipeline_mode<synchronous>, transform_indices = @transform_8, window_bounds = array<i64: 1, 8>}, {pipeline_mode = #tpu.pipeline_mode<synchronous>, transform_indices = @transform_9, window_bounds = array<i64: 4, 8>}, {pipeline_mode = #tpu.pipeline_mode<synchronous>, transform_indices = @transform_10, window_bounds = array<i64: 8, 8>}, {pipeline_mode = #tpu.pipeline_mode<synchronous>, transform_indices = @transform_11, window_bounds = array<i64: 1, 8>}, {transform_indices = @transform_12, window_bounds = array<i64: 1, 64, 8>}]} {
    %c0 = arith.constant 0 : index
    %c0_0 = arith.constant 0 : index
    %c0_1 = arith.constant 0 : index
    %0 = vector.load %arg1[%c0, %c0_0, %c0_1] : memref<1x64x4xf32, #tpu.memory_space<vmem>>, vector<1x64x4xf32>
    %1 = vector.shape_cast %0 : vector<1x64x4xf32> to vector<64x4xf32>
    %c0_2 = arith.constant 0 : index
    %c0_3 = arith.constant 0 : index
    %2 = vector.load %arg2[%c0_2, %c0_3] : memref<4x8xf32, #tpu.memory_space<vmem>>, vector<4x8xf32>
    %c0_4 = arith.constant 0 : index
    %c0_5 = arith.constant 0 : index
    %3 = vector.load %arg3[%c0_4, %c0_5] : memref<1x8xf32, #tpu.memory_space<vmem>>, vector<1x8xf32>
    %cst = arith.constant dense<0.000000e+00> : vector<64x8xf32>
    %4 = tpu.matmul %1, %2, %cst {dimension_numbers = #tpu.dot_dimension_numbers<[1], [0], [0], [1], [0, 0, 1, 1], [], []>} : vector<64x4xf32>, vector<4x8xf32>, vector<64x8xf32> -> vector<64x8xf32>
    %5 = vector.broadcast %3 : vector<1x8xf32> to vector<64x8xf32>
    %6 = arith.addf %4, %5 : vector<64x8xf32>
    %cst_6 = arith.constant 0.000000e+00 : f32
    %7 = vector.broadcast %cst_6 : f32 to vector<64x8xf32>
    %8 = arith.maximumf %6, %7 : vector<64x8xf32>
    %c0_7 = arith.constant 0 : index
    %c0_8 = arith.constant 0 : index
    %9 = vector.load %arg4[%c0_7, %c0_8] : memref<8x8xf32, #tpu.memory_space<vmem>>, vector<8x8xf32>
    %c0_9 = arith.constant 0 : index
    %c0_10 = arith.constant 0 : index
    %10 = vector.load %arg5[%c0_9, %c0_10] : memref<1x8xf32, #tpu.memory_space<vmem>>, vector<1x8xf32>
    %cst_11 = arith.constant dense<0.000000e+00> : vector<64x8xf32>
    %11 = tpu.matmul %8, %9, %cst_11 {dimension_numbers = #tpu.dot_dimension_numbers<[1], [0], [0], [1], [0, 0, 1, 1], [], []>} : vector<64x8xf32>, vector<8x8xf32>, vector<64x8xf32> -> vector<64x8xf32>
    %12 = vector.broadcast %10 : vector<1x8xf32> to vector<64x8xf32>
    %13 = arith.addf %11, %12 : vector<64x8xf32>
    %cst_12 = arith.constant 0.000000e+00 : f32
    %14 = vector.broadcast %cst_12 : f32 to vector<64x8xf32>
    %15 = arith.maximumf %13, %14 : vector<64x8xf32>
    %c0_13 = arith.constant 0 : index
    %c0_14 = arith.constant 0 : index
    %16 = vector.load %arg6[%c0_13, %c0_14] : memref<4x8xf32, #tpu.memory_space<vmem>>, vector<4x8xf32>
    %c0_15 = arith.constant 0 : index
    %c0_16 = arith.constant 0 : index
    %17 = vector.load %arg7[%c0_15, %c0_16] : memref<1x8xf32, #tpu.memory_space<vmem>>, vector<1x8xf32>
    %cst_17 = arith.constant dense<0.000000e+00> : vector<64x8xf32>
    %18 = tpu.matmul %1, %16, %cst_17 {dimension_numbers = #tpu.dot_dimension_numbers<[1], [0], [0], [1], [0, 0, 1, 1], [], []>} : vector<64x4xf32>, vector<4x8xf32>, vector<64x8xf32> -> vector<64x8xf32>
    %19 = vector.broadcast %17 : vector<1x8xf32> to vector<64x8xf32>
    %20 = arith.addf %18, %19 : vector<64x8xf32>
    %cst_18 = arith.constant 0.000000e+00 : f32
    %21 = vector.broadcast %cst_18 : f32 to vector<64x8xf32>
    %22 = arith.maximumf %20, %21 : vector<64x8xf32>
    %c0_19 = arith.constant 0 : index
    %c0_20 = arith.constant 0 : index
    %23 = vector.load %arg8[%c0_19, %c0_20] : memref<8x8xf32, #tpu.memory_space<vmem>>, vector<8x8xf32>
    %c0_21 = arith.constant 0 : index
    %c0_22 = arith.constant 0 : index
    %24 = vector.load %arg9[%c0_21, %c0_22] : memref<1x8xf32, #tpu.memory_space<vmem>>, vector<1x8xf32>
    %cst_23 = arith.constant dense<0.000000e+00> : vector<64x8xf32>
    %25 = tpu.matmul %22, %23, %cst_23 {dimension_numbers = #tpu.dot_dimension_numbers<[1], [0], [0], [1], [0, 0, 1, 1], [], []>} : vector<64x8xf32>, vector<8x8xf32>, vector<64x8xf32> -> vector<64x8xf32>
    %26 = vector.broadcast %24 : vector<1x8xf32> to vector<64x8xf32>
    %27 = arith.addf %25, %26 : vector<64x8xf32>
    %cst_24 = arith.constant 0.000000e+00 : f32
    %28 = vector.broadcast %cst_24 : f32 to vector<64x8xf32>
    %29 = arith.maximumf %27, %28 : vector<64x8xf32>
    %30 = vector.shape_cast %15 : vector<64x8xf32> to vector<8x8x8xf32>
    %31 = vector.shape_cast %29 : vector<64x8xf32> to vector<8x8x8xf32>
    %cst_25 = arith.constant 0.000000e+00 : f32
    %32 = vector.broadcast %cst_25 : f32 to vector<8x8x8xf32>
    %33 = vector.extract_strided_slice %30 {offsets = [0, 0, 0], sizes = [8, 1, 8], strides = [1, 1, 1]} : vector<8x8x8xf32> to vector<8x1x8xf32>
    %34 = vector.extract_strided_slice %31 {offsets = [0, 0, 0], sizes = [1, 8, 8], strides = [1, 1, 1]} : vector<8x8x8xf32> to vector<1x8x8xf32>
    %35 = vector.broadcast %33 : vector<8x1x8xf32> to vector<8x8x8xf32>
    %36 = vector.broadcast %34 : vector<1x8x8xf32> to vector<8x8x8xf32>
    %37 = arith.mulf %35, %36 : vector<8x8x8xf32>
    %38 = arith.addf %32, %37 : vector<8x8x8xf32>
    %39 = vector.extract_strided_slice %30 {offsets = [0, 1, 0], sizes = [8, 1, 8], strides = [1, 1, 1]} : vector<8x8x8xf32> to vector<8x1x8xf32>
    %40 = vector.extract_strided_slice %31 {offsets = [1, 0, 0], sizes = [1, 8, 8], strides = [1, 1, 1]} : vector<8x8x8xf32> to vector<1x8x8xf32>
    %41 = vector.broadcast %39 : vector<8x1x8xf32> to vector<8x8x8xf32>
    %42 = vector.broadcast %40 : vector<1x8x8xf32> to vector<8x8x8xf32>
    %43 = arith.mulf %41, %42 : vector<8x8x8xf32>
    %44 = arith.addf %38, %43 : vector<8x8x8xf32>
    %45 = vector.extract_strided_slice %30 {offsets = [0, 2, 0], sizes = [8, 1, 8], strides = [1, 1, 1]} : vector<8x8x8xf32> to vector<8x1x8xf32>
    %46 = vector.extract_strided_slice %31 {offsets = [2, 0, 0], sizes = [1, 8, 8], strides = [1, 1, 1]} : vector<8x8x8xf32> to vector<1x8x8xf32>
    %47 = vector.broadcast %45 : vector<8x1x8xf32> to vector<8x8x8xf32>
    %48 = vector.broadcast %46 : vector<1x8x8xf32> to vector<8x8x8xf32>
    %49 = arith.mulf %47, %48 : vector<8x8x8xf32>
    %50 = arith.addf %44, %49 : vector<8x8x8xf32>
    %51 = vector.extract_strided_slice %30 {offsets = [0, 3, 0], sizes = [8, 1, 8], strides = [1, 1, 1]} : vector<8x8x8xf32> to vector<8x1x8xf32>
    %52 = vector.extract_strided_slice %31 {offsets = [3, 0, 0], sizes = [1, 8, 8], strides = [1, 1, 1]} : vector<8x8x8xf32> to vector<1x8x8xf32>
    %53 = vector.broadcast %51 : vector<8x1x8xf32> to vector<8x8x8xf32>
    %54 = vector.broadcast %52 : vector<1x8x8xf32> to vector<8x8x8xf32>
    %55 = arith.mulf %53, %54 : vector<8x8x8xf32>
    %56 = arith.addf %50, %55 : vector<8x8x8xf32>
    %57 = vector.extract_strided_slice %30 {offsets = [0, 4, 0], sizes = [8, 1, 8], strides = [1, 1, 1]} : vector<8x8x8xf32> to vector<8x1x8xf32>
    %58 = vector.extract_strided_slice %31 {offsets = [4, 0, 0], sizes = [1, 8, 8], strides = [1, 1, 1]} : vector<8x8x8xf32> to vector<1x8x8xf32>
    %59 = vector.broadcast %57 : vector<8x1x8xf32> to vector<8x8x8xf32>
    %60 = vector.broadcast %58 : vector<1x8x8xf32> to vector<8x8x8xf32>
    %61 = arith.mulf %59, %60 : vector<8x8x8xf32>
    %62 = arith.addf %56, %61 : vector<8x8x8xf32>
    %63 = vector.extract_strided_slice %30 {offsets = [0, 5, 0], sizes = [8, 1, 8], strides = [1, 1, 1]} : vector<8x8x8xf32> to vector<8x1x8xf32>
    %64 = vector.extract_strided_slice %31 {offsets = [5, 0, 0], sizes = [1, 8, 8], strides = [1, 1, 1]} : vector<8x8x8xf32> to vector<1x8x8xf32>
    %65 = vector.broadcast %63 : vector<8x1x8xf32> to vector<8x8x8xf32>
    %66 = vector.broadcast %64 : vector<1x8x8xf32> to vector<8x8x8xf32>
    %67 = arith.mulf %65, %66 : vector<8x8x8xf32>
    %68 = arith.addf %62, %67 : vector<8x8x8xf32>
    %69 = vector.extract_strided_slice %30 {offsets = [0, 6, 0], sizes = [8, 1, 8], strides = [1, 1, 1]} : vector<8x8x8xf32> to vector<8x1x8xf32>
    %70 = vector.extract_strided_slice %31 {offsets = [6, 0, 0], sizes = [1, 8, 8], strides = [1, 1, 1]} : vector<8x8x8xf32> to vector<1x8x8xf32>
    %71 = vector.broadcast %69 : vector<8x1x8xf32> to vector<8x8x8xf32>
    %72 = vector.broadcast %70 : vector<1x8x8xf32> to vector<8x8x8xf32>
    %73 = arith.mulf %71, %72 : vector<8x8x8xf32>
    %74 = arith.addf %68, %73 : vector<8x8x8xf32>
    %75 = vector.extract_strided_slice %30 {offsets = [0, 7, 0], sizes = [8, 1, 8], strides = [1, 1, 1]} : vector<8x8x8xf32> to vector<8x1x8xf32>
    %76 = vector.extract_strided_slice %31 {offsets = [7, 0, 0], sizes = [1, 8, 8], strides = [1, 1, 1]} : vector<8x8x8xf32> to vector<1x8x8xf32>
    %77 = vector.broadcast %75 : vector<8x1x8xf32> to vector<8x8x8xf32>
    %78 = vector.broadcast %76 : vector<1x8x8xf32> to vector<8x8x8xf32>
    %79 = arith.mulf %77, %78 : vector<8x8x8xf32>
    %80 = arith.addf %74, %79 : vector<8x8x8xf32>
    %81 = vector.shape_cast %80 : vector<8x8x8xf32> to vector<64x8xf32>
    %c0_26 = arith.constant 0 : index
    %c0_27 = arith.constant 0 : index
    %82 = vector.load %arg10[%c0_26, %c0_27] : memref<4x8xf32, #tpu.memory_space<vmem>>, vector<4x8xf32>
    %cst_28 = arith.constant dense<0.000000e+00> : vector<64x8xf32>
    %83 = tpu.matmul %1, %82, %cst_28 {dimension_numbers = #tpu.dot_dimension_numbers<[1], [0], [0], [1], [0, 0, 1, 1], [], []>} : vector<64x4xf32>, vector<4x8xf32>, vector<64x8xf32> -> vector<64x8xf32>
    %c0_29 = arith.constant 0 : index
    %c0_30 = arith.constant 0 : index
    %84 = vector.load %arg11[%c0_29, %c0_30] : memref<8x8xf32, #tpu.memory_space<vmem>>, vector<8x8xf32>
    %cst_31 = arith.constant dense<0.000000e+00> : vector<64x8xf32>
    %85 = tpu.matmul %81, %84, %cst_31 {dimension_numbers = #tpu.dot_dimension_numbers<[1], [0], [0], [1], [0, 0, 1, 1], [], []>} : vector<64x8xf32>, vector<8x8xf32>, vector<64x8xf32> -> vector<64x8xf32>
    %86 = arith.addf %83, %85 : vector<64x8xf32>
    %c0_32 = arith.constant 0 : index
    %c0_33 = arith.constant 0 : index
    %87 = vector.load %arg12[%c0_32, %c0_33] : memref<1x8xf32, #tpu.memory_space<vmem>>, vector<1x8xf32>
    %88 = vector.broadcast %87 : vector<1x8xf32> to vector<64x8xf32>
    %89 = arith.addf %86, %88 : vector<64x8xf32>
    %c0_34 = arith.constant 0 : index
    %c0_35 = arith.constant 0 : index
    %c0_36 = arith.constant 0 : index
    %90 = vector.load %arg13[%c0_34, %c0_35, %c0_36] : memref<1x64x8xf32, #tpu.memory_space<vmem>>, vector<1x64x8xf32>
    %91 = vector.shape_cast %90 : vector<1x64x8xf32> to vector<64x8xf32>
    %92 = vector.shape_cast %89 : vector<64x8xf32> to vector<1x64x8xf32>
    tpu.vector_store %arg13[%c0_34, %c0_35, %c0_36], %92 {strides = array<i32>} : memref<1x64x8xf32, #tpu.memory_space<vmem>>, vector<1x64x8xf32>,
    return
  }
  func.func @transform_0(%arg0: i32) -> (i32, i32, i32) {
    %c0_i32 = arith.constant 0 : i32
    %c0_i32_0 = arith.constant 0 : i32
    %c0_i32_1 = arith.constant 0 : i32
    return %arg0, %c0_i32, %c0_i32_0 : i32, i32, i32
  }
  func.func @transform_1(%arg0: i32) -> (i32, i32) {
    %c0_i32 = arith.constant 0 : i32
    %c0_i32_0 = arith.constant 0 : i32
    %c0_i32_1 = arith.constant 0 : i32
    return %c0_i32, %c0_i32_0 : i32, i32
  }
  func.func @transform_2(%arg0: i32) -> (i32, i32) {
    %c0_i32 = arith.constant 0 : i32
    %c0_i32_0 = arith.constant 0 : i32
    %c0_i32_1 = arith.constant 0 : i32
    return %c0_i32, %c0_i32_0 : i32, i32
  }
  func.func @transform_3(%arg0: i32) -> (i32, i32) {
    %c0_i32 = arith.constant 0 : i32
    %c0_i32_0 = arith.constant 0 : i32
    %c0_i32_1 = arith.constant 0 : i32
    return %c0_i32, %c0_i32_0 : i32, i32
  }
  func.func @transform_4(%arg0: i32) -> (i32, i32) {
    %c0_i32 = arith.constant 0 : i32
    %c0_i32_0 = arith.constant 0 : i32
    %c0_i32_1 = arith.constant 0 : i32
    return %c0_i32, %c0_i32_0 : i32, i32
  }
  func.func @transform_5(%arg0: i32) -> (i32, i32) {
    %c0_i32 = arith.constant 0 : i32
    %c0_i32_0 = arith.constant 0 : i32
    %c0_i32_1 = arith.constant 0 : i32
    return %c0_i32, %c0_i32_0 : i32, i32
  }
  func.func @transform_6(%arg0: i32) -> (i32, i32) {
    %c0_i32 = arith.constant 0 : i32
    %c0_i32_0 = arith.constant 0 : i32
    %c0_i32_1 = arith.constant 0 : i32
    return %c0_i32, %c0_i32_0 : i32, i32
  }
  func.func @transform_7(%arg0: i32) -> (i32, i32) {
    %c0_i32 = arith.constant 0 : i32
    %c0_i32_0 = arith.constant 0 : i32
    %c0_i32_1 = arith.constant 0 : i32
    return %c0_i32, %c0_i32_0 : i32, i32
  }
  func.func @transform_8(%arg0: i32) -> (i32, i32) {
    %c0_i32 = arith.constant 0 : i32
    %c0_i32_0 = arith.constant 0 : i32
    %c0_i32_1 = arith.constant 0 : i32
    return %c0_i32, %c0_i32_0 : i32, i32
  }
  func.func @transform_9(%arg0: i32) -> (i32, i32) {
    %c0_i32 = arith.constant 0 : i32
    %c0_i32_0 = arith.constant 0 : i32
    %c0_i32_1 = arith.constant 0 : i32
    return %c0_i32, %c0_i32_0 : i32, i32
  }
  func.func @transform_10(%arg0: i32) -> (i32, i32) {
    %c0_i32 = arith.constant 0 : i32
    %c0_i32_0 = arith.constant 0 : i32
    %c0_i32_1 = arith.constant 0 : i32
    return %c0_i32, %c0_i32_0 : i32, i32
  }
  func.func @transform_11(%arg0: i32) -> (i32, i32) {
    %c0_i32 = arith.constant 0 : i32
    %c0_i32_0 = arith.constant 0 : i32
    %c0_i32_1 = arith.constant 0 : i32
    return %c0_i32, %c0_i32_0 : i32, i32
  }
  func.func @transform_12(%arg0: i32) -> (i32, i32, i32) {
    %c0_i32 = arith.constant 0 : i32
    %c0_i32_0 = arith.constant 0 : i32
    %c0_i32_1 = arith.constant 0 : i32
    return %arg0, %c0_i32, %c0_i32_0 : i32, i32, i32
  }
}

module attributes {stable_mosaic.version = 11 : i64} {
  func.func @_regular_block_kernel(%arg0: i32, %arg1: memref<1x64x8xf32, #tpu.memory_space<vmem>>, %arg2: memref<8x8xf32, #tpu.memory_space<vmem>>, %arg3: memref<1x8xf32, #tpu.memory_space<vmem>>, %arg4: memref<8x8xf32, #tpu.memory_space<vmem>>, %arg5: memref<1x8xf32, #tpu.memory_space<vmem>>, %arg6: memref<8x8xf32, #tpu.memory_space<vmem>>, %arg7: memref<1x8xf32, #tpu.memory_space<vmem>>, %arg8: memref<8x8xf32, #tpu.memory_space<vmem>>, %arg9: memref<1x8xf32, #tpu.memory_space<vmem>>, %arg10: memref<8x8xf32, #tpu.memory_space<vmem>>, %arg11: memref<8x8xf32, #tpu.memory_space<vmem>>, %arg12: memref<1x8xf32, #tpu.memory_space<vmem>>, %arg13: memref<1x64x8xf32, #tpu.memory_space<vmem>>) attributes {dimension_semantics = [#tpu.dimension_semantics<parallel>], iteration_bounds = array<i64: 2>, scalar_prefetch = 0 : i64, scratch_operands = 0 : i64, tpu.core_type = #tpu.core_type<tc>, window_params = [{transform_indices = @transform_0, window_bounds = array<i64: 1, 64, 8>}, {pipeline_mode = #tpu.pipeline_mode<synchronous>, transform_indices = @transform_1, window_bounds = array<i64: 8, 8>}, {pipeline_mode = #tpu.pipeline_mode<synchronous>, transform_indices = @transform_2, window_bounds = array<i64: 1, 8>}, {pipeline_mode = #tpu.pipeline_mode<synchronous>, transform_indices = @transform_3, window_bounds = array<i64: 8, 8>}, {pipeline_mode = #tpu.pipeline_mode<synchronous>, transform_indices = @transform_4, window_bounds = array<i64: 1, 8>}, {pipeline_mode = #tpu.pipeline_mode<synchronous>, transform_indices = @transform_5, window_bounds = array<i64: 8, 8>}, {pipeline_mode = #tpu.pipeline_mode<synchronous>, transform_indices = @transform_6, window_bounds = array<i64: 1, 8>}, {pipeline_mode = #tpu.pipeline_mode<synchronous>, transform_indices = @transform_7, window_bounds = array<i64: 8, 8>}, {pipeline_mode = #tpu.pipeline_mode<synchronous>, transform_indices = @transform_8, window_bounds = array<i64: 1, 8>}, {pipeline_mode = #tpu.pipeline_mode<synchronous>, transform_indices = @transform_9, window_bounds = array<i64: 8, 8>}, {pipeline_mode = #tpu.pipeline_mode<synchronous>, transform_indices = @transform_10, window_bounds = array<i64: 8, 8>}, {pipeline_mode = #tpu.pipeline_mode<synchronous>, transform_indices = @transform_11, window_bounds = array<i64: 1, 8>}, {transform_indices = @transform_12, window_bounds = array<i64: 1, 64, 8>}]} {
    %c0 = arith.constant 0 : index
    %c0_0 = arith.constant 0 : index
    %c0_1 = arith.constant 0 : index
    %0 = vector.load %arg1[%c0, %c0_0, %c0_1] : memref<1x64x8xf32, #tpu.memory_space<vmem>>, vector<1x64x8xf32>
    %1 = vector.shape_cast %0 : vector<1x64x8xf32> to vector<64x8xf32>
    %c0_2 = arith.constant 0 : index
    %c0_3 = arith.constant 0 : index
    %2 = vector.load %arg2[%c0_2, %c0_3] : memref<8x8xf32, #tpu.memory_space<vmem>>, vector<8x8xf32>
    %c0_4 = arith.constant 0 : index
    %c0_5 = arith.constant 0 : index
    %3 = vector.load %arg3[%c0_4, %c0_5] : memref<1x8xf32, #tpu.memory_space<vmem>>, vector<1x8xf32>
    %cst = arith.constant dense<0.000000e+00> : vector<64x8xf32>
    %4 = tpu.matmul %1, %2, %cst {dimension_numbers = #tpu.dot_dimension_numbers<[1], [0], [0], [1], [0, 0, 1, 1], [], []>} : vector<64x8xf32>, vector<8x8xf32>, vector<64x8xf32> -> vector<64x8xf32>
    %5 = vector.broadcast %3 : vector<1x8xf32> to vector<64x8xf32>
    %6 = arith.addf %4, %5 : vector<64x8xf32>
    %cst_6 = arith.constant 0.000000e+00 : f32
    %7 = vector.broadcast %cst_6 : f32 to vector<64x8xf32>
    %8 = arith.maximumf %6, %7 : vector<64x8xf32>
    %c0_7 = arith.constant 0 : index
    %c0_8 = arith.constant 0 : index
    %9 = vector.load %arg4[%c0_7, %c0_8] : memref<8x8xf32, #tpu.memory_space<vmem>>, vector<8x8xf32>
    %c0_9 = arith.constant 0 : index
    %c0_10 = arith.constant 0 : index
    %10 = vector.load %arg5[%c0_9, %c0_10] : memref<1x8xf32, #tpu.memory_space<vmem>>, vector<1x8xf32>
    %cst_11 = arith.constant dense<0.000000e+00> : vector<64x8xf32>
    %11 = tpu.matmul %8, %9, %cst_11 {dimension_numbers = #tpu.dot_dimension_numbers<[1], [0], [0], [1], [0, 0, 1, 1], [], []>} : vector<64x8xf32>, vector<8x8xf32>, vector<64x8xf32> -> vector<64x8xf32>
    %12 = vector.broadcast %10 : vector<1x8xf32> to vector<64x8xf32>
    %13 = arith.addf %11, %12 : vector<64x8xf32>
    %cst_12 = arith.constant 0.000000e+00 : f32
    %14 = vector.broadcast %cst_12 : f32 to vector<64x8xf32>
    %15 = arith.maximumf %13, %14 : vector<64x8xf32>
    %c0_13 = arith.constant 0 : index
    %c0_14 = arith.constant 0 : index
    %16 = vector.load %arg6[%c0_13, %c0_14] : memref<8x8xf32, #tpu.memory_space<vmem>>, vector<8x8xf32>
    %c0_15 = arith.constant 0 : index
    %c0_16 = arith.constant 0 : index
    %17 = vector.load %arg7[%c0_15, %c0_16] : memref<1x8xf32, #tpu.memory_space<vmem>>, vector<1x8xf32>
    %cst_17 = arith.constant dense<0.000000e+00> : vector<64x8xf32>
    %18 = tpu.matmul %1, %16, %cst_17 {dimension_numbers = #tpu.dot_dimension_numbers<[1], [0], [0], [1], [0, 0, 1, 1], [], []>} : vector<64x8xf32>, vector<8x8xf32>, vector<64x8xf32> -> vector<64x8xf32>
    %19 = vector.broadcast %17 : vector<1x8xf32> to vector<64x8xf32>
    %20 = arith.addf %18, %19 : vector<64x8xf32>
    %cst_18 = arith.constant 0.000000e+00 : f32
    %21 = vector.broadcast %cst_18 : f32 to vector<64x8xf32>
    %22 = arith.maximumf %20, %21 : vector<64x8xf32>
    %c0_19 = arith.constant 0 : index
    %c0_20 = arith.constant 0 : index
    %23 = vector.load %arg8[%c0_19, %c0_20] : memref<8x8xf32, #tpu.memory_space<vmem>>, vector<8x8xf32>
    %c0_21 = arith.constant 0 : index
    %c0_22 = arith.constant 0 : index
    %24 = vector.load %arg9[%c0_21, %c0_22] : memref<1x8xf32, #tpu.memory_space<vmem>>, vector<1x8xf32>
    %cst_23 = arith.constant dense<0.000000e+00> : vector<64x8xf32>
    %25 = tpu.matmul %22, %23, %cst_23 {dimension_numbers = #tpu.dot_dimension_numbers<[1], [0], [0], [1], [0, 0, 1, 1], [], []>} : vector<64x8xf32>, vector<8x8xf32>, vector<64x8xf32> -> vector<64x8xf32>
    %26 = vector.broadcast %24 : vector<1x8xf32> to vector<64x8xf32>
    %27 = arith.addf %25, %26 : vector<64x8xf32>
    %cst_24 = arith.constant 0.000000e+00 : f32
    %28 = vector.broadcast %cst_24 : f32 to vector<64x8xf32>
    %29 = arith.maximumf %27, %28 : vector<64x8xf32>
    %30 = vector.shape_cast %15 : vector<64x8xf32> to vector<8x8x8xf32>
    %31 = vector.shape_cast %29 : vector<64x8xf32> to vector<8x8x8xf32>
    %cst_25 = arith.constant 0.000000e+00 : f32
    %32 = vector.broadcast %cst_25 : f32 to vector<8x8x8xf32>
    %33 = vector.extract_strided_slice %30 {offsets = [0, 0, 0], sizes = [8, 1, 8], strides = [1, 1, 1]} : vector<8x8x8xf32> to vector<8x1x8xf32>
    %34 = vector.extract_strided_slice %31 {offsets = [0, 0, 0], sizes = [1, 8, 8], strides = [1, 1, 1]} : vector<8x8x8xf32> to vector<1x8x8xf32>
    %35 = vector.broadcast %33 : vector<8x1x8xf32> to vector<8x8x8xf32>
    %36 = vector.broadcast %34 : vector<1x8x8xf32> to vector<8x8x8xf32>
    %37 = arith.mulf %35, %36 : vector<8x8x8xf32>
    %38 = arith.addf %32, %37 : vector<8x8x8xf32>
    %39 = vector.extract_strided_slice %30 {offsets = [0, 1, 0], sizes = [8, 1, 8], strides = [1, 1, 1]} : vector<8x8x8xf32> to vector<8x1x8xf32>
    %40 = vector.extract_strided_slice %31 {offsets = [1, 0, 0], sizes = [1, 8, 8], strides = [1, 1, 1]} : vector<8x8x8xf32> to vector<1x8x8xf32>
    %41 = vector.broadcast %39 : vector<8x1x8xf32> to vector<8x8x8xf32>
    %42 = vector.broadcast %40 : vector<1x8x8xf32> to vector<8x8x8xf32>
    %43 = arith.mulf %41, %42 : vector<8x8x8xf32>
    %44 = arith.addf %38, %43 : vector<8x8x8xf32>
    %45 = vector.extract_strided_slice %30 {offsets = [0, 2, 0], sizes = [8, 1, 8], strides = [1, 1, 1]} : vector<8x8x8xf32> to vector<8x1x8xf32>
    %46 = vector.extract_strided_slice %31 {offsets = [2, 0, 0], sizes = [1, 8, 8], strides = [1, 1, 1]} : vector<8x8x8xf32> to vector<1x8x8xf32>
    %47 = vector.broadcast %45 : vector<8x1x8xf32> to vector<8x8x8xf32>
    %48 = vector.broadcast %46 : vector<1x8x8xf32> to vector<8x8x8xf32>
    %49 = arith.mulf %47, %48 : vector<8x8x8xf32>
    %50 = arith.addf %44, %49 : vector<8x8x8xf32>
    %51 = vector.extract_strided_slice %30 {offsets = [0, 3, 0], sizes = [8, 1, 8], strides = [1, 1, 1]} : vector<8x8x8xf32> to vector<8x1x8xf32>
    %52 = vector.extract_strided_slice %31 {offsets = [3, 0, 0], sizes = [1, 8, 8], strides = [1, 1, 1]} : vector<8x8x8xf32> to vector<1x8x8xf32>
    %53 = vector.broadcast %51 : vector<8x1x8xf32> to vector<8x8x8xf32>
    %54 = vector.broadcast %52 : vector<1x8x8xf32> to vector<8x8x8xf32>
    %55 = arith.mulf %53, %54 : vector<8x8x8xf32>
    %56 = arith.addf %50, %55 : vector<8x8x8xf32>
    %57 = vector.extract_strided_slice %30 {offsets = [0, 4, 0], sizes = [8, 1, 8], strides = [1, 1, 1]} : vector<8x8x8xf32> to vector<8x1x8xf32>
    %58 = vector.extract_strided_slice %31 {offsets = [4, 0, 0], sizes = [1, 8, 8], strides = [1, 1, 1]} : vector<8x8x8xf32> to vector<1x8x8xf32>
    %59 = vector.broadcast %57 : vector<8x1x8xf32> to vector<8x8x8xf32>
    %60 = vector.broadcast %58 : vector<1x8x8xf32> to vector<8x8x8xf32>
    %61 = arith.mulf %59, %60 : vector<8x8x8xf32>
    %62 = arith.addf %56, %61 : vector<8x8x8xf32>
    %63 = vector.extract_strided_slice %30 {offsets = [0, 5, 0], sizes = [8, 1, 8], strides = [1, 1, 1]} : vector<8x8x8xf32> to vector<8x1x8xf32>
    %64 = vector.extract_strided_slice %31 {offsets = [5, 0, 0], sizes = [1, 8, 8], strides = [1, 1, 1]} : vector<8x8x8xf32> to vector<1x8x8xf32>
    %65 = vector.broadcast %63 : vector<8x1x8xf32> to vector<8x8x8xf32>
    %66 = vector.broadcast %64 : vector<1x8x8xf32> to vector<8x8x8xf32>
    %67 = arith.mulf %65, %66 : vector<8x8x8xf32>
    %68 = arith.addf %62, %67 : vector<8x8x8xf32>
    %69 = vector.extract_strided_slice %30 {offsets = [0, 6, 0], sizes = [8, 1, 8], strides = [1, 1, 1]} : vector<8x8x8xf32> to vector<8x1x8xf32>
    %70 = vector.extract_strided_slice %31 {offsets = [6, 0, 0], sizes = [1, 8, 8], strides = [1, 1, 1]} : vector<8x8x8xf32> to vector<1x8x8xf32>
    %71 = vector.broadcast %69 : vector<8x1x8xf32> to vector<8x8x8xf32>
    %72 = vector.broadcast %70 : vector<1x8x8xf32> to vector<8x8x8xf32>
    %73 = arith.mulf %71, %72 : vector<8x8x8xf32>
    %74 = arith.addf %68, %73 : vector<8x8x8xf32>
    %75 = vector.extract_strided_slice %30 {offsets = [0, 7, 0], sizes = [8, 1, 8], strides = [1, 1, 1]} : vector<8x8x8xf32> to vector<8x1x8xf32>
    %76 = vector.extract_strided_slice %31 {offsets = [7, 0, 0], sizes = [1, 8, 8], strides = [1, 1, 1]} : vector<8x8x8xf32> to vector<1x8x8xf32>
    %77 = vector.broadcast %75 : vector<8x1x8xf32> to vector<8x8x8xf32>
    %78 = vector.broadcast %76 : vector<1x8x8xf32> to vector<8x8x8xf32>
    %79 = arith.mulf %77, %78 : vector<8x8x8xf32>
    %80 = arith.addf %74, %79 : vector<8x8x8xf32>
    %81 = vector.shape_cast %80 : vector<8x8x8xf32> to vector<64x8xf32>
    %c0_26 = arith.constant 0 : index
    %c0_27 = arith.constant 0 : index
    %82 = vector.load %arg10[%c0_26, %c0_27] : memref<8x8xf32, #tpu.memory_space<vmem>>, vector<8x8xf32>
    %cst_28 = arith.constant dense<0.000000e+00> : vector<64x8xf32>
    %83 = tpu.matmul %1, %82, %cst_28 {dimension_numbers = #tpu.dot_dimension_numbers<[1], [0], [0], [1], [0, 0, 1, 1], [], []>} : vector<64x8xf32>, vector<8x8xf32>, vector<64x8xf32> -> vector<64x8xf32>
    %c0_29 = arith.constant 0 : index
    %c0_30 = arith.constant 0 : index
    %84 = vector.load %arg11[%c0_29, %c0_30] : memref<8x8xf32, #tpu.memory_space<vmem>>, vector<8x8xf32>
    %cst_31 = arith.constant dense<0.000000e+00> : vector<64x8xf32>
    %85 = tpu.matmul %81, %84, %cst_31 {dimension_numbers = #tpu.dot_dimension_numbers<[1], [0], [0], [1], [0, 0, 1, 1], [], []>} : vector<64x8xf32>, vector<8x8xf32>, vector<64x8xf32> -> vector<64x8xf32>
    %86 = arith.addf %83, %85 : vector<64x8xf32>
    %c0_32 = arith.constant 0 : index
    %c0_33 = arith.constant 0 : index
    %87 = vector.load %arg12[%c0_32, %c0_33] : memref<1x8xf32, #tpu.memory_space<vmem>>, vector<1x8xf32>
    %88 = vector.broadcast %87 : vector<1x8xf32> to vector<64x8xf32>
    %89 = arith.addf %86, %88 : vector<64x8xf32>
    %c0_34 = arith.constant 0 : index
    %c0_35 = arith.constant 0 : index
    %c0_36 = arith.constant 0 : index
    %90 = vector.load %arg13[%c0_34, %c0_35, %c0_36] : memref<1x64x8xf32, #tpu.memory_space<vmem>>, vector<1x64x8xf32>
    %91 = vector.shape_cast %90 : vector<1x64x8xf32> to vector<64x8xf32>
    %92 = vector.shape_cast %89 : vector<64x8xf32> to vector<1x64x8xf32>
    tpu.vector_store %arg13[%c0_34, %c0_35, %c0_36], %92 {strides = array<i32>} : memref<1x64x8xf32, #tpu.memory_space<vmem>>, vector<1x64x8xf32>,
    return
  }
  func.func @transform_0(%arg0: i32) -> (i32, i32, i32) {
    %c0_i32 = arith.constant 0 : i32
    %c0_i32_0 = arith.constant 0 : i32
    %c0_i32_1 = arith.constant 0 : i32
    return %arg0, %c0_i32, %c0_i32_0 : i32, i32, i32
  }
  func.func @transform_1(%arg0: i32) -> (i32, i32) {
    %c0_i32 = arith.constant 0 : i32
    %c0_i32_0 = arith.constant 0 : i32
    %c0_i32_1 = arith.constant 0 : i32
    return %c0_i32, %c0_i32_0 : i32, i32
  }
  func.func @transform_2(%arg0: i32) -> (i32, i32) {
    %c0_i32 = arith.constant 0 : i32
    %c0_i32_0 = arith.constant 0 : i32
    %c0_i32_1 = arith.constant 0 : i32
    return %c0_i32, %c0_i32_0 : i32, i32
  }
  func.func @transform_3(%arg0: i32) -> (i32, i32) {
    %c0_i32 = arith.constant 0 : i32
    %c0_i32_0 = arith.constant 0 : i32
    %c0_i32_1 = arith.constant 0 : i32
    return %c0_i32, %c0_i32_0 : i32, i32
  }
  func.func @transform_4(%arg0: i32) -> (i32, i32) {
    %c0_i32 = arith.constant 0 : i32
    %c0_i32_0 = arith.constant 0 : i32
    %c0_i32_1 = arith.constant 0 : i32
    return %c0_i32, %c0_i32_0 : i32, i32
  }
  func.func @transform_5(%arg0: i32) -> (i32, i32) {
    %c0_i32 = arith.constant 0 : i32
    %c0_i32_0 = arith.constant 0 : i32
    %c0_i32_1 = arith.constant 0 : i32
    return %c0_i32, %c0_i32_0 : i32, i32
  }
  func.func @transform_6(%arg0: i32) -> (i32, i32) {
    %c0_i32 = arith.constant 0 : i32
    %c0_i32_0 = arith.constant 0 : i32
    %c0_i32_1 = arith.constant 0 : i32
    return %c0_i32, %c0_i32_0 : i32, i32
  }
  func.func @transform_7(%arg0: i32) -> (i32, i32) {
    %c0_i32 = arith.constant 0 : i32
    %c0_i32_0 = arith.constant 0 : i32
    %c0_i32_1 = arith.constant 0 : i32
    return %c0_i32, %c0_i32_0 : i32, i32
  }
  func.func @transform_8(%arg0: i32) -> (i32, i32) {
    %c0_i32 = arith.constant 0 : i32
    %c0_i32_0 = arith.constant 0 : i32
    %c0_i32_1 = arith.constant 0 : i32
    return %c0_i32, %c0_i32_0 : i32, i32
  }
  func.func @transform_9(%arg0: i32) -> (i32, i32) {
    %c0_i32 = arith.constant 0 : i32
    %c0_i32_0 = arith.constant 0 : i32
    %c0_i32_1 = arith.constant 0 : i32
    return %c0_i32, %c0_i32_0 : i32, i32
  }
  func.func @transform_10(%arg0: i32) -> (i32, i32) {
    %c0_i32 = arith.constant 0 : i32
    %c0_i32_0 = arith.constant 0 : i32
    %c0_i32_1 = arith.constant 0 : i32
    return %c0_i32, %c0_i32_0 : i32, i32
  }
  func.func @transform_11(%arg0: i32) -> (i32, i32) {
    %c0_i32 = arith.constant 0 : i32
    %c0_i32_0 = arith.constant 0 : i32
    %c0_i32_1 = arith.constant 0 : i32
    return %c0_i32, %c0_i32_0 : i32, i32
  }
  func.func @transform_12(%arg0: i32) -> (i32, i32, i32) {
    %c0_i32 = arith.constant 0 : i32
    %c0_i32_0 = arith.constant 0 : i32
    %c0_i32_1 = arith.constant 0 : i32
    return %arg0, %c0_i32, %c0_i32_0 : i32, i32, i32
  }
}

</mosaic_0001>

<llo_original>
// kernel: base_model_forward.2
$region0: #{base_model_forward.2}
  #allocation0 [shape = 'u32[]', space=smem, size = 0x4, offset = 0x4, fixed_abs, tag = 'smem constant byte address 0x4 - core index']
  #allocation1 [shape = 'u32[144,128]{1,0:T(1,128)}', space=vmem, size = 0x12000, scoped, tag = 'internal scratch']
  %s0 = inlined_call_operand.vmem [shape: f32[2,64,4], index: 0, kind: input, shape index: {}]
  %s1 = inlined_call_operand.vmem [shape: f32[4,8], index: 1, kind: input, shape index: {}]
  %s2 = inlined_call_operand.vmem [shape: f32[1,8], index: 2, kind: input, shape index: {}]
  %s3 = inlined_call_operand.vmem [shape: f32[8,8], index: 3, kind: input, shape index: {}]
  %s4 = inlined_call_operand.vmem [shape: f32[1,8], index: 4, kind: input, shape index: {}]
  %s5 = inlined_call_operand.vmem [shape: f32[4,8], index: 5, kind: input, shape index: {}]
  %s6 = inlined_call_operand.vmem [shape: f32[1,8], index: 6, kind: input, shape index: {}]
  %s7 = inlined_call_operand.vmem [shape: f32[8,8], index: 7, kind: input, shape index: {}]
  %s8 = inlined_call_operand.vmem [shape: f32[1,8], index: 8, kind: input, shape index: {}]
  %s9 = inlined_call_operand.vmem [shape: f32[4,8], index: 9, kind: input, shape index: {}]
  %s10 = inlined_call_operand.vmem [shape: f32[8,8], index: 10, kind: input, shape index: {}]
  %s11 = inlined_call_operand.vmem [shape: f32[1,8], index: 11, kind: input, shape index: {}]
  %s12 = inlined_call_operand.vmem [shape: f32[2,64,8], index: 12, kind: output, shape index: {}]
  %s13 = sld [smem:[#allocation0]]
  $region81: #{base_model_forward.2} parent=0
    _
  %s15 = ssub.s32 1, %s13
  %s16 = scalar_select 0, %s15, %s13
  loop: start=0, step=1, limit=4
  $region2: #{base_model_forward.2} parent=0 // loop_pre_header
    _
  $region3: #{base_model_forward.2} parent=0 // loop_header
    %s18 = sphi 0, %s22
    %p19 = scmp.ge.s32.totalorder %s18, 4
    %s28 = sphi 0, %s30
    %s31 = sphi 0, %s28
    %s32 = sphi 0, %s31
    %s48 = sphi 0, %s32
    %s52 = sphi 0, %s52
    %s54 = sphi 0, %s52
    %s55 = sphi 0, %s54
    %s69 = sphi 0, %s55
    %s73 = sphi 0, %s73
    %s75 = sphi 0, %s73
    %s76 = sphi 0, %s75
    %s90 = sphi 0, %s76
    %s94 = sphi 0, %s94
    %s96 = sphi 0, %s94
    %s97 = sphi 0, %s96
    %s111 = sphi 0, %s97
    %s115 = sphi 0, %s115
    %s117 = sphi 0, %s115
    %s118 = sphi 0, %s117
    %s132 = sphi 0, %s118
    %s136 = sphi 0, %s136
    %s138 = sphi 0, %s136
    %s139 = sphi 0, %s138
    %s153 = sphi 0, %s139
    %s157 = sphi 0, %s157
    %s159 = sphi 0, %s157
    %s160 = sphi 0, %s159
    %s174 = sphi 0, %s160
    %s178 = sphi 0, %s178
    %s180 = sphi 0, %s178
    %s181 = sphi 0, %s180
    %s195 = sphi 0, %s181
    %s199 = sphi 0, %s199
    %s201 = sphi 0, %s199
    %s202 = sphi 0, %s201
    %s216 = sphi 0, %s202
    %s220 = sphi 0, %s220
    %s222 = sphi 0, %s220
    %s223 = sphi 0, %s222
    %s237 = sphi 0, %s223
    %s241 = sphi 0, %s241
    %s243 = sphi 0, %s241
    %s244 = sphi 0, %s243
    %s258 = sphi 0, %s244
    %s262 = sphi 0, %s262
    %s264 = sphi 0, %s262
    %s265 = sphi 0, %s264
    %s279 = sphi 0, %s265
    %s285 = sphi 0, %s287
    %s288 = sphi 0, %s285
    %s289 = sphi 0, %s288
    %s305 = sphi 0, %s289
  $region4: #{base_model_forward.2} parent=0 // loop_header_branch
    %21 = sbr.rel (%p19) target = $region8
  $region5: #{base_model_forward.2} parent=0 // loop_body
    %s23 = ssub.s32 %s18, 1
    %s24 = ssub.s32 %s18, 2
    %s25 = sadd.s32 %s18, 1
    %s26 = ssub.s32 %s18, %s25
    %p27 = scmp.eq.s32.totalorder %s26, 0
    %s29 = sadd.s32 %s28, 1
    %s30 = scalar_select %p27, %s28, %s29
    %p33 = pneg %p27
    %p34 = scmp.eq.s32.totalorder %s18, 1
    %p35 = por %p33, %p34
    %p36 = scmp.ne.s32.totalorder %s28, %s31
    %p37 = scmp.eq.s32.totalorder %s18, 0
    %p38 = por %p36, %p37
    %p39 = scmp.ne.s32.totalorder %s28, %s31
    %p40 = scmp.eq.s32.totalorder %s23, 1
    %p41 = por %p39, %p40
    %p42 = scmp.ne.s32.totalorder %s31, %s32
    %p43 = scmp.eq.s32.totalorder %s23, 0
    %p44 = por %p42, %p43
    %p45 = scmp.ne.s32.totalorder %s31, %s32
    %p46 = scmp.eq.s32.totalorder %s24, 1
    %p47 = por %p45, %p46
    %p49 = scmp.ne.s32.totalorder %s32, %s48
    %p50 = scmp.eq.s32.totalorder %s24, 0
    %p51 = por %p49, %p50
    %s53 = sadd.s32 %s52, 1
    %p56 = scmp.eq.s32.totalorder %s18, 1
    %p57 = scmp.ne.s32.totalorder %s52, %s54
    %p58 = scmp.eq.s32.totalorder %s18, 0
    %p59 = por %p57, %p58
    %p60 = scmp.ne.s32.totalorder %s52, %s54
    %p61 = scmp.eq.s32.totalorder %s23, 1
    %p62 = por %p60, %p61
    %p63 = scmp.ne.s32.totalorder %s54, %s55
    %p64 = scmp.eq.s32.totalorder %s23, 0
    %p65 = por %p63, %p64
    %p66 = scmp.ne.s32.totalorder %s54, %s55
    %p67 = scmp.eq.s32.totalorder %s24, 1
    %p68 = por %p66, %p67
    %p70 = scmp.ne.s32.totalorder %s55, %s69
    %p71 = scmp.eq.s32.totalorder %s24, 0
    %p72 = por %p70, %p71
    %s74 = sadd.s32 %s73, 1
    %p77 = scmp.eq.s32.totalorder %s18, 1
    %p78 = scmp.ne.s32.totalorder %s73, %s75
    %p79 = scmp.eq.s32.totalorder %s18, 0
    %p80 = por %p78, %p79
    %p81 = scmp.ne.s32.totalorder %s73, %s75
    %p82 = scmp.eq.s32.totalorder %s23, 1
    %p83 = por %p81, %p82
    %p84 = scmp.ne.s32.totalorder %s75, %s76
    %p85 = scmp.eq.s32.totalorder %s23, 0
    %p86 = por %p84, %p85
    %p87 = scmp.ne.s32.totalorder %s75, %s76
    %p88 = scmp.eq.s32.totalorder %s24, 1
    %p89 = por %p87, %p88
    %p91 = scmp.ne.s32.totalorder %s76, %s90
    %p92 = scmp.eq.s32.totalorder %s24, 0
    %p93 = por %p91, %p92
    %s95 = sadd.s32 %s94, 1
    %p98 = scmp.eq.s32.totalorder %s18, 1
    %p99 = scmp.ne.s32.totalorder %s94, %s96
    %p100 = scmp.eq.s32.totalorder %s18, 0
    %p101 = por %p99, %p100
    %p102 = scmp.ne.s32.totalorder %s94, %s96
    %p103 = scmp.eq.s32.totalorder %s23, 1
    %p104 = por %p102, %p103
    %p105 = scmp.ne.s32.totalorder %s96, %s97
    %p106 = scmp.eq.s32.totalorder %s23, 0
    %p107 = por %p105, %p106
    %p108 = scmp.ne.s32.totalorder %s96, %s97
    %p109 = scmp.eq.s32.totalorder %s24, 1
    %p110 = por %p108, %p109
    %p112 = scmp.ne.s32.totalorder %s97, %s111
    %p113 = scmp.eq.s32.totalorder %s24, 0
    %p114 = por %p112, %p113
    %s116 = sadd.s32 %s115, 1
    %p119 = scmp.eq.s32.totalorder %s18, 1
    %p120 = scmp.ne.s32.totalorder %s115, %s117
    %p121 = scmp.eq.s32.totalorder %s18, 0
    %p122 = por %p120, %p121
    %p123 = scmp.ne.s32.totalorder %s115, %s117
    %p124 = scmp.eq.s32.totalorder %s23, 1
    %p125 = por %p123, %p124
    %p126 = scmp.ne.s32.totalorder %s117, %s118
    %p127 = scmp.eq.s32.totalorder %s23, 0
    %p128 = por %p126, %p127
    %p129 = scmp.ne.s32.totalorder %s117, %s118
    %p130 = scmp.eq.s32.totalorder %s24, 1
    %p131 = por %p129, %p130
    %p133 = scmp.ne.s32.totalorder %s118, %s132
    %p134 = scmp.eq.s32.totalorder %s24, 0
    %p135 = por %p133, %p134
    %s137 = sadd.s32 %s136, 1
    %p140 = scmp.eq.s32.totalorder %s18, 1
    %p141 = scmp.ne.s32.totalorder %s136, %s138
    %p142 = scmp.eq.s32.totalorder %s18, 0
    %p143 = por %p141, %p142
    %p144 = scmp.ne.s32.totalorder %s136, %s138
    %p145 = scmp.eq.s32.totalorder %s23, 1
    %p146 = por %p144, %p145
    %p147 = scmp.ne.s32.totalorder %s138, %s139
    %p148 = scmp.eq.s32.totalorder %s23, 0
    %p149 = por %p147, %p148
    %p150 = scmp.ne.s32.totalorder %s138, %s139
    %p151 = scmp.eq.s32.totalorder %s24, 1
    %p152 = por %p150, %p151
    %p154 = scmp.ne.s32.totalorder %s139, %s153
    %p155 = scmp.eq.s32.totalorder %s24, 0
    %p156 = por %p154, %p155
    %s158 = sadd.s32 %s157, 1
    %p161 = scmp.eq.s32.totalorder %s18, 1
    %p162 = scmp.ne.s32.totalorder %s157, %s159
    %p163 = scmp.eq.s32.totalorder %s18, 0
    %p164 = por %p162, %p163
    %p165 = scmp.ne.s32.totalorder %s157, %s159
    %p166 = scmp.eq.s32.totalorder %s23, 1
    %p167 = por %p165, %p166
    %p168 = scmp.ne.s32.totalorder %s159, %s160
    %p169 = scmp.eq.s32.totalorder %s23, 0
    %p170 = por %p168, %p169
    %p171 = scmp.ne.s32.totalorder %s159, %s160
    %p172 = scmp.eq.s32.totalorder %s24, 1
    %p173 = por %p171, %p172
    %p175 = scmp.ne.s32.totalorder %s160, %s174
    %p176 = scmp.eq.s32.totalorder %s24, 0
    %p177 = por %p175, %p176
    %s179 = sadd.s32 %s178, 1
    %p182 = scmp.eq.s32.totalorder %s18, 1
    %p183 = scmp.ne.s32.totalorder %s178, %s180
    %p184 = scmp.eq.s32.totalorder %s18, 0
    %p185 = por %p183, %p184
    %p186 = scmp.ne.s32.totalorder %s178, %s180
    %p187 = scmp.eq.s32.totalorder %s23, 1
    %p188 = por %p186, %p187
    %p189 = scmp.ne.s32.totalorder %s180, %s181
    %p190 = scmp.eq.s32.totalorder %s23, 0
    %p191 = por %p189, %p190
    %p192 = scmp.ne.s32.totalorder %s180, %s181
    %p193 = scmp.eq.s32.totalorder %s24, 1
    %p194 = por %p192, %p193
    %p196 = scmp.ne.s32.totalorder %s181, %s195
    %p197 = scmp.eq.s32.totalorder %s24, 0
    %p198 = por %p196, %p197
    %s200 = sadd.s32 %s199, 1
    %p203 = scmp.eq.s32.totalorder %s18, 1
    %p204 = scmp.ne.s32.totalorder %s199, %s201
    %p205 = scmp.eq.s32.totalorder %s18, 0
    %p206 = por %p204, %p205
    %p207 = scmp.ne.s32.totalorder %s199, %s201
    %p208 = scmp.eq.s32.totalorder %s23, 1
    %p209 = por %p207, %p208
    %p210 = scmp.ne.s32.totalorder %s201, %s202
    %p211 = scmp.eq.s32.totalorder %s23, 0
    %p212 = por %p210, %p211
    %p213 = scmp.ne.s32.totalorder %s201, %s202
    %p214 = scmp.eq.s32.totalorder %s24, 1
    %p215 = por %p213, %p214
    %p217 = scmp.ne.s32.totalorder %s202, %s216
    %p218 = scmp.eq.s32.totalorder %s24, 0
    %p219 = por %p217, %p218
    %s221 = sadd.s32 %s220, 1
    %p224 = scmp.eq.s32.totalorder %s18, 1
    %p225 = scmp.ne.s32.totalorder %s220, %s222
    %p226 = scmp.eq.s32.totalorder %s18, 0
    %p227 = por %p225, %p226
    %p228 = scmp.ne.s32.totalorder %s220, %s222
    %p229 = scmp.eq.s32.totalorder %s23, 1
    %p230 = por %p228, %p229
    %p231 = scmp.ne.s32.totalorder %s222, %s223
    %p232 = scmp.eq.s32.totalorder %s23, 0
    %p233 = por %p231, %p232
    %p234 = scmp.ne.s32.totalorder %s222, %s223
    %p235 = scmp.eq.s32.totalorder %s24, 1
    %p236 = por %p234, %p235
    %p238 = scmp.ne.s32.totalorder %s223, %s237
    %p239 = scmp.eq.s32.totalorder %s24, 0
    %p240 = por %p238, %p239
    %s242 = sadd.s32 %s241, 1
    %p245 = scmp.eq.s32.totalorder %s18, 1
    %p246 = scmp.ne.s32.totalorder %s241, %s243
    %p247 = scmp.eq.s32.totalorder %s18, 0
    %p248 = por %p246, %p247
    %p249 = scmp.ne.s32.totalorder %s241, %s243
    %p250 = scmp.eq.s32.totalorder %s23, 1
    %p251 = por %p249, %p250
    %p252 = scmp.ne.s32.totalorder %s243, %s244
    %p253 = scmp.eq.s32.totalorder %s23, 0
    %p254 = por %p252, %p253
    %p255 = scmp.ne.s32.totalorder %s243, %s244
    %p256 = scmp.eq.s32.totalorder %s24, 1
    %p257 = por %p255, %p256
    %p259 = scmp.ne.s32.totalorder %s244, %s258
    %p260 = scmp.eq.s32.totalorder %s24, 0
    %p261 = por %p259, %p260
    %s263 = sadd.s32 %s262, 1
    %p266 = scmp.eq.s32.totalorder %s18, 1
    %p267 = scmp.ne.s32.totalorder %s262, %s264
    %p268 = scmp.eq.s32.totalorder %s18, 0
    %p269 = por %p267, %p268
    %p270 = scmp.ne.s32.totalorder %s262, %s264
    %p271 = scmp.eq.s32.totalorder %s23, 1
    %p272 = por %p270, %p271
    %p273 = scmp.ne.s32.totalorder %s264, %s265
    %p274 = scmp.eq.s32.totalorder %s23, 0
    %p275 = por %p273, %p274
    %p276 = scmp.ne.s32.totalorder %s264, %s265
    %p277 = scmp.eq.s32.totalorder %s24, 1
    %p278 = por %p276, %p277
    %p280 = scmp.ne.s32.totalorder %s265, %s279
    %p281 = scmp.eq.s32.totalorder %s24, 0
    %p282 = por %p280, %p281
    %s283 = ssub.s32 %s18, %s25
    %p284 = scmp.eq.s32.totalorder %s283, 0
    %s286 = sadd.s32 %s285, 1
    %s287 = scalar_select %p284, %s285, %s286
    %p290 = pneg %p284
    %p291 = scmp.eq.s32.totalorder %s18, 1
    %p292 = por %p290, %p291
    %p293 = scmp.ne.s32.totalorder %s285, %s288
    %p294 = scmp.eq.s32.totalorder %s18, 0
    %p295 = por %p293, %p294
    %p296 = scmp.ne.s32.totalorder %s285, %s288
    %p297 = scmp.eq.s32.totalorder %s23, 1
    %p298 = por %p296, %p297
    %p299 = scmp.ne.s32.totalorder %s288, %s289
    %p300 = scmp.eq.s32.totalorder %s23, 0
    %p301 = por %p299, %p300
    %p302 = scmp.ne.s32.totalorder %s288, %s289
    %p303 = scmp.eq.s32.totalorder %s24, 1
    %p304 = por %p302, %p303
    %p306 = scmp.ne.s32.totalorder %s289, %s305
    %p307 = scmp.eq.s32.totalorder %s24, 0
    %p308 = por %p306, %p307
    %p309 = scmp.le.s32.totalorder 1, %s18
    %p310 = scmp.lt.s32.totalorder %s18, 3
    %p311 = pnand %p309, %p310
    %p312 = pneg %p311
    // Predicated region
    $region9: #{base_model_forward.2} parent=5 // pred_check
      _
    $region10: #{base_model_forward.2} parent=5 // pred_check_branch
      %314 = sbr.rel (%p311) target = $region12
    $region11: #{base_model_forward.2} parent=5 // pred_region
      %s315 = ssub.s32 %s18, 1
      // Predicated region
      $region13: #{base_model_forward.2} parent=11 // pred_check
        %p316 = pneg %p65
      $region14: #{base_model_forward.2} parent=11 // pred_check_branch
        %318 = sbr.rel (%p316) target = $region16
      $region15: #{base_model_forward.2} parent=11 // pred_region
        _
      $region16: #{base_model_forward.2} parent=11 // pred_fallthru
        _
      // Predicated region
      $region17: #{base_model_forward.2} parent=11 // pred_check
        %p319 = pneg %p86
      $region18: #{base_model_forward.2} parent=11 // pred_check_branch
        %321 = sbr.rel (%p319) target = $region20
      $region19: #{base_model_forward.2} parent=11 // pred_region
        _
      $region20: #{base_model_forward.2} parent=11 // pred_fallthru
        _
      // Predicated region
      $region21: #{base_model_forward.2} parent=11 // pred_check
        %p322 = pneg %p107
      $region22: #{base_model_forward.2} parent=11 // pred_check_branch
        %324 = sbr.rel (%p322) target = $region24
      $region23: #{base_model_forward.2} parent=11 // pred_region
        _
      $region24: #{base_model_forward.2} parent=11 // pred_fallthru
        _
      // Predicated region
      $region25: #{base_model_forward.2} parent=11 // pred_check
        %p325 = pneg %p128
      $region26: #{base_model_forward.2} parent=11 // pred_check_branch
        %327 = sbr.rel (%p325) target = $region28
      $region27: #{base_model_forward.2} parent=11 // pred_region
        _
      $region28: #{base_model_forward.2} parent=11 // pred_fallthru
        _
      // Predicated region
      $region29: #{base_model_forward.2} parent=11 // pred_check
        %p328 = pneg %p149
      $region30: #{base_model_forward.2} parent=11 // pred_check_branch
        %330 = sbr.rel (%p328) target = $region32
      $region31: #{base_model_forward.2} parent=11 // pred_region
        _
      $region32: #{base_model_forward.2} parent=11 // pred_fallthru
        _
      // Predicated region
      $region33: #{base_model_forward.2} parent=11 // pred_check
        %p331 = pneg %p170
      $region34: #{base_model_forward.2} parent=11 // pred_check_branch
        %333 = sbr.rel (%p331) target = $region36
      $region35: #{base_model_forward.2} parent=11 // pred_region
        _
      $region36: #{base_model_forward.2} parent=11 // pred_fallthru
        _
      // Predicated region
      $region37: #{base_model_forward.2} parent=11 // pred_check
        %p334 = pneg %p191
      $region38: #{base_model_forward.2} parent=11 // pred_check_branch
        %336 = sbr.rel (%p334) target = $region40
      $region39: #{base_model_forward.2} parent=11 // pred_region
        _
      $region40: #{base_model_forward.2} parent=11 // pred_fallthru
        _
      // Predicated region
      $region41: #{base_model_forward.2} parent=11 // pred_check
        %p337 = pneg %p212
      $region42: #{base_model_forward.2} parent=11 // pred_check_branch
        %339 = sbr.rel (%p337) target = $region44
      $region43: #{base_model_forward.2} parent=11 // pred_region
        _
      $region44: #{base_model_forward.2} parent=11 // pred_fallthru
        _
      // Predicated region
      $region45: #{base_model_forward.2} parent=11 // pred_check
        %p340 = pneg %p233
      $region46: #{base_model_forward.2} parent=11 // pred_check_branch
        %342 = sbr.rel (%p340) target = $region48
      $region47: #{base_model_forward.2} parent=11 // pred_region
        _
      $region48: #{base_model_forward.2} parent=11 // pred_fallthru
        _
      // Predicated region
      $region49: #{base_model_forward.2} parent=11 // pred_check
        %p343 = pneg %p254
      $region50: #{base_model_forward.2} parent=11 // pred_check_branch
        %345 = sbr.rel (%p343) target = $region52
      $region51: #{base_model_forward.2} parent=11 // pred_region
        _
      $region52: #{base_model_forward.2} parent=11 // pred_fallthru
        _
      // Predicated region
      $region53: #{base_model_forward.2} parent=11 // pred_check
        %p346 = pneg %p275
      $region54: #{base_model_forward.2} parent=11 // pred_check_branch
        %348 = sbr.rel (%p346) target = $region56
      $region55: #{base_model_forward.2} parent=11 // pred_region
        _
      $region56: #{base_model_forward.2} parent=11 // pred_fallthru
        _
    $region12: #{base_model_forward.2} parent=5 // pred_fallthru
      _
    %p349 = scmp.lt.s32.totalorder %s18, 2
    // Predicated region
    $region57: #{base_model_forward.2} parent=5 // pred_check
      %p350 = pneg %p349
    $region58: #{base_model_forward.2} parent=5 // pred_check_branch
      %352 = sbr.rel (%p350) target = $region60
    $region59: #{base_model_forward.2} parent=5 // pred_region
      // Predicated region
      $region61: #{base_model_forward.2} parent=59 // pred_check
        %p353 = pneg %p38
      $region62: #{base_model_forward.2} parent=59 // pred_check_branch
        %355 = sbr.rel (%p353) target = $region64
      $region63: #{base_model_forward.2} parent=59 // pred_region
        %p356 = scmp.lt.s32.totalorder %s18, 1
        %s357 = scalar_select %p356, %s18, 1
        %s358 = smul.addr %s357, 8
        %s359 = smul.addr %s358, 8
        %s360 = scalar_lea.vmem %s0, %s359
      $region64: #{base_model_forward.2} parent=59 // pred_fallthru
        _
    $region60: #{base_model_forward.2} parent=5 // pred_fallthru
      _
    %p361 = scmp.le.s32.totalorder 1, %s18
    %p362 = scmp.lt.s32.totalorder %s18, 3
    %p363 = pnand %p361, %p362
    %p364 = pneg %p363
    // Predicated region
    $region65: #{base_model_forward.2} parent=5 // pred_check
      _
    $region66: #{base_model_forward.2} parent=5 // pred_check_branch
      %366 = sbr.rel (%p363) target = $region68
    $region67: #{base_model_forward.2} parent=5 // pred_region
      %s367 = ssub.s32 %s18, 1
      %p368 = scmp.lt.s32.totalorder %s23, 1
      %s369 = scalar_select %p368, %s23, 1
      %s370 = smul.addr %s369, 8
      %s371 = smul.addr %s370, 8
      %s372 = scalar_lea.vmem %s0, %s371
      %p373 = pneg %p44
      %p374 = pneg %p41
      %p375 = pneg %p65
      %p376 = pneg %p62
      %p377 = pneg %p86
      %p378 = pneg %p83
      %p379 = pneg %p107
      %p380 = pneg %p104
      %p381 = pneg %p128
      %p382 = pneg %p125
      %p383 = pneg %p149
      %p384 = pneg %p146
      %p385 = pneg %p170
      %p386 = pneg %p167
      %p387 = pneg %p191
      %p388 = pneg %p188
      %p389 = pneg %p212
      %p390 = pneg %p209
      %p391 = pneg %p233
      %p392 = pneg %p230
      %p393 = pneg %p254
      %p394 = pneg %p251
      %p395 = pneg %p275
      %p396 = pneg %p272
      %p397 = pneg %p301
      %p398 = pneg %p298
      %p399 = scmp.lt.s32.totalorder %s23, 1
      %s400 = scalar_select %p399, %s23, 1
      %s401 = smul.addr %s400, 8
      %s402 = smul.addr %s401, 8
      %s403 = scalar_lea.vmem %s12, %s402
      %p404 = scmp.lt.s32.totalorder %s23, 1
      %s405 = scalar_select %p404, %s23, 1
      %s406 = smul.addr %s405, 8
      %s407 = smul.addr %s406, 8
      %s408 = scalar_lea.vmem %s0, %s407
      %p409 = scmp.lt.s32.totalorder %s23, 1
      %s410 = scalar_select %p409, %s23, 1
      %s411 = smul.addr %s410, 8
      %s412 = smul.addr %s411, 8
      %s413 = scalar_lea.vmem %s12, %s412
      %v414 = vld [vmem:[%s408] sm:$0xff]
      %v415 = vld [vmem:[%s408 + $0x8] sm:$0xff]
      %v416 = vld [vmem:[%s408 + $0x10] sm:$0xff]
      %v417 = vld [vmem:[%s408 + $0x18] sm:$0xff]
      %v418 = vld [vmem:[%s408 + $0x20] sm:$0xff]
      %v419 = vld [vmem:[%s408 + $0x28] sm:$0xff]
      %v420 = vld [vmem:[%s408 + $0x30] sm:$0xff]
      %v421 = vld [vmem:[%s408 + $0x38] sm:$0xff]
      %v422 = vld [vmem:[%s1] sm:$0xf]
      %v423 = vld [vmem:[%s2] sm:$0x1]
      %v425 = vlaneseq
      %v426 = vshrl.u32 %v425, 7
      %v427 = vsub.s32 0, %v426
      %v428 = vrot.slane %v423, %v427
      %vm430 = vcmask 31744
      %v432 = vsel %vm430, %v414, 0
      %v435 = vsel %vm430, %v415, 0
      %v438 = vsel %vm430, %v416, 0
      %v441 = vsel %vm430, %v417, 0
      %v444 = vsel %vm430, %v418, 0
      %v447 = vsel %vm430, %v419, 0
      %v450 = vsel %vm430, %v420, 0
      %v453 = vsel %vm430, %v421, 0
      %vm455 = vcmask 1043456
      %v457 = vsel %vm455, %v422, 0
      %459 = vmatprep.subr.mxu0 0.0
      %460 = vmatpush1.msra.mxu0 0.0
      %461 = vmatprep.subr.mxu0 0.0
      %462 = vmatpush1.msra.mxu0 0.0
      %463 = vmatprep.subr.mxu0 0.0
      %464 = vmatpush1.msra.mxu0 0.0
      %465 = vmatprep.subr.mxu0 0.0
      %466 = vmatpush1.msra.mxu0 0.0
      %467 = vmatprep.subr.mxu0 0.0
      %468 = vmatpush1.msra.mxu0 0.0
      %469 = vmatprep.subr.mxu0 0.0
      %470 = vmatpush1.msra.mxu0 0.0
      %471 = vmatprep.subr.mxu0 0.0
      %472 = vmatpush1.msra.mxu0 0.0
      %473 = vmatprep.subr.mxu0 0.0
      %474 = vmatpush1.msra.mxu0 0.0
      %475 = vmatprep.subr.mxu0 0.0
      %476 = vmatpush1.msra.mxu0 0.0
      %477 = vmatprep.subr.mxu0 0.0
      %478 = vmatpush1.msra.mxu0 0.0
      %479 = vmatprep.subr.mxu0 0.0
      %480 = vmatpush1.msra.mxu0 0.0
      %481 = vmatprep.subr.mxu0 0.0
      %482 = vmatpush1.msra.mxu0 0.0
      %483 = vmatprep.subr.mxu0 0.0
      %484 = vmatpush1.msra.mxu0 0.0
      %485 = vmatprep.subr.mxu0 0.0
      %486 = vmatpush1.msra.mxu0 0.0
      %487 = vmatprep.subr.mxu0 0.0
      %488 = vmatpush1.msra.mxu0 0.0
      %489 = vmatprep.subr.mxu0 0.0
      %490 = vmatpush1.msra.mxu0 %v457
      %491 = vmatprep.subr.mxu0 0.0
      %492 = vmatpush2.msra.mxu0 0.0
      %493 = vmatprep.subr.mxu0 0.0
      %494 = vmatpush2.msra.mxu0 0.0
      %495 = vmatprep.subr.mxu0 0.0
      %496 = vmatpush2.msra.mxu0 0.0
      %497 = vmatprep.subr.mxu0 0.0
      %498 = vmatpush2.msra.mxu0 0.0
      %499 = vmatprep.subr.mxu0 0.0
      %500 = vmatpush2.msra.mxu0 0.0
      %501 = vmatprep.subr.mxu0 0.0
      %502 = vmatpush2.msra.mxu0 0.0
      %503 = vmatprep.subr.mxu0 0.0
      %504 = vmatpush2.msra.mxu0 0.0
      %505 = vmatprep.subr.mxu0 0.0
      %506 = vmatpush2.msra.mxu0 0.0
      %507 = vmatprep.subr.mxu0 0.0
      %508 = vmatpush2.msra.mxu0 0.0
      %509 = vmatprep.subr.mxu0 0.0
      %510 = vmatpush2.msra.mxu0 0.0
      %511 = vmatprep.subr.mxu0 0.0
      %512 = vmatpush2.msra.mxu0 0.0
      %513 = vmatprep.subr.mxu0 0.0
      %514 = vmatpush2.msra.mxu0 0.0
      %515 = vmatprep.subr.mxu0 0.0
      %516 = vmatpush2.msra.mxu0 0.0
      %517 = vmatprep.subr.mxu0 0.0
      %518 = vmatpush2.msra.mxu0 0.0
      %519 = vmatprep.subr.mxu0 0.0
      %520 = vmatpush2.msra.mxu0 0.0
      %521 = vmatprep.subr.mxu0 0.0
      %522 = vmatpush2.msra.mxu0 0.0
      %523 = vmatprep.mubr.f32.mxu0 0.0
      %524 = vmatmul.mubr.f32.gmra.mxu0 %v432
      %v525 = vpop.f32.mrf.mxu0
      %v526 = vadd.f32 %v428, %v525
      %v527 = vpop.f32.mrf.mxu0
      %528 = vmatprep.mubr.f32.mxu0 0.0
      %529 = vmatmul.mubr.f32.gmra.mxu0 %v435
      %v530 = vpop.f32.mrf.mxu0
      %v531 = vadd.f32 %v428, %v530
      %v532 = vpop.f32.mrf.mxu0
      %533 = vmatprep.mubr.f32.mxu0 0.0
      %534 = vmatmul.mubr.f32.gmra.mxu0 %v438
      %v535 = vpop.f32.mrf.mxu0
      %v536 = vadd.f32 %v428, %v535
      %v537 = vpop.f32.mrf.mxu0
      %538 = vmatprep.mubr.f32.mxu0 0.0
      %539 = vmatmul.mubr.f32.gmra.mxu0 %v441
      %v540 = vpop.f32.mrf.mxu0
      %v541 = vadd.f32 %v428, %v540
      %v542 = vpop.f32.mrf.mxu0
      %543 = vmatprep.mubr.f32.mxu0 0.0
      %544 = vmatmul.mubr.f32.gmra.mxu0 %v444
      %v545 = vpop.f32.mrf.mxu0
      %v546 = vadd.f32 %v428, %v545
      %v547 = vpop.f32.mrf.mxu0
      %548 = vmatprep.mubr.f32.mxu0 0.0
      %549 = vmatmul.mubr.f32.gmra.mxu0 %v447
      %v550 = vpop.f32.mrf.mxu0
      %v551 = vadd.f32 %v428, %v550
      %v552 = vpop.f32.mrf.mxu0
      %553 = vmatprep.mubr.f32.mxu0 0.0
      %554 = vmatmul.mubr.f32.gmra.mxu0 %v450
      %v555 = vpop.f32.mrf.mxu0
      %v556 = vadd.f32 %v428, %v555
      %v557 = vpop.f32.mrf.mxu0
      %558 = vmatprep.mubr.f32.mxu0 0.0
      %559 = vmatmul.mubr.f32.gmra.mxu0 %v453
      %v560 = vpop.f32.mrf.mxu0
      %v561 = vadd.f32 %v428, %v560
      %v562 = vpop.f32.mrf.mxu0
      %563 = vdwg.mxu0
      %v564 = vmax.f32 %v526, 0.0
      %v565 = vmax.f32 %v531, 0.0
      %v566 = vmax.f32 %v536, 0.0
      %v567 = vmax.f32 %v541, 0.0
      %v568 = vmax.f32 %v546, 0.0
      %v569 = vmax.f32 %v551, 0.0
      %v570 = vmax.f32 %v556, 0.0
      %v571 = vmax.f32 %v561, 0.0
      %v572 = vld [vmem:[%s3] sm:$0xff]
      %v573 = vld [vmem:[%s4] sm:$0x1]
      %v575 = vlaneseq
      %v576 = vshrl.u32 %v575, 7
      %v577 = vsub.s32 0, %v576
      %v578 = vrot.slane %v573, %v577
      %vm580 = vcmask 64512
      %v582 = vsel %vm580, %v564, 0
      %v585 = vsel %vm580, %v565, 0
      %v588 = vsel %vm580, %v566, 0
      %v591 = vsel %vm580, %v567, 0
      %v594 = vsel %vm580, %v568, 0
      %v597 = vsel %vm580, %v569, 0
      %v600 = vsel %vm580, %v570, 0
      %v603 = vsel %vm580, %v571, 0
      %605 = vmatprep.subr.mxu0 0.0
      %606 = vmatpush1.msra.mxu0 0.0
      %607 = vmatprep.subr.mxu0 0.0
      %608 = vmatpush1.msra.mxu0 0.0
      %609 = vmatprep.subr.mxu0 0.0
      %610 = vmatpush1.msra.mxu0 0.0
      %611 = vmatprep.subr.mxu0 0.0
      %612 = vmatpush1.msra.mxu0 0.0
      %613 = vmatprep.subr.mxu0 0.0
      %614 = vmatpush1.msra.mxu0 0.0
      %615 = vmatprep.subr.mxu0 0.0
      %616 = vmatpush1.msra.mxu0 0.0
      %617 = vmatprep.subr.mxu0 0.0
      %618 = vmatpush1.msra.mxu0 0.0
      %619 = vmatprep.subr.mxu0 0.0
      %620 = vmatpush1.msra.mxu0 0.0
      %621 = vmatprep.subr.mxu0 0.0
      %622 = vmatpush1.msra.mxu0 0.0
      %623 = vmatprep.subr.mxu0 0.0
      %624 = vmatpush1.msra.mxu0 0.0
      %625 = vmatprep.subr.mxu0 0.0
      %626 = vmatpush1.msra.mxu0 0.0
      %627 = vmatprep.subr.mxu0 0.0
      %628 = vmatpush1.msra.mxu0 0.0
      %629 = vmatprep.subr.mxu0 0.0
      %630 = vmatpush1.msra.mxu0 0.0
      %631 = vmatprep.subr.mxu0 0.0
      %632 = vmatpush1.msra.mxu0 0.0
      %633 = vmatprep.subr.mxu0 0.0
      %634 = vmatpush1.msra.mxu0 0.0
      %635 = vmatprep.subr.mxu0 0.0
      %636 = vmatpush1.msra.mxu0 %v572
      %637 = vmatprep.subr.mxu0 0.0
      %638 = vmatpush2.msra.mxu0 0.0
      %639 = vmatprep.subr.mxu0 0.0
      %640 = vmatpush2.msra.mxu0 0.0
      %641 = vmatprep.subr.mxu0 0.0
      %642 = vmatpush2.msra.mxu0 0.0
      %643 = vmatprep.subr.mxu0 0.0
      %644 = vmatpush2.msra.mxu0 0.0
      %645 = vmatprep.subr.mxu0 0.0
      %646 = vmatpush2.msra.mxu0 0.0
      %647 = vmatprep.subr.mxu0 0.0
      %648 = vmatpush2.msra.mxu0 0.0
      %649 = vmatprep.subr.mxu0 0.0
      %650 = vmatpush2.msra.mxu0 0.0
      %651 = vmatprep.subr.mxu0 0.0
      %652 = vmatpush2.msra.mxu0 0.0
      %653 = vmatprep.subr.mxu0 0.0
      %654 = vmatpush2.msra.mxu0 0.0
      %655 = vmatprep.subr.mxu0 0.0
      %656 = vmatpush2.msra.mxu0 0.0
      %657 = vmatprep.subr.mxu0 0.0
      %658 = vmatpush2.msra.mxu0 0.0
      %659 = vmatprep.subr.mxu0 0.0
      %660 = vmatpush2.msra.mxu0 0.0
      %661 = vmatprep.subr.mxu0 0.0
      %662 = vmatpush2.msra.mxu0 0.0
      %663 = vmatprep.subr.mxu0 0.0
      %664 = vmatpush2.msra.mxu0 0.0
      %665 = vmatprep.subr.mxu0 0.0
      %666 = vmatpush2.msra.mxu0 0.0
      %667 = vmatprep.subr.mxu0 0.0
      %668 = vmatpush2.msra.mxu0 0.0
      %669 = vmatprep.mubr.f32.mxu0 0.0
      %670 = vmatmul.mubr.f32.gmra.mxu0 %v582
      %v671 = vpop.f32.mrf.mxu0
      %v672 = vadd.f32 %v578, %v671
      %v673 = vpop.f32.mrf.mxu0
      %674 = vmatprep.mubr.f32.mxu0 0.0
      %675 = vmatmul.mubr.f32.gmra.mxu0 %v585
      %v676 = vpop.f32.mrf.mxu0
      %v677 = vadd.f32 %v578, %v676
      %v678 = vpop.f32.mrf.mxu0
      %679 = vmatprep.mubr.f32.mxu0 0.0
      %680 = vmatmul.mubr.f32.gmra.mxu0 %v588
      %v681 = vpop.f32.mrf.mxu0
      %v682 = vadd.f32 %v578, %v681
      %v683 = vpop.f32.mrf.mxu0
      %684 = vmatprep.mubr.f32.mxu0 0.0
      %685 = vmatmul.mubr.f32.gmra.mxu0 %v591
      %v686 = vpop.f32.mrf.mxu0
      %v687 = vadd.f32 %v578, %v686
      %v688 = vpop.f32.mrf.mxu0
      %689 = vmatprep.mubr.f32.mxu0 0.0
      %690 = vmatmul.mubr.f32.gmra.mxu0 %v594
      %v691 = vpop.f32.mrf.mxu0
      %v692 = vadd.f32 %v578, %v691
      %v693 = vpop.f32.mrf.mxu0
      %694 = vmatprep.mubr.f32.mxu0 0.0
      %695 = vmatmul.mubr.f32.gmra.mxu0 %v597
      %v696 = vpop.f32.mrf.mxu0
      %v697 = vadd.f32 %v578, %v696
      %v698 = vpop.f32.mrf.mxu0
      %699 = vmatprep.mubr.f32.mxu0 0.0
      %700 = vmatmul.mubr.f32.gmra.mxu0 %v600
      %v701 = vpop.f32.mrf.mxu0
      %v702 = vadd.f32 %v578, %v701
      %v703 = vpop.f32.mrf.mxu0
      %704 = vmatprep.mubr.f32.mxu0 0.0
      %705 = vmatmul.mubr.f32.gmra.mxu0 %v603
      %v706 = vpop.f32.mrf.mxu0
      %v707 = vadd.f32 %v578, %v706
      %v708 = vpop.f32.mrf.mxu0
      %709 = vdwg.mxu0
      %v710 = vmax.f32 %v672, 0.0
      %v711 = vmax.f32 %v677, 0.0
      %v712 = vmax.f32 %v682, 0.0
      %v713 = vmax.f32 %v687, 0.0
      %v714 = vmax.f32 %v692, 0.0
      %v715 = vmax.f32 %v697, 0.0
      %v716 = vmax.f32 %v702, 0.0
      %v717 = vmax.f32 %v707, 0.0
      %v718 = vld [vmem:[%s5] sm:$0xf]
      %v719 = vld [vmem:[%s6] sm:$0x1]
      %v721 = vlaneseq
      %v722 = vshrl.u32 %v721, 7
      %v723 = vsub.s32 0, %v722
      %v724 = vrot.slane %v719, %v723
      %v727 = vsel %vm455, %v718, 0
      %729 = vmatprep.subr.mxu0 0.0
      %730 = vmatpush1.msra.mxu0 0.0
      %731 = vmatprep.subr.mxu0 0.0
      %732 = vmatpush1.msra.mxu0 0.0
      %733 = vmatprep.subr.mxu0 0.0
      %734 = vmatpush1.msra.mxu0 0.0
      %735 = vmatprep.subr.mxu0 0.0
      %736 = vmatpush1.msra.mxu0 0.0
      %737 = vmatprep.subr.mxu0 0.0
      %738 = vmatpush1.msra.mxu0 0.0
      %739 = vmatprep.subr.mxu0 0.0
      %740 = vmatpush1.msra.mxu0 0.0
      %741 = vmatprep.subr.mxu0 0.0
      %742 = vmatpush1.msra.mxu0 0.0
      %743 = vmatprep.subr.mxu0 0.0
      %744 = vmatpush1.msra.mxu0 0.0
      %745 = vmatprep.subr.mxu0 0.0
      %746 = vmatpush1.msra.mxu0 0.0
      %747 = vmatprep.subr.mxu0 0.0
      %748 = vmatpush1.msra.mxu0 0.0
      %749 = vmatprep.subr.mxu0 0.0
      %750 = vmatpush1.msra.mxu0 0.0
      %751 = vmatprep.subr.mxu0 0.0
      %752 = vmatpush1.msra.mxu0 0.0
      %753 = vmatprep.subr.mxu0 0.0
      %754 = vmatpush1.msra.mxu0 0.0
      %755 = vmatprep.subr.mxu0 0.0
      %756 = vmatpush1.msra.mxu0 0.0
      %757 = vmatprep.subr.mxu0 0.0
      %758 = vmatpush1.msra.mxu0 0.0
      %759 = vmatprep.subr.mxu0 0.0
      %760 = vmatpush1.msra.mxu0 %v727
      %761 = vmatprep.subr.mxu0 0.0
      %762 = vmatpush2.msra.mxu0 0.0
      %763 = vmatprep.subr.mxu0 0.0
      %764 = vmatpush2.msra.mxu0 0.0
      %765 = vmatprep.subr.mxu0 0.0
      %766 = vmatpush2.msra.mxu0 0.0
      %767 = vmatprep.subr.mxu0 0.0
      %768 = vmatpush2.msra.mxu0 0.0
      %769 = vmatprep.subr.mxu0 0.0
      %770 = vmatpush2.msra.mxu0 0.0
      %771 = vmatprep.subr.mxu0 0.0
      %772 = vmatpush2.msra.mxu0 0.0
      %773 = vmatprep.subr.mxu0 0.0
      %774 = vmatpush2.msra.mxu0 0.0
      %775 = vmatprep.subr.mxu0 0.0
      %776 = vmatpush2.msra.mxu0 0.0
      %777 = vmatprep.subr.mxu0 0.0
      %778 = vmatpush2.msra.mxu0 0.0
      %779 = vmatprep.subr.mxu0 0.0
      %780 = vmatpush2.msra.mxu0 0.0
      %781 = vmatprep.subr.mxu0 0.0
      %782 = vmatpush2.msra.mxu0 0.0
      %783 = vmatprep.subr.mxu0 0.0
      %784 = vmatpush2.msra.mxu0 0.0
      %785 = vmatprep.subr.mxu0 0.0
      %786 = vmatpush2.msra.mxu0 0.0
      %787 = vmatprep.subr.mxu0 0.0
      %788 = vmatpush2.msra.mxu0 0.0
      %789 = vmatprep.subr.mxu0 0.0
      %790 = vmatpush2.msra.mxu0 0.0
      %791 = vmatprep.subr.mxu0 0.0
      %792 = vmatpush2.msra.mxu0 0.0
      %793 = vmatprep.mubr.f32.mxu0 0.0
      %794 = vmatmul.mubr.f32.gmra.mxu0 %v432
      %v795 = vpop.f32.mrf.mxu0
      %v796 = vadd.f32 %v724, %v795
      %v797 = vpop.f32.mrf.mxu0
      %798 = vmatprep.mubr.f32.mxu0 0.0
      %799 = vmatmul.mubr.f32.gmra.mxu0 %v435
      %v800 = vpop.f32.mrf.mxu0
      %v801 = vadd.f32 %v724, %v800
      %v802 = vpop.f32.mrf.mxu0
      %803 = vmatprep.mubr.f32.mxu0 0.0
      %804 = vmatmul.mubr.f32.gmra.mxu0 %v438
      %v805 = vpop.f32.mrf.mxu0
      %v806 = vadd.f32 %v724, %v805
      %v807 = vpop.f32.mrf.mxu0
      %808 = vmatprep.mubr.f32.mxu0 0.0
      %809 = vmatmul.mubr.f32.gmra.mxu0 %v441
      %v810 = vpop.f32.mrf.mxu0
      %v811 = vadd.f32 %v724, %v810
      %v812 = vpop.f32.mrf.mxu0
      %813 = vmatprep.mubr.f32.mxu0 0.0
      %814 = vmatmul.mubr.f32.gmra.mxu0 %v444
      %v815 = vpop.f32.mrf.mxu0
      %v816 = vadd.f32 %v724, %v815
      %v817 = vpop.f32.mrf.mxu0
      %818 = vmatprep.mubr.f32.mxu0 0.0
      %819 = vmatmul.mubr.f32.gmra.mxu0 %v447
      %v820 = vpop.f32.mrf.mxu0
      %v821 = vadd.f32 %v724, %v820
      %v822 = vpop.f32.mrf.mxu0
      %823 = vmatprep.mubr.f32.mxu0 0.0
      %824 = vmatmul.mubr.f32.gmra.mxu0 %v450
      %v825 = vpop.f32.mrf.mxu0
      %v826 = vadd.f32 %v724, %v825
      %v827 = vpop.f32.mrf.mxu0
      %828 = vmatprep.mubr.f32.mxu0 0.0
      %829 = vmatmul.mubr.f32.gmra.mxu0 %v453
      %v830 = vpop.f32.mrf.mxu0
      %v831 = vadd.f32 %v724, %v830
      %v832 = vpop.f32.mrf.mxu0
      %833 = vdwg.mxu0
      %v834 = vmax.f32 %v796, 0.0
      %v835 = vmax.f32 %v801, 0.0
      %v836 = vmax.f32 %v806, 0.0
      %v837 = vmax.f32 %v811, 0.0
      %v838 = vmax.f32 %v816, 0.0
      %v839 = vmax.f32 %v821, 0.0
      %v840 = vmax.f32 %v826, 0.0
      %v841 = vmax.f32 %v831, 0.0
      %v842 = vld [vmem:[%s7] sm:$0xff]
      %v843 = vld [vmem:[%s8] sm:$0x1]
      %v845 = vlaneseq
      %v846 = vshrl.u32 %v845, 7
      %v847 = vsub.s32 0, %v846
      %v848 = vrot.slane %v843, %v847
      %v851 = vsel %vm580, %v834, 0
      %v854 = vsel %vm580, %v835, 0
      %v857 = vsel %vm580, %v836, 0
      %v860 = vsel %vm580, %v837, 0
      %v863 = vsel %vm580, %v838, 0
      %v866 = vsel %vm580, %v839, 0
      %v869 = vsel %vm580, %v840, 0
      %v872 = vsel %vm580, %v841, 0
      %874 = vmatprep.subr.mxu0 0.0
      %875 = vmatpush1.msra.mxu0 0.0
      %876 = vmatprep.subr.mxu0 0.0
      %877 = vmatpush1.msra.mxu0 0.0
      %878 = vmatprep.subr.mxu0 0.0
      %879 = vmatpush1.msra.mxu0 0.0
      %880 = vmatprep.subr.mxu0 0.0
      %881 = vmatpush1.msra.mxu0 0.0
      %882 = vmatprep.subr.mxu0 0.0
      %883 = vmatpush1.msra.mxu0 0.0
      %884 = vmatprep.subr.mxu0 0.0
      %885 = vmatpush1.msra.mxu0 0.0
      %886 = vmatprep.subr.mxu0 0.0
      %887 = vmatpush1.msra.mxu0 0.0
      %888 = vmatprep.subr.mxu0 0.0
      %889 = vmatpush1.msra.mxu0 0.0
      %890 = vmatprep.subr.mxu0 0.0
      %891 = vmatpush1.msra.mxu0 0.0
      %892 = vmatprep.subr.mxu0 0.0
      %893 = vmatpush1.msra.mxu0 0.0
      %894 = vmatprep.subr.mxu0 0.0
      %895 = vmatpush1.msra.mxu0 0.0
      %896 = vmatprep.subr.mxu0 0.0
      %897 = vmatpush1.msra.mxu0 0.0
      %898 = vmatprep.subr.mxu0 0.0
      %899 = vmatpush1.msra.mxu0 0.0
      %900 = vmatprep.subr.mxu0 0.0
      %901 = vmatpush1.msra.mxu0 0.0
      %902 = vmatprep.subr.mxu0 0.0
      %903 = vmatpush1.msra.mxu0 0.0
      %904 = vmatprep.subr.mxu0 0.0
      %905 = vmatpush1.msra.mxu0 %v842
      %906 = vmatprep.subr.mxu0 0.0
      %907 = vmatpush2.msra.mxu0 0.0
      %908 = vmatprep.subr.mxu0 0.0
      %909 = vmatpush2.msra.mxu0 0.0
      %910 = vmatprep.subr.mxu0 0.0
      %911 = vmatpush2.msra.mxu0 0.0
      %912 = vmatprep.subr.mxu0 0.0
      %913 = vmatpush2.msra.mxu0 0.0
      %914 = vmatprep.subr.mxu0 0.0
      %915 = vmatpush2.msra.mxu0 0.0
      %916 = vmatprep.subr.mxu0 0.0
      %917 = vmatpush2.msra.mxu0 0.0
      %918 = vmatprep.subr.mxu0 0.0
      %919 = vmatpush2.msra.mxu0 0.0
      %920 = vmatprep.subr.mxu0 0.0
      %921 = vmatpush2.msra.mxu0 0.0
      %922 = vmatprep.subr.mxu0 0.0
      %923 = vmatpush2.msra.mxu0 0.0
      %924 = vmatprep.subr.mxu0 0.0
      %925 = vmatpush2.msra.mxu0 0.0
      %926 = vmatprep.subr.mxu0 0.0
      %927 = vmatpush2.msra.mxu0 0.0
      %928 = vmatprep.subr.mxu0 0.0
      %929 = vmatpush2.msra.mxu0 0.0
      %930 = vmatprep.subr.mxu0 0.0
      %931 = vmatpush2.msra.mxu0 0.0
      %932 = vmatprep.subr.mxu0 0.0
      %933 = vmatpush2.msra.mxu0 0.0
      %934 = vmatprep.subr.mxu0 0.0
      %935 = vmatpush2.msra.mxu0 0.0
      %936 = vmatprep.subr.mxu0 0.0
      %937 = vmatpush2.msra.mxu0 0.0
      %938 = vmatprep.mubr.f32.mxu0 0.0
      %939 = vmatmul.mubr.f32.gmra.mxu0 %v851
      %v940 = vpop.f32.mrf.mxu0
      %v941 = vadd.f32 %v848, %v940
      %v942 = vpop.f32.mrf.mxu0
      %943 = vmatprep.mubr.f32.mxu0 0.0
      %944 = vmatmul.mubr.f32.gmra.mxu0 %v854
      %v945 = vpop.f32.mrf.mxu0
      %v946 = vadd.f32 %v848, %v945
      %v947 = vpop.f32.mrf.mxu0
      %948 = vmatprep.mubr.f32.mxu0 0.0
      %949 = vmatmul.mubr.f32.gmra.mxu0 %v857
      %v950 = vpop.f32.mrf.mxu0
      %v951 = vadd.f32 %v848, %v950
      %v952 = vpop.f32.mrf.mxu0
      %953 = vmatprep.mubr.f32.mxu0 0.0
      %954 = vmatmul.mubr.f32.gmra.mxu0 %v860
      %v955 = vpop.f32.mrf.mxu0
      %v956 = vadd.f32 %v848, %v955
      %v957 = vpop.f32.mrf.mxu0
      %958 = vmatprep.mubr.f32.mxu0 0.0
      %959 = vmatmul.mubr.f32.gmra.mxu0 %v863
      %v960 = vpop.f32.mrf.mxu0
      %v961 = vadd.f32 %v848, %v960
      %v962 = vpop.f32.mrf.mxu0
      %963 = vmatprep.mubr.f32.mxu0 0.0
      %964 = vmatmul.mubr.f32.gmra.mxu0 %v866
      %v965 = vpop.f32.mrf.mxu0
      %v966 = vadd.f32 %v848, %v965
      %v967 = vpop.f32.mrf.mxu0
      %968 = vmatprep.mubr.f32.mxu0 0.0
      %969 = vmatmul.mubr.f32.gmra.mxu0 %v869
      %v970 = vpop.f32.mrf.mxu0
      %v971 = vadd.f32 %v848, %v970
      %v972 = vpop.f32.mrf.mxu0
      %973 = vmatprep.mubr.f32.mxu0 0.0
      %974 = vmatmul.mubr.f32.gmra.mxu0 %v872
      %v975 = vpop.f32.mrf.mxu0
      %v976 = vadd.f32 %v848, %v975
      %v977 = vpop.f32.mrf.mxu0
      %978 = vdwg.mxu0
      %v979 = vmax.f32 %v941, 0.0
      %v980 = vmax.f32 %v946, 0.0
      %v981 = vmax.f32 %v951, 0.0
      %v982 = vmax.f32 %v956, 0.0
      %v983 = vmax.f32 %v961, 0.0
      %v984 = vmax.f32 %v966, 0.0
      %v985 = vmax.f32 %v971, 0.0
      %v986 = vmax.f32 %v976, 0.0
      %v987 = vlaneseq
      %v988 = vshrl.u32 %v987, 7
      %v989 = vsub.s32 0, %v988
      %v990 = vrot.slane %v710, %v989
      %v991 = vlaneseq
      %v992 = vshrl.u32 %v991, 7
      %v993 = vsub.s32 0, %v992
      %v994 = vrot.slane %v711, %v993
      %v995 = vlaneseq
      %v996 = vshrl.u32 %v995, 7
      %v997 = vsub.s32 0, %v996
      %v998 = vrot.slane %v712, %v997
      %v999 = vlaneseq
      %v1000 = vshrl.u32 %v999, 7
      %v1001 = vsub.s32 0, %v1000
      %v1002 = vrot.slane %v713, %v1001
      %v1003 = vlaneseq
      %v1004 = vshrl.u32 %v1003, 7
      %v1005 = vsub.s32 0, %v1004
      %v1006 = vrot.slane %v714, %v1005
      %v1007 = vlaneseq
      %v1008 = vshrl.u32 %v1007, 7
      %v1009 = vsub.s32 0, %v1008
      %v1010 = vrot.slane %v715, %v1009
      %v1011 = vlaneseq
      %v1012 = vshrl.u32 %v1011, 7
      %v1013 = vsub.s32 0, %v1012
      %v1014 = vrot.slane %v716, %v1013
      %v1015 = vlaneseq
      %v1016 = vshrl.u32 %v1015, 7
      %v1017 = vsub.s32 0, %v1016
      %v1018 = vrot.slane %v717, %v1017
      %v1019 = vmul.f32 %v990, %v979
      %v1020 = vmul.f32 %v994, %v979
      %v1021 = vmul.f32 %v998, %v979
      %v1022 = vmul.f32 %v1002, %v979
      %v1023 = vmul.f32 %v1006, %v979
      %v1024 = vmul.f32 %v1010, %v979
      %v1025 = vmul.f32 %v1014, %v979
      %v1026 = vmul.f32 %v1018, %v979
      %v1027 = vadd.f32 %v1019, 0.0
      %v1028 = vadd.f32 %v1020, 0.0
      %v1029 = vadd.f32 %v1021, 0.0
      %v1030 = vadd.f32 %v1022, 0.0
      %v1031 = vadd.f32 %v1023, 0.0
      %v1032 = vadd.f32 %v1024, 0.0
      %v1033 = vadd.f32 %v1025, 0.0
      %v1034 = vadd.f32 %v1026, 0.0
      %v1035 = vlaneseq
      %v1036 = vshrl.u32 %v1035, 7
      %v1037 = vsub.s32 1, %v1036
      %v1038 = vrot.slane %v710, %v1037
      %v1039 = vlaneseq
      %v1040 = vshrl.u32 %v1039, 7
      %v1041 = vsub.s32 1, %v1040
      %v1042 = vrot.slane %v711, %v1041
      %v1043 = vlaneseq
      %v1044 = vshrl.u32 %v1043, 7
      %v1045 = vsub.s32 1, %v1044
      %v1046 = vrot.slane %v712, %v1045
      %v1047 = vlaneseq
      %v1048 = vshrl.u32 %v1047, 7
      %v1049 = vsub.s32 1, %v1048
      %v1050 = vrot.slane %v713, %v1049
      %v1051 = vlaneseq
      %v1052 = vshrl.u32 %v1051, 7
      %v1053 = vsub.s32 1, %v1052
      %v1054 = vrot.slane %v714, %v1053
      %v1055 = vlaneseq
      %v1056 = vshrl.u32 %v1055, 7
      %v1057 = vsub.s32 1, %v1056
      %v1058 = vrot.slane %v715, %v1057
      %v1059 = vlaneseq
      %v1060 = vshrl.u32 %v1059, 7
      %v1061 = vsub.s32 1, %v1060
      %v1062 = vrot.slane %v716, %v1061
      %v1063 = vlaneseq
      %v1064 = vshrl.u32 %v1063, 7
      %v1065 = vsub.s32 1, %v1064
      %v1066 = vrot.slane %v717, %v1065
      %v1067 = vmul.f32 %v1038, %v980
      %v1068 = vmul.f32 %v1042, %v980
      %v1069 = vmul.f32 %v1046, %v980
      %v1070 = vmul.f32 %v1050, %v980
      %v1071 = vmul.f32 %v1054, %v980
      %v1072 = vmul.f32 %v1058, %v980
      %v1073 = vmul.f32 %v1062, %v980
      %v1074 = vmul.f32 %v1066, %v980
      %v1075 = vadd.f32 %v1027, %v1067
      %v1076 = vadd.f32 %v1028, %v1068
      %v1077 = vadd.f32 %v1029, %v1069
      %v1078 = vadd.f32 %v1030, %v1070
      %v1079 = vadd.f32 %v1031, %v1071
      %v1080 = vadd.f32 %v1032, %v1072
      %v1081 = vadd.f32 %v1033, %v1073
      %v1082 = vadd.f32 %v1034, %v1074
      %v1083 = vlaneseq
      %v1084 = vshrl.u32 %v1083, 7
      %v1085 = vsub.s32 2, %v1084
      %v1086 = vrot.slane %v710, %v1085
      %v1087 = vlaneseq
      %v1088 = vshrl.u32 %v1087, 7
      %v1089 = vsub.s32 2, %v1088
      %v1090 = vrot.slane %v711, %v1089
      %v1091 = vlaneseq
      %v1092 = vshrl.u32 %v1091, 7
      %v1093 = vsub.s32 2, %v1092
      %v1094 = vrot.slane %v712, %v1093
      %v1095 = vlaneseq
      %v1096 = vshrl.u32 %v1095, 7
      %v1097 = vsub.s32 2, %v1096
      %v1098 = vrot.slane %v713, %v1097
      %v1099 = vlaneseq
      %v1100 = vshrl.u32 %v1099, 7
      %v1101 = vsub.s32 2, %v1100
      %v1102 = vrot.slane %v714, %v1101
      %v1103 = vlaneseq
      %v1104 = vshrl.u32 %v1103, 7
      %v1105 = vsub.s32 2, %v1104
      %v1106 = vrot.slane %v715, %v1105
      %v1107 = vlaneseq
      %v1108 = vshrl.u32 %v1107, 7
      %v1109 = vsub.s32 2, %v1108
      %v1110 = vrot.slane %v716, %v1109
      %v1111 = vlaneseq
      %v1112 = vshrl.u32 %v1111, 7
      %v1113 = vsub.s32 2, %v1112
      %v1114 = vrot.slane %v717, %v1113
      %v1115 = vmul.f32 %v1086, %v981
      %v1116 = vmul.f32 %v1090, %v981
      %v1117 = vmul.f32 %v1094, %v981
      %v1118 = vmul.f32 %v1098, %v981
      %v1119 = vmul.f32 %v1102, %v981
      %v1120 = vmul.f32 %v1106, %v981
      %v1121 = vmul.f32 %v1110, %v981
      %v1122 = vmul.f32 %v1114, %v981
      %v1123 = vadd.f32 %v1075, %v1115
      %v1124 = vadd.f32 %v1076, %v1116
      %v1125 = vadd.f32 %v1077, %v1117
      %v1126 = vadd.f32 %v1078, %v1118
      %v1127 = vadd.f32 %v1079, %v1119
      %v1128 = vadd.f32 %v1080, %v1120
      %v1129 = vadd.f32 %v1081, %v1121
      %v1130 = vadd.f32 %v1082, %v1122
      %v1131 = vlaneseq
      %v1132 = vshrl.u32 %v1131, 7
      %v1133 = vsub.s32 3, %v1132
      %v1134 = vrot.slane %v710, %v1133
      %v1135 = vlaneseq
      %v1136 = vshrl.u32 %v1135, 7
      %v1137 = vsub.s32 3, %v1136
      %v1138 = vrot.slane %v711, %v1137
      %v1139 = vlaneseq
      %v1140 = vshrl.u32 %v1139, 7
      %v1141 = vsub.s32 3, %v1140
      %v1142 = vrot.slane %v712, %v1141
      %v1143 = vlaneseq
      %v1144 = vshrl.u32 %v1143, 7
      %v1145 = vsub.s32 3, %v1144
      %v1146 = vrot.slane %v713, %v1145
      %v1147 = vlaneseq
      %v1148 = vshrl.u32 %v1147, 7
      %v1149 = vsub.s32 3, %v1148
      %v1150 = vrot.slane %v714, %v1149
      %v1151 = vlaneseq
      %v1152 = vshrl.u32 %v1151, 7
      %v1153 = vsub.s32 3, %v1152
      %v1154 = vrot.slane %v715, %v1153
      %v1155 = vlaneseq
      %v1156 = vshrl.u32 %v1155, 7
      %v1157 = vsub.s32 3, %v1156
      %v1158 = vrot.slane %v716, %v1157
      %v1159 = vlaneseq
      %v1160 = vshrl.u32 %v1159, 7
      %v1161 = vsub.s32 3, %v1160
      %v1162 = vrot.slane %v717, %v1161
      %v1163 = vmul.f32 %v1134, %v982
      %v1164 = vmul.f32 %v1138, %v982
      %v1165 = vmul.f32 %v1142, %v982
      %v1166 = vmul.f32 %v1146, %v982
      %v1167 = vmul.f32 %v1150, %v982
      %v1168 = vmul.f32 %v1154, %v982
      %v1169 = vmul.f32 %v1158, %v982
      %v1170 = vmul.f32 %v1162, %v982
      %v1171 = vadd.f32 %v1123, %v1163
      %v1172 = vadd.f32 %v1124, %v1164
      %v1173 = vadd.f32 %v1125, %v1165
      %v1174 = vadd.f32 %v1126, %v1166
      %v1175 = vadd.f32 %v1127, %v1167
      %v1176 = vadd.f32 %v1128, %v1168
      %v1177 = vadd.f32 %v1129, %v1169
      %v1178 = vadd.f32 %v1130, %v1170
      %v1179 = vlaneseq
      %v1180 = vshrl.u32 %v1179, 7
      %v1181 = vsub.s32 4, %v1180
      %v1182 = vrot.slane %v710, %v1181
      %v1183 = vlaneseq
      %v1184 = vshrl.u32 %v1183, 7
      %v1185 = vsub.s32 4, %v1184
      %v1186 = vrot.slane %v711, %v1185
      %v1187 = vlaneseq
      %v1188 = vshrl.u32 %v1187, 7
      %v1189 = vsub.s32 4, %v1188
      %v1190 = vrot.slane %v712, %v1189
      %v1191 = vlaneseq
      %v1192 = vshrl.u32 %v1191, 7
      %v1193 = vsub.s32 4, %v1192
      %v1194 = vrot.slane %v713, %v1193
      %v1195 = vlaneseq
      %v1196 = vshrl.u32 %v1195, 7
      %v1197 = vsub.s32 4, %v1196
      %v1198 = vrot.slane %v714, %v1197
      %v1199 = vlaneseq
      %v1200 = vshrl.u32 %v1199, 7
      %v1201 = vsub.s32 4, %v1200
      %v1202 = vrot.slane %v715, %v1201
      %v1203 = vlaneseq
      %v1204 = vshrl.u32 %v1203, 7
      %v1205 = vsub.s32 4, %v1204
      %v1206 = vrot.slane %v716, %v1205
      %v1207 = vlaneseq
      %v1208 = vshrl.u32 %v1207, 7
      %v1209 = vsub.s32 4, %v1208
      %v1210 = vrot.slane %v717, %v1209
      %v1211 = vmul.f32 %v1182, %v983
      %v1212 = vmul.f32 %v1186, %v983
      %v1213 = vmul.f32 %v1190, %v983
      %v1214 = vmul.f32 %v1194, %v983
      %v1215 = vmul.f32 %v1198, %v983
      %v1216 = vmul.f32 %v1202, %v983
      %v1217 = vmul.f32 %v1206, %v983
      %v1218 = vmul.f32 %v1210, %v983
      %v1219 = vadd.f32 %v1171, %v1211
      %v1220 = vadd.f32 %v1172, %v1212
      %v1221 = vadd.f32 %v1173, %v1213
      %v1222 = vadd.f32 %v1174, %v1214
      %v1223 = vadd.f32 %v1175, %v1215
      %v1224 = vadd.f32 %v1176, %v1216
      %v1225 = vadd.f32 %v1177, %v1217
      %v1226 = vadd.f32 %v1178, %v1218
      %v1227 = vlaneseq
      %v1228 = vshrl.u32 %v1227, 7
      %v1229 = vsub.s32 5, %v1228
      %v1230 = vrot.slane %v710, %v1229
      %v1231 = vlaneseq
      %v1232 = vshrl.u32 %v1231, 7
      %v1233 = vsub.s32 5, %v1232
      %v1234 = vrot.slane %v711, %v1233
      %v1235 = vlaneseq
      %v1236 = vshrl.u32 %v1235, 7
      %v1237 = vsub.s32 5, %v1236
      %v1238 = vrot.slane %v712, %v1237
      %v1239 = vlaneseq
      %v1240 = vshrl.u32 %v1239, 7
      %v1241 = vsub.s32 5, %v1240
      %v1242 = vrot.slane %v713, %v1241
      %v1243 = vlaneseq
      %v1244 = vshrl.u32 %v1243, 7
      %v1245 = vsub.s32 5, %v1244
      %v1246 = vrot.slane %v714, %v1245
      %v1247 = vlaneseq
      %v1248 = vshrl.u32 %v1247, 7
      %v1249 = vsub.s32 5, %v1248
      %v1250 = vrot.slane %v715, %v1249
      %v1251 = vlaneseq
      %v1252 = vshrl.u32 %v1251, 7
      %v1253 = vsub.s32 5, %v1252
      %v1254 = vrot.slane %v716, %v1253
      %v1255 = vlaneseq
      %v1256 = vshrl.u32 %v1255, 7
      %v1257 = vsub.s32 5, %v1256
      %v1258 = vrot.slane %v717, %v1257
      %v1259 = vmul.f32 %v1230, %v984
      %v1260 = vmul.f32 %v1234, %v984
      %v1261 = vmul.f32 %v1238, %v984
      %v1262 = vmul.f32 %v1242, %v984
      %v1263 = vmul.f32 %v1246, %v984
      %v1264 = vmul.f32 %v1250, %v984
      %v1265 = vmul.f32 %v1254, %v984
      %v1266 = vmul.f32 %v1258, %v984
      %v1267 = vadd.f32 %v1219, %v1259
      %v1268 = vadd.f32 %v1220, %v1260
      %v1269 = vadd.f32 %v1221, %v1261
      %v1270 = vadd.f32 %v1222, %v1262
      %v1271 = vadd.f32 %v1223, %v1263
      %v1272 = vadd.f32 %v1224, %v1264
      %v1273 = vadd.f32 %v1225, %v1265
      %v1274 = vadd.f32 %v1226, %v1266
      %v1275 = vlaneseq
      %v1276 = vshrl.u32 %v1275, 7
      %v1277 = vsub.s32 6, %v1276
      %v1278 = vrot.slane %v710, %v1277
      %v1279 = vlaneseq
      %v1280 = vshrl.u32 %v1279, 7
      %v1281 = vsub.s32 6, %v1280
      %v1282 = vrot.slane %v711, %v1281
      %v1283 = vlaneseq
      %v1284 = vshrl.u32 %v1283, 7
      %v1285 = vsub.s32 6, %v1284
      %v1286 = vrot.slane %v712, %v1285
      %v1287 = vlaneseq
      %v1288 = vshrl.u32 %v1287, 7
      %v1289 = vsub.s32 6, %v1288
      %v1290 = vrot.slane %v713, %v1289
      %v1291 = vlaneseq
      %v1292 = vshrl.u32 %v1291, 7
      %v1293 = vsub.s32 6, %v1292
      %v1294 = vrot.slane %v714, %v1293
      %v1295 = vlaneseq
      %v1296 = vshrl.u32 %v1295, 7
      %v1297 = vsub.s32 6, %v1296
      %v1298 = vrot.slane %v715, %v1297
      %v1299 = vlaneseq
      %v1300 = vshrl.u32 %v1299, 7
      %v1301 = vsub.s32 6, %v1300
      %v1302 = vrot.slane %v716, %v1301
      %v1303 = vlaneseq
      %v1304 = vshrl.u32 %v1303, 7
      %v1305 = vsub.s32 6, %v1304
      %v1306 = vrot.slane %v717, %v1305
      %v1307 = vmul.f32 %v1278, %v985
      %v1308 = vmul.f32 %v1282, %v985
      %v1309 = vmul.f32 %v1286, %v985
      %v1310 = vmul.f32 %v1290, %v985
      %v1311 = vmul.f32 %v1294, %v985
      %v1312 = vmul.f32 %v1298, %v985
      %v1313 = vmul.f32 %v1302, %v985
      %v1314 = vmul.f32 %v1306, %v985
      %v1315 = vadd.f32 %v1267, %v1307
      %v1316 = vadd.f32 %v1268, %v1308
      %v1317 = vadd.f32 %v1269, %v1309
      %v1318 = vadd.f32 %v1270, %v1310
      %v1319 = vadd.f32 %v1271, %v1311
      %v1320 = vadd.f32 %v1272, %v1312
      %v1321 = vadd.f32 %v1273, %v1313
      %v1322 = vadd.f32 %v1274, %v1314
      %v1323 = vlaneseq
      %v1324 = vshrl.u32 %v1323, 7
      %v1325 = vsub.s32 7, %v1324
      %v1326 = vrot.slane %v710, %v1325
      %v1327 = vlaneseq
      %v1328 = vshrl.u32 %v1327, 7
      %v1329 = vsub.s32 7, %v1328
      %v1330 = vrot.slane %v711, %v1329
      %v1331 = vlaneseq
      %v1332 = vshrl.u32 %v1331, 7
      %v1333 = vsub.s32 7, %v1332
      %v1334 = vrot.slane %v712, %v1333
      %v1335 = vlaneseq
      %v1336 = vshrl.u32 %v1335, 7
      %v1337 = vsub.s32 7, %v1336
      %v1338 = vrot.slane %v713, %v1337
      %v1339 = vlaneseq
      %v1340 = vshrl.u32 %v1339, 7
      %v1341 = vsub.s32 7, %v1340
      %v1342 = vrot.slane %v714, %v1341
      %v1343 = vlaneseq
      %v1344 = vshrl.u32 %v1343, 7
      %v1345 = vsub.s32 7, %v1344
      %v1346 = vrot.slane %v715, %v1345
      %v1347 = vlaneseq
      %v1348 = vshrl.u32 %v1347, 7
      %v1349 = vsub.s32 7, %v1348
      %v1350 = vrot.slane %v716, %v1349
      %v1351 = vlaneseq
      %v1352 = vshrl.u32 %v1351, 7
      %v1353 = vsub.s32 7, %v1352
      %v1354 = vrot.slane %v717, %v1353
      %v1355 = vmul.f32 %v1326, %v986
      %v1356 = vmul.f32 %v1330, %v986
      %v1357 = vmul.f32 %v1334, %v986
      %v1358 = vmul.f32 %v1338, %v986
      %v1359 = vmul.f32 %v1342, %v986
      %v1360 = vmul.f32 %v1346, %v986
      %v1361 = vmul.f32 %v1350, %v986
      %v1362 = vmul.f32 %v1354, %v986
      %v1363 = vadd.f32 %v1315, %v1355
      %v1364 = vadd.f32 %v1316, %v1356
      %v1365 = vadd.f32 %v1317, %v1357
      %v1366 = vadd.f32 %v1318, %v1358
      %v1367 = vadd.f32 %v1319, %v1359
      %v1368 = vadd.f32 %v1320, %v1360
      %v1369 = vadd.f32 %v1321, %v1361
      %v1370 = vadd.f32 %v1322, %v1362
      %v1371 = vld [vmem:[%s9] sm:$0xf]
      %v1372 = vld [vmem:[%s10] sm:$0xff]
      %v1374 = vsel %vm580, %v1363, 0
      %v1377 = vsel %vm580, %v1364, 0
      %v1380 = vsel %vm580, %v1365, 0
      %v1383 = vsel %vm580, %v1366, 0
      %v1386 = vsel %vm580, %v1367, 0
      %v1389 = vsel %vm580, %v1368, 0
      %v1392 = vsel %vm580, %v1369, 0
      %v1395 = vsel %vm580, %v1370, 0
      %1397 = vmatprep.subr.mxu0 0.0
      %1398 = vmatpush1.msra.mxu0 0.0
      %1399 = vmatprep.subr.mxu0 0.0
      %1400 = vmatpush1.msra.mxu0 0.0
      %1401 = vmatprep.subr.mxu0 0.0
      %1402 = vmatpush1.msra.mxu0 0.0
      %1403 = vmatprep.subr.mxu0 0.0
      %1404 = vmatpush1.msra.mxu0 0.0
      %1405 = vmatprep.subr.mxu0 0.0
      %1406 = vmatpush1.msra.mxu0 0.0
      %1407 = vmatprep.subr.mxu0 0.0
      %1408 = vmatpush1.msra.mxu0 0.0
      %1409 = vmatprep.subr.mxu0 0.0
      %1410 = vmatpush1.msra.mxu0 0.0
      %1411 = vmatprep.subr.mxu0 0.0
      %1412 = vmatpush1.msra.mxu0 0.0
      %1413 = vmatprep.subr.mxu0 0.0
      %1414 = vmatpush1.msra.mxu0 0.0
      %1415 = vmatprep.subr.mxu0 0.0
      %1416 = vmatpush1.msra.mxu0 0.0
      %1417 = vmatprep.subr.mxu0 0.0
      %1418 = vmatpush1.msra.mxu0 0.0
      %1419 = vmatprep.subr.mxu0 0.0
      %1420 = vmatpush1.msra.mxu0 0.0
      %1421 = vmatprep.subr.mxu0 0.0
      %1422 = vmatpush1.msra.mxu0 0.0
      %1423 = vmatprep.subr.mxu0 0.0
      %1424 = vmatpush1.msra.mxu0 0.0
      %1425 = vmatprep.subr.mxu0 0.0
      %1426 = vmatpush1.msra.mxu0 0.0
      %1427 = vmatprep.subr.mxu0 0.0
      %1428 = vmatpush1.msra.mxu0 %v1372
      %1429 = vmatprep.subr.mxu0 0.0
      %1430 = vmatpush2.msra.mxu0 0.0
      %1431 = vmatprep.subr.mxu0 0.0
      %1432 = vmatpush2.msra.mxu0 0.0
      %1433 = vmatprep.subr.mxu0 0.0
      %1434 = vmatpush2.msra.mxu0 0.0
      %1435 = vmatprep.subr.mxu0 0.0
      %1436 = vmatpush2.msra.mxu0 0.0
      %1437 = vmatprep.subr.mxu0 0.0
      %1438 = vmatpush2.msra.mxu0 0.0
      %1439 = vmatprep.subr.mxu0 0.0
      %1440 = vmatpush2.msra.mxu0 0.0
      %1441 = vmatprep.subr.mxu0 0.0
      %1442 = vmatpush2.msra.mxu0 0.0
      %1443 = vmatprep.subr.mxu0 0.0
      %1444 = vmatpush2.msra.mxu0 0.0
      %1445 = vmatprep.subr.mxu0 0.0
      %1446 = vmatpush2.msra.mxu0 0.0
      %1447 = vmatprep.subr.mxu0 0.0
      %1448 = vmatpush2.msra.mxu0 0.0
      %1449 = vmatprep.subr.mxu0 0.0
      %1450 = vmatpush2.msra.mxu0 0.0
      %1451 = vmatprep.subr.mxu0 0.0
      %1452 = vmatpush2.msra.mxu0 0.0
      %1453 = vmatprep.subr.mxu0 0.0
      %1454 = vmatpush2.msra.mxu0 0.0
      %1455 = vmatprep.subr.mxu0 0.0
      %1456 = vmatpush2.msra.mxu0 0.0
      %1457 = vmatprep.subr.mxu0 0.0
      %1458 = vmatpush2.msra.mxu0 0.0
      %1459 = vmatprep.subr.mxu0 0.0
      %1460 = vmatpush2.msra.mxu0 0.0
      %1461 = vmatprep.mubr.f32.mxu0 0.0
      %1462 = vmatmul.mubr.f32.gmra.mxu0 %v1374
      %v1463 = vpop.f32.mrf.mxu0
      %v1464 = vadd.f32 0.0, %v1463
      %v1465 = vpop.f32.mrf.mxu0
      %1466 = vmatprep.mubr.f32.mxu0 0.0
      %1467 = vmatmul.mubr.f32.gmra.mxu0 %v1377
      %v1468 = vpop.f32.mrf.mxu0
      %v1469 = vadd.f32 0.0, %v1468
      %v1470 = vpop.f32.mrf.mxu0
      %1471 = vmatprep.mubr.f32.mxu0 0.0
      %1472 = vmatmul.mubr.f32.gmra.mxu0 %v1380
      %v1473 = vpop.f32.mrf.mxu0
      %v1474 = vadd.f32 0.0, %v1473
      %v1475 = vpop.f32.mrf.mxu0
      %1476 = vmatprep.mubr.f32.mxu0 0.0
      %1477 = vmatmul.mubr.f32.gmra.mxu0 %v1383
      %v1478 = vpop.f32.mrf.mxu0
      %v1479 = vadd.f32 0.0, %v1478
      %v1480 = vpop.f32.mrf.mxu0
      %1481 = vmatprep.mubr.f32.mxu0 0.0
      %1482 = vmatmul.mubr.f32.gmra.mxu0 %v1386
      %v1483 = vpop.f32.mrf.mxu0
      %v1484 = vadd.f32 0.0, %v1483
      %v1485 = vpop.f32.mrf.mxu0
      %1486 = vmatprep.mubr.f32.mxu0 0.0
      %1487 = vmatmul.mubr.f32.gmra.mxu0 %v1389
      %v1488 = vpop.f32.mrf.mxu0
      %v1489 = vadd.f32 0.0, %v1488
      %v1490 = vpop.f32.mrf.mxu0
      %1491 = vmatprep.mubr.f32.mxu0 0.0
      %1492 = vmatmul.mubr.f32.gmra.mxu0 %v1392
      %v1493 = vpop.f32.mrf.mxu0
      %v1494 = vadd.f32 0.0, %v1493
      %v1495 = vpop.f32.mrf.mxu0
      %1496 = vmatprep.mubr.f32.mxu0 0.0
      %1497 = vmatmul.mubr.f32.gmra.mxu0 %v1395
      %v1498 = vpop.f32.mrf.mxu0
      %v1499 = vadd.f32 0.0, %v1498
      %v1500 = vpop.f32.mrf.mxu0
      %1501 = vdwg.mxu0
      %v1503 = vsel %vm455, %v1371, 0
      %1505 = vmatprep.subr.mxu0 0.0
      %1506 = vmatpush1.msra.mxu0 0.0
      %1507 = vmatprep.subr.mxu0 0.0
      %1508 = vmatpush1.msra.mxu0 0.0
      %1509 = vmatprep.subr.mxu0 0.0
      %1510 = vmatpush1.msra.mxu0 0.0
      %1511 = vmatprep.subr.mxu0 0.0
      %1512 = vmatpush1.msra.mxu0 0.0
      %1513 = vmatprep.subr.mxu0 0.0
      %1514 = vmatpush1.msra.mxu0 0.0
      %1515 = vmatprep.subr.mxu0 0.0
      %1516 = vmatpush1.msra.mxu0 0.0
      %1517 = vmatprep.subr.mxu0 0.0
      %1518 = vmatpush1.msra.mxu0 0.0
      %1519 = vmatprep.subr.mxu0 0.0
      %1520 = vmatpush1.msra.mxu0 0.0
      %1521 = vmatprep.subr.mxu0 0.0
      %1522 = vmatpush1.msra.mxu0 0.0
      %1523 = vmatprep.subr.mxu0 0.0
      %1524 = vmatpush1.msra.mxu0 0.0
      %1525 = vmatprep.subr.mxu0 0.0
      %1526 = vmatpush1.msra.mxu0 0.0
      %1527 = vmatprep.subr.mxu0 0.0
      %1528 = vmatpush1.msra.mxu0 0.0
      %1529 = vmatprep.subr.mxu0 0.0
      %1530 = vmatpush1.msra.mxu0 0.0
      %1531 = vmatprep.subr.mxu0 0.0
      %1532 = vmatpush1.msra.mxu0 0.0
      %1533 = vmatprep.subr.mxu0 0.0
      %1534 = vmatpush1.msra.mxu0 0.0
      %1535 = vmatprep.subr.mxu0 0.0
      %1536 = vmatpush1.msra.mxu0 %v1503
      %1537 = vmatprep.subr.mxu0 0.0
      %1538 = vmatpush2.msra.mxu0 0.0
      %1539 = vmatprep.subr.mxu0 0.0
      %1540 = vmatpush2.msra.mxu0 0.0
      %1541 = vmatprep.subr.mxu0 0.0
      %1542 = vmatpush2.msra.mxu0 0.0
      %1543 = vmatprep.subr.mxu0 0.0
      %1544 = vmatpush2.msra.mxu0 0.0
      %1545 = vmatprep.subr.mxu0 0.0
      %1546 = vmatpush2.msra.mxu0 0.0
      %1547 = vmatprep.subr.mxu0 0.0
      %1548 = vmatpush2.msra.mxu0 0.0
      %1549 = vmatprep.subr.mxu0 0.0
      %1550 = vmatpush2.msra.mxu0 0.0
      %1551 = vmatprep.subr.mxu0 0.0
      %1552 = vmatpush2.msra.mxu0 0.0
      %1553 = vmatprep.subr.mxu0 0.0
      %1554 = vmatpush2.msra.mxu0 0.0
      %1555 = vmatprep.subr.mxu0 0.0
      %1556 = vmatpush2.msra.mxu0 0.0
      %1557 = vmatprep.subr.mxu0 0.0
      %1558 = vmatpush2.msra.mxu0 0.0
      %1559 = vmatprep.subr.mxu0 0.0
      %1560 = vmatpush2.msra.mxu0 0.0
      %1561 = vmatprep.subr.mxu0 0.0
      %1562 = vmatpush2.msra.mxu0 0.0
      %1563 = vmatprep.subr.mxu0 0.0
      %1564 = vmatpush2.msra.mxu0 0.0
      %1565 = vmatprep.subr.mxu0 0.0
      %1566 = vmatpush2.msra.mxu0 0.0
      %1567 = vmatprep.subr.mxu0 0.0
      %1568 = vmatpush2.msra.mxu0 0.0
      %1569 = vmatprep.mubr.f32.mxu0 0.0
      %1570 = vmatmul.mubr.f32.gmra.mxu0 %v432
      %v1571 = vpop.f32.mrf.mxu0
      %v1572 = vadd.f32 %v1464, %v1571
      %v1573 = vpop.f32.mrf.mxu0
      %1574 = vmatprep.mubr.f32.mxu0 0.0
      %1575 = vmatmul.mubr.f32.gmra.mxu0 %v435
      %v1576 = vpop.f32.mrf.mxu0
      %v1577 = vadd.f32 %v1469, %v1576
      %v1578 = vpop.f32.mrf.mxu0
      %1579 = vmatprep.mubr.f32.mxu0 0.0
      %1580 = vmatmul.mubr.f32.gmra.mxu0 %v438
      %v1581 = vpop.f32.mrf.mxu0
      %v1582 = vadd.f32 %v1474, %v1581
      %v1583 = vpop.f32.mrf.mxu0
      %1584 = vmatprep.mubr.f32.mxu0 0.0
      %1585 = vmatmul.mubr.f32.gmra.mxu0 %v441
      %v1586 = vpop.f32.mrf.mxu0
      %v1587 = vadd.f32 %v1479, %v1586
      %v1588 = vpop.f32.mrf.mxu0
      %1589 = vmatprep.mubr.f32.mxu0 0.0
      %1590 = vmatmul.mubr.f32.gmra.mxu0 %v444
      %v1591 = vpop.f32.mrf.mxu0
      %v1592 = vadd.f32 %v1484, %v1591
      %v1593 = vpop.f32.mrf.mxu0
      %1594 = vmatprep.mubr.f32.mxu0 0.0
      %1595 = vmatmul.mubr.f32.gmra.mxu0 %v447
      %v1596 = vpop.f32.mrf.mxu0
      %v1597 = vadd.f32 %v1489, %v1596
      %v1598 = vpop.f32.mrf.mxu0
      %1599 = vmatprep.mubr.f32.mxu0 0.0
      %1600 = vmatmul.mubr.f32.gmra.mxu0 %v450
      %v1601 = vpop.f32.mrf.mxu0
      %v1602 = vadd.f32 %v1494, %v1601
      %v1603 = vpop.f32.mrf.mxu0
      %1604 = vmatprep.mubr.f32.mxu0 0.0
      %1605 = vmatmul.mubr.f32.gmra.mxu0 %v453
      %v1606 = vpop.f32.mrf.mxu0
      %v1607 = vadd.f32 %v1499, %v1606
      %v1608 = vpop.f32.mrf.mxu0
      %1609 = vdwg.mxu0
      %v1610 = vld [vmem:[%s11] sm:$0x1]
      %v1612 = vlaneseq
      %v1613 = vshrl.u32 %v1612, 7
      %v1614 = vsub.s32 0, %v1613
      %v1615 = vrot.slane %v1610, %v1614
      %v1617 = vadd.f32 %v1572, %v1615
      %v1618 = vadd.f32 %v1577, %v1615
      %v1619 = vadd.f32 %v1582, %v1615
      %v1620 = vadd.f32 %v1587, %v1615
      %v1621 = vadd.f32 %v1592, %v1615
      %v1622 = vadd.f32 %v1597, %v1615
      %v1623 = vadd.f32 %v1602, %v1615
      %v1624 = vadd.f32 %v1607, %v1615
      %1625 = vst.msk [vmem:[%s413] sm:$0xff] %vm580, %v1617
      %1626 = vst.msk [vmem:[%s413 + $0x8] sm:$0xff] %vm580, %v1618
      %1627 = vst.msk [vmem:[%s413 + $0x10] sm:$0xff] %vm580, %v1619
      %1628 = vst.msk [vmem:[%s413 + $0x18] sm:$0xff] %vm580, %v1620
      %1629 = vst.msk [vmem:[%s413 + $0x20] sm:$0xff] %vm580, %v1621
      %1630 = vst.msk [vmem:[%s413 + $0x28] sm:$0xff] %vm580, %v1622
      %1631 = vst.msk [vmem:[%s413 + $0x30] sm:$0xff] %vm580, %v1623
      %1632 = vst.msk [vmem:[%s413 + $0x38] sm:$0xff] %vm580, %v1624
      %p1633 = scmp.lt.s32.totalorder %s23, 1
      %s1634 = scalar_select %p1633, %s23, 1
      %s1635 = smul.addr %s1634, 8
      %s1636 = smul.addr %s1635, 8
      %s1637 = scalar_lea.vmem %s12, %s1636
      // Predicated region
      $region69: #{base_model_forward.2} parent=67 // pred_check
        %p1638 = pneg %p298
      $region70: #{base_model_forward.2} parent=67 // pred_check_branch
        %1640 = sbr.rel (%p1638) target = $region72
      $region71: #{base_model_forward.2} parent=67 // pred_region
        _
      $region72: #{base_model_forward.2} parent=67 // pred_fallthru
        _
    $region68: #{base_model_forward.2} parent=5 // pred_fallthru
      _
    %p1641 = scmp.le.s32.totalorder 2, %s18
    // Predicated region
    $region73: #{base_model_forward.2} parent=5 // pred_check
      %p1642 = pneg %p1641
    $region74: #{base_model_forward.2} parent=5 // pred_check_branch
      %1644 = sbr.rel (%p1642) target = $region76
    $region75: #{base_model_forward.2} parent=5 // pred_region
      %s1645 = ssub.s32 %s18, 2
      // Predicated region
      $region77: #{base_model_forward.2} parent=75 // pred_check
        %p1646 = pneg %p304
      $region78: #{base_model_forward.2} parent=75 // pred_check_branch
        %1648 = sbr.rel (%p1646) target = $region80
      $region79: #{base_model_forward.2} parent=75 // pred_region
        %p1649 = scmp.lt.s32.totalorder %s24, 1
        %s1650 = scalar_select %p1649, %s24, 1
        %s1651 = smul.addr %s1650, 8
        %s1652 = smul.addr %s1651, 8
        %s1653 = scalar_lea.vmem %s12, %s1652
      $region80: #{base_model_forward.2} parent=75 // pred_fallthru
        _
    $region76: #{base_model_forward.2} parent=5 // pred_fallthru
      _
  $region6: #{base_model_forward.2} parent=0 // loop_footer
    %s22 = sadd.s32 1, %s18
  $region7: #{base_model_forward.2} parent=0 // loop_footer_branch
    %17 = sbr.rel target = $region3
  $region8: #{base_model_forward.2} parent=0 // loop_exit
    _

// kernel: base_model_forward.3
$region0: #{base_model_forward.3}
  #allocation0 [shape = 'u32[]', space=smem, size = 0x4, offset = 0x4, fixed_abs, tag = 'smem constant byte address 0x4 - core index']
  #allocation1 [shape = 'u32[144,128]{1,0:T(1,128)}', space=vmem, size = 0x12000, scoped, tag = 'internal scratch']
  %s0 = inlined_call_operand.vmem [shape: f32[2,64,8], index: 0, kind: input, shape index: {}]
  %s1 = inlined_call_operand.vmem [shape: f32[8,8], index: 1, kind: input, shape index: {}]
  %s2 = inlined_call_operand.vmem [shape: f32[1,8], index: 2, kind: input, shape index: {}]
  %s3 = inlined_call_operand.vmem [shape: f32[8,8], index: 3, kind: input, shape index: {}]
  %s4 = inlined_call_operand.vmem [shape: f32[1,8], index: 4, kind: input, shape index: {}]
  %s5 = inlined_call_operand.vmem [shape: f32[8,8], index: 5, kind: input, shape index: {}]
  %s6 = inlined_call_operand.vmem [shape: f32[1,8], index: 6, kind: input, shape index: {}]
  %s7 = inlined_call_operand.vmem [shape: f32[8,8], index: 7, kind: input, shape index: {}]
  %s8 = inlined_call_operand.vmem [shape: f32[1,8], index: 8, kind: input, shape index: {}]
  %s9 = inlined_call_operand.vmem [shape: f32[8,8], index: 9, kind: input, shape index: {}]
  %s10 = inlined_call_operand.vmem [shape: f32[8,8], index: 10, kind: input, shape index: {}]
  %s11 = inlined_call_operand.vmem [shape: f32[1,8], index: 11, kind: input, shape index: {}]
  %s12 = inlined_call_operand.hbm [shape: f32[2,64,8], index: 12, kind: output, shape index: {}]
  %s13 = sld [smem:[#allocation0]]
  $region81: #{base_model_forward.3} parent=0
    _
  %s15 = ssub.s32 1, %s13
  %s16 = scalar_select 0, %s15, %s13
  $region1: #{base_model_forward.3} parent=0
    #allocation2 [shape = 'u8[65536]{0}', space=vmem, size = 0x10000, scoped, tag = 'output window, operand 0']
    #allocation3 [shape = 's32[2]{0}', space=sflag, size = 0x8, scoped, tag = 'scoped memory for base_model_forward.3']
    %17 = vsyncpa [#allocation3], 0
    %s18 = scalar_lea.sflag [#allocation3], 1
    %19 = vsyncpa %s18, 0
    loop: start=0, step=1, limit=4
    $region2: #{base_model_forward.3} parent=1 // loop_pre_header
      _
    $region3: #{base_model_forward.3} parent=1 // loop_header
      %s21 = sphi 0, %s25
      %p22 = scmp.ge.s32.totalorder %s21, 4
      %s31 = sphi 0, %s33
      %s34 = sphi 0, %s31
      %s35 = sphi 0, %s34
      %s51 = sphi 0, %s35
      %s55 = sphi 0, %s55
      %s57 = sphi 0, %s55
      %s58 = sphi 0, %s57
      %s72 = sphi 0, %s58
      %s76 = sphi 0, %s76
      %s78 = sphi 0, %s76
      %s79 = sphi 0, %s78
      %s93 = sphi 0, %s79
      %s97 = sphi 0, %s97
      %s99 = sphi 0, %s97
      %s100 = sphi 0, %s99
      %s114 = sphi 0, %s100
      %s118 = sphi 0, %s118
      %s120 = sphi 0, %s118
      %s121 = sphi 0, %s120
      %s135 = sphi 0, %s121
      %s139 = sphi 0, %s139
      %s141 = sphi 0, %s139
      %s142 = sphi 0, %s141
      %s156 = sphi 0, %s142
      %s160 = sphi 0, %s160
      %s162 = sphi 0, %s160
      %s163 = sphi 0, %s162
      %s177 = sphi 0, %s163
      %s181 = sphi 0, %s181
      %s183 = sphi 0, %s181
      %s184 = sphi 0, %s183
      %s198 = sphi 0, %s184
      %s202 = sphi 0, %s202
      %s204 = sphi 0, %s202
      %s205 = sphi 0, %s204
      %s219 = sphi 0, %s205
      %s223 = sphi 0, %s223
      %s225 = sphi 0, %s223
      %s226 = sphi 0, %s225
      %s240 = sphi 0, %s226
      %s244 = sphi 0, %s244
      %s246 = sphi 0, %s244
      %s247 = sphi 0, %s246
      %s261 = sphi 0, %s247
      %s265 = sphi 0, %s265
      %s267 = sphi 0, %s265
      %s268 = sphi 0, %s267
      %s282 = sphi 0, %s268
      %s288 = sphi 0, %s290
      %s291 = sphi 0, %s288
      %s292 = sphi 0, %s291
      %s308 = sphi 0, %s292
    $region4: #{base_model_forward.3} parent=1 // loop_header_branch
      %24 = sbr.rel (%p22) target = $region8
    $region5: #{base_model_forward.3} parent=1 // loop_body
      %s26 = ssub.s32 %s21, 1
      %s27 = ssub.s32 %s21, 2
      %s28 = sadd.s32 %s21, 1
      %s29 = ssub.s32 %s21, %s28
      %p30 = scmp.eq.s32.totalorder %s29, 0
      %s32 = sadd.s32 %s31, 1
      %s33 = scalar_select %p30, %s31, %s32
      %p36 = pneg %p30
      %p37 = scmp.eq.s32.totalorder %s21, 1
      %p38 = por %p36, %p37
      %p39 = scmp.ne.s32.totalorder %s31, %s34
      %p40 = scmp.eq.s32.totalorder %s21, 0
      %p41 = por %p39, %p40
      %p42 = scmp.ne.s32.totalorder %s31, %s34
      %p43 = scmp.eq.s32.totalorder %s26, 1
      %p44 = por %p42, %p43
      %p45 = scmp.ne.s32.totalorder %s34, %s35
      %p46 = scmp.eq.s32.totalorder %s26, 0
      %p47 = por %p45, %p46
      %p48 = scmp.ne.s32.totalorder %s34, %s35
      %p49 = scmp.eq.s32.totalorder %s27, 1
      %p50 = por %p48, %p49
      %p52 = scmp.ne.s32.totalorder %s35, %s51
      %p53 = scmp.eq.s32.totalorder %s27, 0
      %p54 = por %p52, %p53
      %s56 = sadd.s32 %s55, 1
      %p59 = scmp.eq.s32.totalorder %s21, 1
      %p60 = scmp.ne.s32.totalorder %s55, %s57
      %p61 = scmp.eq.s32.totalorder %s21, 0
      %p62 = por %p60, %p61
      %p63 = scmp.ne.s32.totalorder %s55, %s57
      %p64 = scmp.eq.s32.totalorder %s26, 1
      %p65 = por %p63, %p64
      %p66 = scmp.ne.s32.totalorder %s57, %s58
      %p67 = scmp.eq.s32.totalorder %s26, 0
      %p68 = por %p66, %p67
      %p69 = scmp.ne.s32.totalorder %s57, %s58
      %p70 = scmp.eq.s32.totalorder %s27, 1
      %p71 = por %p69, %p70
      %p73 = scmp.ne.s32.totalorder %s58, %s72
      %p74 = scmp.eq.s32.totalorder %s27, 0
      %p75 = por %p73, %p74
      %s77 = sadd.s32 %s76, 1
      %p80 = scmp.eq.s32.totalorder %s21, 1
      %p81 = scmp.ne.s32.totalorder %s76, %s78
      %p82 = scmp.eq.s32.totalorder %s21, 0
      %p83 = por %p81, %p82
      %p84 = scmp.ne.s32.totalorder %s76, %s78
      %p85 = scmp.eq.s32.totalorder %s26, 1
      %p86 = por %p84, %p85
      %p87 = scmp.ne.s32.totalorder %s78, %s79
      %p88 = scmp.eq.s32.totalorder %s26, 0
      %p89 = por %p87, %p88
      %p90 = scmp.ne.s32.totalorder %s78, %s79
      %p91 = scmp.eq.s32.totalorder %s27, 1
      %p92 = por %p90, %p91
      %p94 = scmp.ne.s32.totalorder %s79, %s93
      %p95 = scmp.eq.s32.totalorder %s27, 0
      %p96 = por %p94, %p95
      %s98 = sadd.s32 %s97, 1
      %p101 = scmp.eq.s32.totalorder %s21, 1
      %p102 = scmp.ne.s32.totalorder %s97, %s99
      %p103 = scmp.eq.s32.totalorder %s21, 0
      %p104 = por %p102, %p103
      %p105 = scmp.ne.s32.totalorder %s97, %s99
      %p106 = scmp.eq.s32.totalorder %s26, 1
      %p107 = por %p105, %p106
      %p108 = scmp.ne.s32.totalorder %s99, %s100
      %p109 = scmp.eq.s32.totalorder %s26, 0
      %p110 = por %p108, %p109
      %p111 = scmp.ne.s32.totalorder %s99, %s100
      %p112 = scmp.eq.s32.totalorder %s27, 1
      %p113 = por %p111, %p112
      %p115 = scmp.ne.s32.totalorder %s100, %s114
      %p116 = scmp.eq.s32.totalorder %s27, 0
      %p117 = por %p115, %p116
      %s119 = sadd.s32 %s118, 1
      %p122 = scmp.eq.s32.totalorder %s21, 1
      %p123 = scmp.ne.s32.totalorder %s118, %s120
      %p124 = scmp.eq.s32.totalorder %s21, 0
      %p125 = por %p123, %p124
      %p126 = scmp.ne.s32.totalorder %s118, %s120
      %p127 = scmp.eq.s32.totalorder %s26, 1
      %p128 = por %p126, %p127
      %p129 = scmp.ne.s32.totalorder %s120, %s121
      %p130 = scmp.eq.s32.totalorder %s26, 0
      %p131 = por %p129, %p130
      %p132 = scmp.ne.s32.totalorder %s120, %s121
      %p133 = scmp.eq.s32.totalorder %s27, 1
      %p134 = por %p132, %p133
      %p136 = scmp.ne.s32.totalorder %s121, %s135
      %p137 = scmp.eq.s32.totalorder %s27, 0
      %p138 = por %p136, %p137
      %s140 = sadd.s32 %s139, 1
      %p143 = scmp.eq.s32.totalorder %s21, 1
      %p144 = scmp.ne.s32.totalorder %s139, %s141
      %p145 = scmp.eq.s32.totalorder %s21, 0
      %p146 = por %p144, %p145
      %p147 = scmp.ne.s32.totalorder %s139, %s141
      %p148 = scmp.eq.s32.totalorder %s26, 1
      %p149 = por %p147, %p148
      %p150 = scmp.ne.s32.totalorder %s141, %s142
      %p151 = scmp.eq.s32.totalorder %s26, 0
      %p152 = por %p150, %p151
      %p153 = scmp.ne.s32.totalorder %s141, %s142
      %p154 = scmp.eq.s32.totalorder %s27, 1
      %p155 = por %p153, %p154
      %p157 = scmp.ne.s32.totalorder %s142, %s156
      %p158 = scmp.eq.s32.totalorder %s27, 0
      %p159 = por %p157, %p158
      %s161 = sadd.s32 %s160, 1
      %p164 = scmp.eq.s32.totalorder %s21, 1
      %p165 = scmp.ne.s32.totalorder %s160, %s162
      %p166 = scmp.eq.s32.totalorder %s21, 0
      %p167 = por %p165, %p166
      %p168 = scmp.ne.s32.totalorder %s160, %s162
      %p169 = scmp.eq.s32.totalorder %s26, 1
      %p170 = por %p168, %p169
      %p171 = scmp.ne.s32.totalorder %s162, %s163
      %p172 = scmp.eq.s32.totalorder %s26, 0
      %p173 = por %p171, %p172
      %p174 = scmp.ne.s32.totalorder %s162, %s163
      %p175 = scmp.eq.s32.totalorder %s27, 1
      %p176 = por %p174, %p175
      %p178 = scmp.ne.s32.totalorder %s163, %s177
      %p179 = scmp.eq.s32.totalorder %s27, 0
      %p180 = por %p178, %p179
      %s182 = sadd.s32 %s181, 1
      %p185 = scmp.eq.s32.totalorder %s21, 1
      %p186 = scmp.ne.s32.totalorder %s181, %s183
      %p187 = scmp.eq.s32.totalorder %s21, 0
      %p188 = por %p186, %p187
      %p189 = scmp.ne.s32.totalorder %s181, %s183
      %p190 = scmp.eq.s32.totalorder %s26, 1
      %p191 = por %p189, %p190
      %p192 = scmp.ne.s32.totalorder %s183, %s184
      %p193 = scmp.eq.s32.totalorder %s26, 0
      %p194 = por %p192, %p193
      %p195 = scmp.ne.s32.totalorder %s183, %s184
      %p196 = scmp.eq.s32.totalorder %s27, 1
      %p197 = por %p195, %p196
      %p199 = scmp.ne.s32.totalorder %s184, %s198
      %p200 = scmp.eq.s32.totalorder %s27, 0
      %p201 = por %p199, %p200
      %s203 = sadd.s32 %s202, 1
      %p206 = scmp.eq.s32.totalorder %s21, 1
      %p207 = scmp.ne.s32.totalorder %s202, %s204
      %p208 = scmp.eq.s32.totalorder %s21, 0
      %p209 = por %p207, %p208
      %p210 = scmp.ne.s32.totalorder %s202, %s204
      %p211 = scmp.eq.s32.totalorder %s26, 1
      %p212 = por %p210, %p211
      %p213 = scmp.ne.s32.totalorder %s204, %s205
      %p214 = scmp.eq.s32.totalorder %s26, 0
      %p215 = por %p213, %p214
      %p216 = scmp.ne.s32.totalorder %s204, %s205
      %p217 = scmp.eq.s32.totalorder %s27, 1
      %p218 = por %p216, %p217
      %p220 = scmp.ne.s32.totalorder %s205, %s219
      %p221 = scmp.eq.s32.totalorder %s27, 0
      %p222 = por %p220, %p221
      %s224 = sadd.s32 %s223, 1
      %p227 = scmp.eq.s32.totalorder %s21, 1
      %p228 = scmp.ne.s32.totalorder %s223, %s225
      %p229 = scmp.eq.s32.totalorder %s21, 0
      %p230 = por %p228, %p229
      %p231 = scmp.ne.s32.totalorder %s223, %s225
      %p232 = scmp.eq.s32.totalorder %s26, 1
      %p233 = por %p231, %p232
      %p234 = scmp.ne.s32.totalorder %s225, %s226
      %p235 = scmp.eq.s32.totalorder %s26, 0
      %p236 = por %p234, %p235
      %p237 = scmp.ne.s32.totalorder %s225, %s226
      %p238 = scmp.eq.s32.totalorder %s27, 1
      %p239 = por %p237, %p238
      %p241 = scmp.ne.s32.totalorder %s226, %s240
      %p242 = scmp.eq.s32.totalorder %s27, 0
      %p243 = por %p241, %p242
      %s245 = sadd.s32 %s244, 1
      %p248 = scmp.eq.s32.totalorder %s21, 1
      %p249 = scmp.ne.s32.totalorder %s244, %s246
      %p250 = scmp.eq.s32.totalorder %s21, 0
      %p251 = por %p249, %p250
      %p252 = scmp.ne.s32.totalorder %s244, %s246
      %p253 = scmp.eq.s32.totalorder %s26, 1
      %p254 = por %p252, %p253
      %p255 = scmp.ne.s32.totalorder %s246, %s247
      %p256 = scmp.eq.s32.totalorder %s26, 0
      %p257 = por %p255, %p256
      %p258 = scmp.ne.s32.totalorder %s246, %s247
      %p259 = scmp.eq.s32.totalorder %s27, 1
      %p260 = por %p258, %p259
      %p262 = scmp.ne.s32.totalorder %s247, %s261
      %p263 = scmp.eq.s32.totalorder %s27, 0
      %p264 = por %p262, %p263
      %s266 = sadd.s32 %s265, 1
      %p269 = scmp.eq.s32.totalorder %s21, 1
      %p270 = scmp.ne.s32.totalorder %s265, %s267
      %p271 = scmp.eq.s32.totalorder %s21, 0
      %p272 = por %p270, %p271
      %p273 = scmp.ne.s32.totalorder %s265, %s267
      %p274 = scmp.eq.s32.totalorder %s26, 1
      %p275 = por %p273, %p274
      %p276 = scmp.ne.s32.totalorder %s267, %s268
      %p277 = scmp.eq.s32.totalorder %s26, 0
      %p278 = por %p276, %p277
      %p279 = scmp.ne.s32.totalorder %s267, %s268
      %p280 = scmp.eq.s32.totalorder %s27, 1
      %p281 = por %p279, %p280
      %p283 = scmp.ne.s32.totalorder %s268, %s282
      %p284 = scmp.eq.s32.totalorder %s27, 0
      %p285 = por %p283, %p284
      %s286 = ssub.s32 %s21, %s28
      %p287 = scmp.eq.s32.totalorder %s286, 0
      %s289 = sadd.s32 %s288, 1
      %s290 = scalar_select %p287, %s288, %s289
      %p293 = pneg %p287
      %p294 = scmp.eq.s32.totalorder %s21, 1
      %p295 = por %p293, %p294
      %p296 = scmp.ne.s32.totalorder %s288, %s291
      %p297 = scmp.eq.s32.totalorder %s21, 0
      %p298 = por %p296, %p297
      %p299 = scmp.ne.s32.totalorder %s288, %s291
      %p300 = scmp.eq.s32.totalorder %s26, 1
      %p301 = por %p299, %p300
      %p302 = scmp.ne.s32.totalorder %s291, %s292
      %p303 = scmp.eq.s32.totalorder %s26, 0
      %p304 = por %p302, %p303
      %p305 = scmp.ne.s32.totalorder %s291, %s292
      %p306 = scmp.eq.s32.totalorder %s27, 1
      %p307 = por %p305, %p306
      %p309 = scmp.ne.s32.totalorder %s292, %s308
      %p310 = scmp.eq.s32.totalorder %s27, 0
      %p311 = por %p309, %p310
      %p312 = scmp.le.s32.totalorder 1, %s21
      %p313 = scmp.lt.s32.totalorder %s21, 3
      %p314 = pnand %p312, %p313
      %p315 = pneg %p314
      // Predicated region
      $region9: #{base_model_forward.3} parent=5 // pred_check
        _
      $region10: #{base_model_forward.3} parent=5 // pred_check_branch
        %317 = sbr.rel (%p314) target = $region12
      $region11: #{base_model_forward.3} parent=5 // pred_region
        %s318 = ssub.s32 %s21, 1
        // Predicated region
        $region13: #{base_model_forward.3} parent=11 // pred_check
          %p319 = pneg %p68
        $region14: #{base_model_forward.3} parent=11 // pred_check_branch
          %321 = sbr.rel (%p319) target = $region16
        $region15: #{base_model_forward.3} parent=11 // pred_region
          _
        $region16: #{base_model_forward.3} parent=11 // pred_fallthru
          _
        // Predicated region
        $region17: #{base_model_forward.3} parent=11 // pred_check
          %p322 = pneg %p89
        $region18: #{base_model_forward.3} parent=11 // pred_check_branch
          %324 = sbr.rel (%p322) target = $region20
        $region19: #{base_model_forward.3} parent=11 // pred_region
          _
        $region20: #{base_model_forward.3} parent=11 // pred_fallthru
          _
        // Predicated region
        $region21: #{base_model_forward.3} parent=11 // pred_check
          %p325 = pneg %p110
        $region22: #{base_model_forward.3} parent=11 // pred_check_branch
          %327 = sbr.rel (%p325) target = $region24
        $region23: #{base_model_forward.3} parent=11 // pred_region
          _
        $region24: #{base_model_forward.3} parent=11 // pred_fallthru
          _
        // Predicated region
        $region25: #{base_model_forward.3} parent=11 // pred_check
          %p328 = pneg %p131
        $region26: #{base_model_forward.3} parent=11 // pred_check_branch
          %330 = sbr.rel (%p328) target = $region28
        $region27: #{base_model_forward.3} parent=11 // pred_region
          _
        $region28: #{base_model_forward.3} parent=11 // pred_fallthru
          _
        // Predicated region
        $region29: #{base_model_forward.3} parent=11 // pred_check
          %p331 = pneg %p152
        $region30: #{base_model_forward.3} parent=11 // pred_check_branch
          %333 = sbr.rel (%p331) target = $region32
        $region31: #{base_model_forward.3} parent=11 // pred_region
          _
        $region32: #{base_model_forward.3} parent=11 // pred_fallthru
          _
        // Predicated region
        $region33: #{base_model_forward.3} parent=11 // pred_check
          %p334 = pneg %p173
        $region34: #{base_model_forward.3} parent=11 // pred_check_branch
          %336 = sbr.rel (%p334) target = $region36
        $region35: #{base_model_forward.3} parent=11 // pred_region
          _
        $region36: #{base_model_forward.3} parent=11 // pred_fallthru
          _
        // Predicated region
        $region37: #{base_model_forward.3} parent=11 // pred_check
          %p337 = pneg %p194
        $region38: #{base_model_forward.3} parent=11 // pred_check_branch
          %339 = sbr.rel (%p337) target = $region40
        $region39: #{base_model_forward.3} parent=11 // pred_region
          _
        $region40: #{base_model_forward.3} parent=11 // pred_fallthru
          _
        // Predicated region
        $region41: #{base_model_forward.3} parent=11 // pred_check
          %p340 = pneg %p215
        $region42: #{base_model_forward.3} parent=11 // pred_check_branch
          %342 = sbr.rel (%p340) target = $region44
        $region43: #{base_model_forward.3} parent=11 // pred_region
          _
        $region44: #{base_model_forward.3} parent=11 // pred_fallthru
          _
        // Predicated region
        $region45: #{base_model_forward.3} parent=11 // pred_check
          %p343 = pneg %p236
        $region46: #{base_model_forward.3} parent=11 // pred_check_branch
          %345 = sbr.rel (%p343) target = $region48
        $region47: #{base_model_forward.3} parent=11 // pred_region
          _
        $region48: #{base_model_forward.3} parent=11 // pred_fallthru
          _
        // Predicated region
        $region49: #{base_model_forward.3} parent=11 // pred_check
          %p346 = pneg %p257
        $region50: #{base_model_forward.3} parent=11 // pred_check_branch
          %348 = sbr.rel (%p346) target = $region52
        $region51: #{base_model_forward.3} parent=11 // pred_region
          _
        $region52: #{base_model_forward.3} parent=11 // pred_fallthru
          _
        // Predicated region
        $region53: #{base_model_forward.3} parent=11 // pred_check
          %p349 = pneg %p278
        $region54: #{base_model_forward.3} parent=11 // pred_check_branch
          %351 = sbr.rel (%p349) target = $region56
        $region55: #{base_model_forward.3} parent=11 // pred_region
          _
        $region56: #{base_model_forward.3} parent=11 // pred_fallthru
          _
      $region12: #{base_model_forward.3} parent=5 // pred_fallthru
        _
      %p352 = scmp.lt.s32.totalorder %s21, 2
      // Predicated region
      $region57: #{base_model_forward.3} parent=5 // pred_check
        %p353 = pneg %p352
      $region58: #{base_model_forward.3} parent=5 // pred_check_branch
        %355 = sbr.rel (%p353) target = $region60
      $region59: #{base_model_forward.3} parent=5 // pred_region
        // Predicated region
        $region61: #{base_model_forward.3} parent=59 // pred_check
          %p356 = pneg %p41
        $region62: #{base_model_forward.3} parent=59 // pred_check_branch
          %358 = sbr.rel (%p356) target = $region64
        $region63: #{base_model_forward.3} parent=59 // pred_region
          %p359 = scmp.lt.s32.totalorder %s21, 1
          %s360 = scalar_select %p359, %s21, 1
          %s361 = smul.addr %s360, 8
          %s362 = smul.addr %s361, 8
          %s363 = scalar_lea.vmem %s0, %s362
        $region64: #{base_model_forward.3} parent=59 // pred_fallthru
          _
      $region60: #{base_model_forward.3} parent=5 // pred_fallthru
        _
      %p364 = scmp.le.s32.totalorder 1, %s21
      %p365 = scmp.lt.s32.totalorder %s21, 3
      %p366 = pnand %p364, %p365
      %p367 = pneg %p366
      // Predicated region
      $region65: #{base_model_forward.3} parent=5 // pred_check
        _
      $region66: #{base_model_forward.3} parent=5 // pred_check_branch
        %369 = sbr.rel (%p366) target = $region68
      $region67: #{base_model_forward.3} parent=5 // pred_region
        %s370 = ssub.s32 %s21, 1
        %p371 = scmp.lt.s32.totalorder %s26, 1
        %s372 = scalar_select %p371, %s26, 1
        %s373 = smul.addr %s372, 8
        %s374 = smul.addr %s373, 8
        %s375 = scalar_lea.vmem %s0, %s374
        %p376 = pneg %p47
        %p377 = pneg %p44
        %p378 = pneg %p68
        %p379 = pneg %p65
        %p380 = pneg %p89
        %p381 = pneg %p86
        %p382 = pneg %p110
        %p383 = pneg %p107
        %p384 = pneg %p131
        %p385 = pneg %p128
        %p386 = pneg %p152
        %p387 = pneg %p149
        %p388 = pneg %p173
        %p389 = pneg %p170
        %p390 = pneg %p194
        %p391 = pneg %p191
        %p392 = pneg %p215
        %p393 = pneg %p212
        %p394 = pneg %p236
        %p395 = pneg %p233
        %p396 = pneg %p257
        %p397 = pneg %p254
        %p398 = pneg %p278
        %p399 = pneg %p275
        %p400 = pneg %p304
        %p401 = pneg %p301
        %s402 = sand.u32 %s291, 1
        %s403 = scalar_lea.sflag [#allocation3], %s402
        %s404 = sand.u32 %s291, 1
        %s405 = smul.addr %s404, 64
        %s406 = scalar_lea.vmem [#allocation2], %s405
        %p407 = scmp.lt.s32.totalorder %s26, 1
        %s408 = scalar_select %p407, %s26, 1
        %s409 = smul.addr %s408, 8
        %s410 = smul.addr %s409, 8
        %s411 = scalar_lea.vmem %s0, %s410
        %v412 = vld [vmem:[%s411] sm:$0xff]
        %v413 = vld [vmem:[%s411 + $0x8] sm:$0xff]
        %v414 = vld [vmem:[%s411 + $0x10] sm:$0xff]
        %v415 = vld [vmem:[%s411 + $0x18] sm:$0xff]
        %v416 = vld [vmem:[%s411 + $0x20] sm:$0xff]
        %v417 = vld [vmem:[%s411 + $0x28] sm:$0xff]
        %v418 = vld [vmem:[%s411 + $0x30] sm:$0xff]
        %v419 = vld [vmem:[%s411 + $0x38] sm:$0xff]
        %v420 = vld [vmem:[%s1] sm:$0xff]
        %v421 = vld [vmem:[%s2] sm:$0x1]
        %v423 = vlaneseq
        %v424 = vshrl.u32 %v423, 7
        %v425 = vsub.s32 0, %v424
        %v426 = vrot.slane %v421, %v425
        %vm428 = vcmask 64512
        %v430 = vsel %vm428, %v412, 0
        %v433 = vsel %vm428, %v413, 0
        %v436 = vsel %vm428, %v414, 0
        %v439 = vsel %vm428, %v415, 0
        %v442 = vsel %vm428, %v416, 0
        %v445 = vsel %vm428, %v417, 0
        %v448 = vsel %vm428, %v418, 0
        %v451 = vsel %vm428, %v419, 0
        %453 = vmatprep.subr.mxu0 0.0
        %454 = vmatpush1.msra.mxu0 0.0
        %455 = vmatprep.subr.mxu0 0.0
        %456 = vmatpush1.msra.mxu0 0.0
        %457 = vmatprep.subr.mxu0 0.0
        %458 = vmatpush1.msra.mxu0 0.0
        %459 = vmatprep.subr.mxu0 0.0
        %460 = vmatpush1.msra.mxu0 0.0
        %461 = vmatprep.subr.mxu0 0.0
        %462 = vmatpush1.msra.mxu0 0.0
        %463 = vmatprep.subr.mxu0 0.0
        %464 = vmatpush1.msra.mxu0 0.0
        %465 = vmatprep.subr.mxu0 0.0
        %466 = vmatpush1.msra.mxu0 0.0
        %467 = vmatprep.subr.mxu0 0.0
        %468 = vmatpush1.msra.mxu0 0.0
        %469 = vmatprep.subr.mxu0 0.0
        %470 = vmatpush1.msra.mxu0 0.0
        %471 = vmatprep.subr.mxu0 0.0
        %472 = vmatpush1.msra.mxu0 0.0
        %473 = vmatprep.subr.mxu0 0.0
        %474 = vmatpush1.msra.mxu0 0.0
        %475 = vmatprep.subr.mxu0 0.0
        %476 = vmatpush1.msra.mxu0 0.0
        %477 = vmatprep.subr.mxu0 0.0
        %478 = vmatpush1.msra.mxu0 0.0
        %479 = vmatprep.subr.mxu0 0.0
        %480 = vmatpush1.msra.mxu0 0.0
        %481 = vmatprep.subr.mxu0 0.0
        %482 = vmatpush1.msra.mxu0 0.0
        %483 = vmatprep.subr.mxu0 0.0
        %484 = vmatpush1.msra.mxu0 %v420
        %485 = vmatprep.subr.mxu0 0.0
        %486 = vmatpush2.msra.mxu0 0.0
        %487 = vmatprep.subr.mxu0 0.0
        %488 = vmatpush2.msra.mxu0 0.0
        %489 = vmatprep.subr.mxu0 0.0
        %490 = vmatpush2.msra.mxu0 0.0
        %491 = vmatprep.subr.mxu0 0.0
        %492 = vmatpush2.msra.mxu0 0.0
        %493 = vmatprep.subr.mxu0 0.0
        %494 = vmatpush2.msra.mxu0 0.0
        %495 = vmatprep.subr.mxu0 0.0
        %496 = vmatpush2.msra.mxu0 0.0
        %497 = vmatprep.subr.mxu0 0.0
        %498 = vmatpush2.msra.mxu0 0.0
        %499 = vmatprep.subr.mxu0 0.0
        %500 = vmatpush2.msra.mxu0 0.0
        %501 = vmatprep.subr.mxu0 0.0
        %502 = vmatpush2.msra.mxu0 0.0
        %503 = vmatprep.subr.mxu0 0.0
        %504 = vmatpush2.msra.mxu0 0.0
        %505 = vmatprep.subr.mxu0 0.0
        %506 = vmatpush2.msra.mxu0 0.0
        %507 = vmatprep.subr.mxu0 0.0
        %508 = vmatpush2.msra.mxu0 0.0
        %509 = vmatprep.subr.mxu0 0.0
        %510 = vmatpush2.msra.mxu0 0.0
        %511 = vmatprep.subr.mxu0 0.0
        %512 = vmatpush2.msra.mxu0 0.0
        %513 = vmatprep.subr.mxu0 0.0
        %514 = vmatpush2.msra.mxu0 0.0
        %515 = vmatprep.subr.mxu0 0.0
        %516 = vmatpush2.msra.mxu0 0.0
        %517 = vmatprep.mubr.f32.mxu0 0.0
        %518 = vmatmul.mubr.f32.gmra.mxu0 %v430
        %v519 = vpop.f32.mrf.mxu0
        %v520 = vadd.f32 %v426, %v519
        %v521 = vpop.f32.mrf.mxu0
        %522 = vmatprep.mubr.f32.mxu0 0.0
        %523 = vmatmul.mubr.f32.gmra.mxu0 %v433
        %v524 = vpop.f32.mrf.mxu0
        %v525 = vadd.f32 %v426, %v524
        %v526 = vpop.f32.mrf.mxu0
        %527 = vmatprep.mubr.f32.mxu0 0.0
        %528 = vmatmul.mubr.f32.gmra.mxu0 %v436
        %v529 = vpop.f32.mrf.mxu0
        %v530 = vadd.f32 %v426, %v529
        %v531 = vpop.f32.mrf.mxu0
        %532 = vmatprep.mubr.f32.mxu0 0.0
        %533 = vmatmul.mubr.f32.gmra.mxu0 %v439
        %v534 = vpop.f32.mrf.mxu0
        %v535 = vadd.f32 %v426, %v534
        %v536 = vpop.f32.mrf.mxu0
        %537 = vmatprep.mubr.f32.mxu0 0.0
        %538 = vmatmul.mubr.f32.gmra.mxu0 %v442
        %v539 = vpop.f32.mrf.mxu0
        %v540 = vadd.f32 %v426, %v539
        %v541 = vpop.f32.mrf.mxu0
        %542 = vmatprep.mubr.f32.mxu0 0.0
        %543 = vmatmul.mubr.f32.gmra.mxu0 %v445
        %v544 = vpop.f32.mrf.mxu0
        %v545 = vadd.f32 %v426, %v544
        %v546 = vpop.f32.mrf.mxu0
        %547 = vmatprep.mubr.f32.mxu0 0.0
        %548 = vmatmul.mubr.f32.gmra.mxu0 %v448
        %v549 = vpop.f32.mrf.mxu0
        %v550 = vadd.f32 %v426, %v549
        %v551 = vpop.f32.mrf.mxu0
        %552 = vmatprep.mubr.f32.mxu0 0.0
        %553 = vmatmul.mubr.f32.gmra.mxu0 %v451
        %v554 = vpop.f32.mrf.mxu0
        %v555 = vadd.f32 %v426, %v554
        %v556 = vpop.f32.mrf.mxu0
        %557 = vdwg.mxu0
        %v558 = vmax.f32 %v520, 0.0
        %v559 = vmax.f32 %v525, 0.0
        %v560 = vmax.f32 %v530, 0.0
        %v561 = vmax.f32 %v535, 0.0
        %v562 = vmax.f32 %v540, 0.0
        %v563 = vmax.f32 %v545, 0.0
        %v564 = vmax.f32 %v550, 0.0
        %v565 = vmax.f32 %v555, 0.0
        %v566 = vld [vmem:[%s3] sm:$0xff]
        %v567 = vld [vmem:[%s4] sm:$0x1]
        %v569 = vlaneseq
        %v570 = vshrl.u32 %v569, 7
        %v571 = vsub.s32 0, %v570
        %v572 = vrot.slane %v567, %v571
        %v575 = vsel %vm428, %v558, 0
        %v578 = vsel %vm428, %v559, 0
        %v581 = vsel %vm428, %v560, 0
        %v584 = vsel %vm428, %v561, 0
        %v587 = vsel %vm428, %v562, 0
        %v590 = vsel %vm428, %v563, 0
        %v593 = vsel %vm428, %v564, 0
        %v596 = vsel %vm428, %v565, 0
        %598 = vmatprep.subr.mxu0 0.0
        %599 = vmatpush1.msra.mxu0 0.0
        %600 = vmatprep.subr.mxu0 0.0
        %601 = vmatpush1.msra.mxu0 0.0
        %602 = vmatprep.subr.mxu0 0.0
        %603 = vmatpush1.msra.mxu0 0.0
        %604 = vmatprep.subr.mxu0 0.0
        %605 = vmatpush1.msra.mxu0 0.0
        %606 = vmatprep.subr.mxu0 0.0
        %607 = vmatpush1.msra.mxu0 0.0
        %608 = vmatprep.subr.mxu0 0.0
        %609 = vmatpush1.msra.mxu0 0.0
        %610 = vmatprep.subr.mxu0 0.0
        %611 = vmatpush1.msra.mxu0 0.0
        %612 = vmatprep.subr.mxu0 0.0
        %613 = vmatpush1.msra.mxu0 0.0
        %614 = vmatprep.subr.mxu0 0.0
        %615 = vmatpush1.msra.mxu0 0.0
        %616 = vmatprep.subr.mxu0 0.0
        %617 = vmatpush1.msra.mxu0 0.0
        %618 = vmatprep.subr.mxu0 0.0
        %619 = vmatpush1.msra.mxu0 0.0
        %620 = vmatprep.subr.mxu0 0.0
        %621 = vmatpush1.msra.mxu0 0.0
        %622 = vmatprep.subr.mxu0 0.0
        %623 = vmatpush1.msra.mxu0 0.0
        %624 = vmatprep.subr.mxu0 0.0
        %625 = vmatpush1.msra.mxu0 0.0
        %626 = vmatprep.subr.mxu0 0.0
        %627 = vmatpush1.msra.mxu0 0.0
        %628 = vmatprep.subr.mxu0 0.0
        %629 = vmatpush1.msra.mxu0 %v566
        %630 = vmatprep.subr.mxu0 0.0
        %631 = vmatpush2.msra.mxu0 0.0
        %632 = vmatprep.subr.mxu0 0.0
        %633 = vmatpush2.msra.mxu0 0.0
        %634 = vmatprep.subr.mxu0 0.0
        %635 = vmatpush2.msra.mxu0 0.0
        %636 = vmatprep.subr.mxu0 0.0
        %637 = vmatpush2.msra.mxu0 0.0
        %638 = vmatprep.subr.mxu0 0.0
        %639 = vmatpush2.msra.mxu0 0.0
        %640 = vmatprep.subr.mxu0 0.0
        %641 = vmatpush2.msra.mxu0 0.0
        %642 = vmatprep.subr.mxu0 0.0
        %643 = vmatpush2.msra.mxu0 0.0
        %644 = vmatprep.subr.mxu0 0.0
        %645 = vmatpush2.msra.mxu0 0.0
        %646 = vmatprep.subr.mxu0 0.0
        %647 = vmatpush2.msra.mxu0 0.0
        %648 = vmatprep.subr.mxu0 0.0
        %649 = vmatpush2.msra.mxu0 0.0
        %650 = vmatprep.subr.mxu0 0.0
        %651 = vmatpush2.msra.mxu0 0.0
        %652 = vmatprep.subr.mxu0 0.0
        %653 = vmatpush2.msra.mxu0 0.0
        %654 = vmatprep.subr.mxu0 0.0
        %655 = vmatpush2.msra.mxu0 0.0
        %656 = vmatprep.subr.mxu0 0.0
        %657 = vmatpush2.msra.mxu0 0.0
        %658 = vmatprep.subr.mxu0 0.0
        %659 = vmatpush2.msra.mxu0 0.0
        %660 = vmatprep.subr.mxu0 0.0
        %661 = vmatpush2.msra.mxu0 0.0
        %662 = vmatprep.mubr.f32.mxu0 0.0
        %663 = vmatmul.mubr.f32.gmra.mxu0 %v575
        %v664 = vpop.f32.mrf.mxu0
        %v665 = vadd.f32 %v572, %v664
        %v666 = vpop.f32.mrf.mxu0
        %667 = vmatprep.mubr.f32.mxu0 0.0
        %668 = vmatmul.mubr.f32.gmra.mxu0 %v578
        %v669 = vpop.f32.mrf.mxu0
        %v670 = vadd.f32 %v572, %v669
        %v671 = vpop.f32.mrf.mxu0
        %672 = vmatprep.mubr.f32.mxu0 0.0
        %673 = vmatmul.mubr.f32.gmra.mxu0 %v581
        %v674 = vpop.f32.mrf.mxu0
        %v675 = vadd.f32 %v572, %v674
        %v676 = vpop.f32.mrf.mxu0
        %677 = vmatprep.mubr.f32.mxu0 0.0
        %678 = vmatmul.mubr.f32.gmra.mxu0 %v584
        %v679 = vpop.f32.mrf.mxu0
        %v680 = vadd.f32 %v572, %v679
        %v681 = vpop.f32.mrf.mxu0
        %682 = vmatprep.mubr.f32.mxu0 0.0
        %683 = vmatmul.mubr.f32.gmra.mxu0 %v587
        %v684 = vpop.f32.mrf.mxu0
        %v685 = vadd.f32 %v572, %v684
        %v686 = vpop.f32.mrf.mxu0
        %687 = vmatprep.mubr.f32.mxu0 0.0
        %688 = vmatmul.mubr.f32.gmra.mxu0 %v590
        %v689 = vpop.f32.mrf.mxu0
        %v690 = vadd.f32 %v572, %v689
        %v691 = vpop.f32.mrf.mxu0
        %692 = vmatprep.mubr.f32.mxu0 0.0
        %693 = vmatmul.mubr.f32.gmra.mxu0 %v593
        %v694 = vpop.f32.mrf.mxu0
        %v695 = vadd.f32 %v572, %v694
        %v696 = vpop.f32.mrf.mxu0
        %697 = vmatprep.mubr.f32.mxu0 0.0
        %698 = vmatmul.mubr.f32.gmra.mxu0 %v596
        %v699 = vpop.f32.mrf.mxu0
        %v700 = vadd.f32 %v572, %v699
        %v701 = vpop.f32.mrf.mxu0
        %702 = vdwg.mxu0
        %v703 = vmax.f32 %v665, 0.0
        %v704 = vmax.f32 %v670, 0.0
        %v705 = vmax.f32 %v675, 0.0
        %v706 = vmax.f32 %v680, 0.0
        %v707 = vmax.f32 %v685, 0.0
        %v708 = vmax.f32 %v690, 0.0
        %v709 = vmax.f32 %v695, 0.0
        %v710 = vmax.f32 %v700, 0.0
        %v711 = vld [vmem:[%s5] sm:$0xff]
        %v712 = vld [vmem:[%s6] sm:$0x1]
        %v714 = vlaneseq
        %v715 = vshrl.u32 %v714, 7
        %v716 = vsub.s32 0, %v715
        %v717 = vrot.slane %v712, %v716
        %719 = vmatprep.subr.mxu0 0.0
        %720 = vmatpush1.msra.mxu0 0.0
        %721 = vmatprep.subr.mxu0 0.0
        %722 = vmatpush1.msra.mxu0 0.0
        %723 = vmatprep.subr.mxu0 0.0
        %724 = vmatpush1.msra.mxu0 0.0
        %725 = vmatprep.subr.mxu0 0.0
        %726 = vmatpush1.msra.mxu0 0.0
        %727 = vmatprep.subr.mxu0 0.0
        %728 = vmatpush1.msra.mxu0 0.0
        %729 = vmatprep.subr.mxu0 0.0
        %730 = vmatpush1.msra.mxu0 0.0
        %731 = vmatprep.subr.mxu0 0.0
        %732 = vmatpush1.msra.mxu0 0.0
        %733 = vmatprep.subr.mxu0 0.0
        %734 = vmatpush1.msra.mxu0 0.0
        %735 = vmatprep.subr.mxu0 0.0
        %736 = vmatpush1.msra.mxu0 0.0
        %737 = vmatprep.subr.mxu0 0.0
        %738 = vmatpush1.msra.mxu0 0.0
        %739 = vmatprep.subr.mxu0 0.0
        %740 = vmatpush1.msra.mxu0 0.0
        %741 = vmatprep.subr.mxu0 0.0
        %742 = vmatpush1.msra.mxu0 0.0
        %743 = vmatprep.subr.mxu0 0.0
        %744 = vmatpush1.msra.mxu0 0.0
        %745 = vmatprep.subr.mxu0 0.0
        %746 = vmatpush1.msra.mxu0 0.0
        %747 = vmatprep.subr.mxu0 0.0
        %748 = vmatpush1.msra.mxu0 0.0
        %749 = vmatprep.subr.mxu0 0.0
        %750 = vmatpush1.msra.mxu0 %v711
        %751 = vmatprep.subr.mxu0 0.0
        %752 = vmatpush2.msra.mxu0 0.0
        %753 = vmatprep.subr.mxu0 0.0
        %754 = vmatpush2.msra.mxu0 0.0
        %755 = vmatprep.subr.mxu0 0.0
        %756 = vmatpush2.msra.mxu0 0.0
        %757 = vmatprep.subr.mxu0 0.0
        %758 = vmatpush2.msra.mxu0 0.0
        %759 = vmatprep.subr.mxu0 0.0
        %760 = vmatpush2.msra.mxu0 0.0
        %761 = vmatprep.subr.mxu0 0.0
        %762 = vmatpush2.msra.mxu0 0.0
        %763 = vmatprep.subr.mxu0 0.0
        %764 = vmatpush2.msra.mxu0 0.0
        %765 = vmatprep.subr.mxu0 0.0
        %766 = vmatpush2.msra.mxu0 0.0
        %767 = vmatprep.subr.mxu0 0.0
        %768 = vmatpush2.msra.mxu0 0.0
        %769 = vmatprep.subr.mxu0 0.0
        %770 = vmatpush2.msra.mxu0 0.0
        %771 = vmatprep.subr.mxu0 0.0
        %772 = vmatpush2.msra.mxu0 0.0
        %773 = vmatprep.subr.mxu0 0.0
        %774 = vmatpush2.msra.mxu0 0.0
        %775 = vmatprep.subr.mxu0 0.0
        %776 = vmatpush2.msra.mxu0 0.0
        %777 = vmatprep.subr.mxu0 0.0
        %778 = vmatpush2.msra.mxu0 0.0
        %779 = vmatprep.subr.mxu0 0.0
        %780 = vmatpush2.msra.mxu0 0.0
        %781 = vmatprep.subr.mxu0 0.0
        %782 = vmatpush2.msra.mxu0 0.0
        %783 = vmatprep.mubr.f32.mxu0 0.0
        %784 = vmatmul.mubr.f32.gmra.mxu0 %v430
        %v785 = vpop.f32.mrf.mxu0
        %v786 = vadd.f32 %v717, %v785
        %v787 = vpop.f32.mrf.mxu0
        %788 = vmatprep.mubr.f32.mxu0 0.0
        %789 = vmatmul.mubr.f32.gmra.mxu0 %v433
        %v790 = vpop.f32.mrf.mxu0
        %v791 = vadd.f32 %v717, %v790
        %v792 = vpop.f32.mrf.mxu0
        %793 = vmatprep.mubr.f32.mxu0 0.0
        %794 = vmatmul.mubr.f32.gmra.mxu0 %v436
        %v795 = vpop.f32.mrf.mxu0
        %v796 = vadd.f32 %v717, %v795
        %v797 = vpop.f32.mrf.mxu0
        %798 = vmatprep.mubr.f32.mxu0 0.0
        %799 = vmatmul.mubr.f32.gmra.mxu0 %v439
        %v800 = vpop.f32.mrf.mxu0
        %v801 = vadd.f32 %v717, %v800
        %v802 = vpop.f32.mrf.mxu0
        %803 = vmatprep.mubr.f32.mxu0 0.0
        %804 = vmatmul.mubr.f32.gmra.mxu0 %v442
        %v805 = vpop.f32.mrf.mxu0
        %v806 = vadd.f32 %v717, %v805
        %v807 = vpop.f32.mrf.mxu0
        %808 = vmatprep.mubr.f32.mxu0 0.0
        %809 = vmatmul.mubr.f32.gmra.mxu0 %v445
        %v810 = vpop.f32.mrf.mxu0
        %v811 = vadd.f32 %v717, %v810
        %v812 = vpop.f32.mrf.mxu0
        %813 = vmatprep.mubr.f32.mxu0 0.0
        %814 = vmatmul.mubr.f32.gmra.mxu0 %v448
        %v815 = vpop.f32.mrf.mxu0
        %v816 = vadd.f32 %v717, %v815
        %v817 = vpop.f32.mrf.mxu0
        %818 = vmatprep.mubr.f32.mxu0 0.0
        %819 = vmatmul.mubr.f32.gmra.mxu0 %v451
        %v820 = vpop.f32.mrf.mxu0
        %v821 = vadd.f32 %v717, %v820
        %v822 = vpop.f32.mrf.mxu0
        %823 = vdwg.mxu0
        %v824 = vmax.f32 %v786, 0.0
        %v825 = vmax.f32 %v791, 0.0
        %v826 = vmax.f32 %v796, 0.0
        %v827 = vmax.f32 %v801, 0.0
        %v828 = vmax.f32 %v806, 0.0
        %v829 = vmax.f32 %v811, 0.0
        %v830 = vmax.f32 %v816, 0.0
        %v831 = vmax.f32 %v821, 0.0
        %v832 = vld [vmem:[%s7] sm:$0xff]
        %v833 = vld [vmem:[%s8] sm:$0x1]
        %v835 = vlaneseq
        %v836 = vshrl.u32 %v835, 7
        %v837 = vsub.s32 0, %v836
        %v838 = vrot.slane %v833, %v837
        %v841 = vsel %vm428, %v824, 0
        %v844 = vsel %vm428, %v825, 0
        %v847 = vsel %vm428, %v826, 0
        %v850 = vsel %vm428, %v827, 0
        %v853 = vsel %vm428, %v828, 0
        %v856 = vsel %vm428, %v829, 0
        %v859 = vsel %vm428, %v830, 0
        %v862 = vsel %vm428, %v831, 0
        %864 = vmatprep.subr.mxu0 0.0
        %865 = vmatpush1.msra.mxu0 0.0
        %866 = vmatprep.subr.mxu0 0.0
        %867 = vmatpush1.msra.mxu0 0.0
        %868 = vmatprep.subr.mxu0 0.0
        %869 = vmatpush1.msra.mxu0 0.0
        %870 = vmatprep.subr.mxu0 0.0
        %871 = vmatpush1.msra.mxu0 0.0
        %872 = vmatprep.subr.mxu0 0.0
        %873 = vmatpush1.msra.mxu0 0.0
        %874 = vmatprep.subr.mxu0 0.0
        %875 = vmatpush1.msra.mxu0 0.0
        %876 = vmatprep.subr.mxu0 0.0
        %877 = vmatpush1.msra.mxu0 0.0
        %878 = vmatprep.subr.mxu0 0.0
        %879 = vmatpush1.msra.mxu0 0.0
        %880 = vmatprep.subr.mxu0 0.0
        %881 = vmatpush1.msra.mxu0 0.0
        %882 = vmatprep.subr.mxu0 0.0
        %883 = vmatpush1.msra.mxu0 0.0
        %884 = vmatprep.subr.mxu0 0.0
        %885 = vmatpush1.msra.mxu0 0.0
        %886 = vmatprep.subr.mxu0 0.0
        %887 = vmatpush1.msra.mxu0 0.0
        %888 = vmatprep.subr.mxu0 0.0
        %889 = vmatpush1.msra.mxu0 0.0
        %890 = vmatprep.subr.mxu0 0.0
        %891 = vmatpush1.msra.mxu0 0.0
        %892 = vmatprep.subr.mxu0 0.0
        %893 = vmatpush1.msra.mxu0 0.0
        %894 = vmatprep.subr.mxu0 0.0
        %895 = vmatpush1.msra.mxu0 %v832
        %896 = vmatprep.subr.mxu0 0.0
        %897 = vmatpush2.msra.mxu0 0.0
        %898 = vmatprep.subr.mxu0 0.0
        %899 = vmatpush2.msra.mxu0 0.0
        %900 = vmatprep.subr.mxu0 0.0
        %901 = vmatpush2.msra.mxu0 0.0
        %902 = vmatprep.subr.mxu0 0.0
        %903 = vmatpush2.msra.mxu0 0.0
        %904 = vmatprep.subr.mxu0 0.0
        %905 = vmatpush2.msra.mxu0 0.0
        %906 = vmatprep.subr.mxu0 0.0
        %907 = vmatpush2.msra.mxu0 0.0
        %908 = vmatprep.subr.mxu0 0.0
        %909 = vmatpush2.msra.mxu0 0.0
        %910 = vmatprep.subr.mxu0 0.0
        %911 = vmatpush2.msra.mxu0 0.0
        %912 = vmatprep.subr.mxu0 0.0
        %913 = vmatpush2.msra.mxu0 0.0
        %914 = vmatprep.subr.mxu0 0.0
        %915 = vmatpush2.msra.mxu0 0.0
        %916 = vmatprep.subr.mxu0 0.0
        %917 = vmatpush2.msra.mxu0 0.0
        %918 = vmatprep.subr.mxu0 0.0
        %919 = vmatpush2.msra.mxu0 0.0
        %920 = vmatprep.subr.mxu0 0.0
        %921 = vmatpush2.msra.mxu0 0.0
        %922 = vmatprep.subr.mxu0 0.0
        %923 = vmatpush2.msra.mxu0 0.0
        %924 = vmatprep.subr.mxu0 0.0
        %925 = vmatpush2.msra.mxu0 0.0
        %926 = vmatprep.subr.mxu0 0.0
        %927 = vmatpush2.msra.mxu0 0.0
        %928 = vmatprep.mubr.f32.mxu0 0.0
        %929 = vmatmul.mubr.f32.gmra.mxu0 %v841
        %v930 = vpop.f32.mrf.mxu0
        %v931 = vadd.f32 %v838, %v930
        %v932 = vpop.f32.mrf.mxu0
        %933 = vmatprep.mubr.f32.mxu0 0.0
        %934 = vmatmul.mubr.f32.gmra.mxu0 %v844
        %v935 = vpop.f32.mrf.mxu0
        %v936 = vadd.f32 %v838, %v935
        %v937 = vpop.f32.mrf.mxu0
        %938 = vmatprep.mubr.f32.mxu0 0.0
        %939 = vmatmul.mubr.f32.gmra.mxu0 %v847
        %v940 = vpop.f32.mrf.mxu0
        %v941 = vadd.f32 %v838, %v940
        %v942 = vpop.f32.mrf.mxu0
        %943 = vmatprep.mubr.f32.mxu0 0.0
        %944 = vmatmul.mubr.f32.gmra.mxu0 %v850
        %v945 = vpop.f32.mrf.mxu0
        %v946 = vadd.f32 %v838, %v945
        %v947 = vpop.f32.mrf.mxu0
        %948 = vmatprep.mubr.f32.mxu0 0.0
        %949 = vmatmul.mubr.f32.gmra.mxu0 %v853
        %v950 = vpop.f32.mrf.mxu0
        %v951 = vadd.f32 %v838, %v950
        %v952 = vpop.f32.mrf.mxu0
        %953 = vmatprep.mubr.f32.mxu0 0.0
        %954 = vmatmul.mubr.f32.gmra.mxu0 %v856
        %v955 = vpop.f32.mrf.mxu0
        %v956 = vadd.f32 %v838, %v955
        %v957 = vpop.f32.mrf.mxu0
        %958 = vmatprep.mubr.f32.mxu0 0.0
        %959 = vmatmul.mubr.f32.gmra.mxu0 %v859
        %v960 = vpop.f32.mrf.mxu0
        %v961 = vadd.f32 %v838, %v960
        %v962 = vpop.f32.mrf.mxu0
        %963 = vmatprep.mubr.f32.mxu0 0.0
        %964 = vmatmul.mubr.f32.gmra.mxu0 %v862
        %v965 = vpop.f32.mrf.mxu0
        %v966 = vadd.f32 %v838, %v965
        %v967 = vpop.f32.mrf.mxu0
        %968 = vdwg.mxu0
        %v969 = vmax.f32 %v931, 0.0
        %v970 = vmax.f32 %v936, 0.0
        %v971 = vmax.f32 %v941, 0.0
        %v972 = vmax.f32 %v946, 0.0
        %v973 = vmax.f32 %v951, 0.0
        %v974 = vmax.f32 %v956, 0.0
        %v975 = vmax.f32 %v961, 0.0
        %v976 = vmax.f32 %v966, 0.0
        %v977 = vlaneseq
        %v978 = vshrl.u32 %v977, 7
        %v979 = vsub.s32 0, %v978
        %v980 = vrot.slane %v703, %v979
        %v981 = vlaneseq
        %v982 = vshrl.u32 %v981, 7
        %v983 = vsub.s32 0, %v982
        %v984 = vrot.slane %v704, %v983
        %v985 = vlaneseq
        %v986 = vshrl.u32 %v985, 7
        %v987 = vsub.s32 0, %v986
        %v988 = vrot.slane %v705, %v987
        %v989 = vlaneseq
        %v990 = vshrl.u32 %v989, 7
        %v991 = vsub.s32 0, %v990
        %v992 = vrot.slane %v706, %v991
        %v993 = vlaneseq
        %v994 = vshrl.u32 %v993, 7
        %v995 = vsub.s32 0, %v994
        %v996 = vrot.slane %v707, %v995
        %v997 = vlaneseq
        %v998 = vshrl.u32 %v997, 7
        %v999 = vsub.s32 0, %v998
        %v1000 = vrot.slane %v708, %v999
        %v1001 = vlaneseq
        %v1002 = vshrl.u32 %v1001, 7
        %v1003 = vsub.s32 0, %v1002
        %v1004 = vrot.slane %v709, %v1003
        %v1005 = vlaneseq
        %v1006 = vshrl.u32 %v1005, 7
        %v1007 = vsub.s32 0, %v1006
        %v1008 = vrot.slane %v710, %v1007
        %v1009 = vmul.f32 %v980, %v969
        %v1010 = vmul.f32 %v984, %v969
        %v1011 = vmul.f32 %v988, %v969
        %v1012 = vmul.f32 %v992, %v969
        %v1013 = vmul.f32 %v996, %v969
        %v1014 = vmul.f32 %v1000, %v969
        %v1015 = vmul.f32 %v1004, %v969
        %v1016 = vmul.f32 %v1008, %v969
        %v1017 = vadd.f32 %v1009, 0.0
        %v1018 = vadd.f32 %v1010, 0.0
        %v1019 = vadd.f32 %v1011, 0.0
        %v1020 = vadd.f32 %v1012, 0.0
        %v1021 = vadd.f32 %v1013, 0.0
        %v1022 = vadd.f32 %v1014, 0.0
        %v1023 = vadd.f32 %v1015, 0.0
        %v1024 = vadd.f32 %v1016, 0.0
        %v1025 = vlaneseq
        %v1026 = vshrl.u32 %v1025, 7
        %v1027 = vsub.s32 1, %v1026
        %v1028 = vrot.slane %v703, %v1027
        %v1029 = vlaneseq
        %v1030 = vshrl.u32 %v1029, 7
        %v1031 = vsub.s32 1, %v1030
        %v1032 = vrot.slane %v704, %v1031
        %v1033 = vlaneseq
        %v1034 = vshrl.u32 %v1033, 7
        %v1035 = vsub.s32 1, %v1034
        %v1036 = vrot.slane %v705, %v1035
        %v1037 = vlaneseq
        %v1038 = vshrl.u32 %v1037, 7
        %v1039 = vsub.s32 1, %v1038
        %v1040 = vrot.slane %v706, %v1039
        %v1041 = vlaneseq
        %v1042 = vshrl.u32 %v1041, 7
        %v1043 = vsub.s32 1, %v1042
        %v1044 = vrot.slane %v707, %v1043
        %v1045 = vlaneseq
        %v1046 = vshrl.u32 %v1045, 7
        %v1047 = vsub.s32 1, %v1046
        %v1048 = vrot.slane %v708, %v1047
        %v1049 = vlaneseq
        %v1050 = vshrl.u32 %v1049, 7
        %v1051 = vsub.s32 1, %v1050
        %v1052 = vrot.slane %v709, %v1051
        %v1053 = vlaneseq
        %v1054 = vshrl.u32 %v1053, 7
        %v1055 = vsub.s32 1, %v1054
        %v1056 = vrot.slane %v710, %v1055
        %v1057 = vmul.f32 %v1028, %v970
        %v1058 = vmul.f32 %v1032, %v970
        %v1059 = vmul.f32 %v1036, %v970
        %v1060 = vmul.f32 %v1040, %v970
        %v1061 = vmul.f32 %v1044, %v970
        %v1062 = vmul.f32 %v1048, %v970
        %v1063 = vmul.f32 %v1052, %v970
        %v1064 = vmul.f32 %v1056, %v970
        %v1065 = vadd.f32 %v1017, %v1057
        %v1066 = vadd.f32 %v1018, %v1058
        %v1067 = vadd.f32 %v1019, %v1059
        %v1068 = vadd.f32 %v1020, %v1060
        %v1069 = vadd.f32 %v1021, %v1061
        %v1070 = vadd.f32 %v1022, %v1062
        %v1071 = vadd.f32 %v1023, %v1063
        %v1072 = vadd.f32 %v1024, %v1064
        %v1073 = vlaneseq
        %v1074 = vshrl.u32 %v1073, 7
        %v1075 = vsub.s32 2, %v1074
        %v1076 = vrot.slane %v703, %v1075
        %v1077 = vlaneseq
        %v1078 = vshrl.u32 %v1077, 7
        %v1079 = vsub.s32 2, %v1078
        %v1080 = vrot.slane %v704, %v1079
        %v1081 = vlaneseq
        %v1082 = vshrl.u32 %v1081, 7
        %v1083 = vsub.s32 2, %v1082
        %v1084 = vrot.slane %v705, %v1083
        %v1085 = vlaneseq
        %v1086 = vshrl.u32 %v1085, 7
        %v1087 = vsub.s32 2, %v1086
        %v1088 = vrot.slane %v706, %v1087
        %v1089 = vlaneseq
        %v1090 = vshrl.u32 %v1089, 7
        %v1091 = vsub.s32 2, %v1090
        %v1092 = vrot.slane %v707, %v1091
        %v1093 = vlaneseq
        %v1094 = vshrl.u32 %v1093, 7
        %v1095 = vsub.s32 2, %v1094
        %v1096 = vrot.slane %v708, %v1095
        %v1097 = vlaneseq
        %v1098 = vshrl.u32 %v1097, 7
        %v1099 = vsub.s32 2, %v1098
        %v1100 = vrot.slane %v709, %v1099
        %v1101 = vlaneseq
        %v1102 = vshrl.u32 %v1101, 7
        %v1103 = vsub.s32 2, %v1102
        %v1104 = vrot.slane %v710, %v1103
        %v1105 = vmul.f32 %v1076, %v971
        %v1106 = vmul.f32 %v1080, %v971
        %v1107 = vmul.f32 %v1084, %v971
        %v1108 = vmul.f32 %v1088, %v971
        %v1109 = vmul.f32 %v1092, %v971
        %v1110 = vmul.f32 %v1096, %v971
        %v1111 = vmul.f32 %v1100, %v971
        %v1112 = vmul.f32 %v1104, %v971
        %v1113 = vadd.f32 %v1065, %v1105
        %v1114 = vadd.f32 %v1066, %v1106
        %v1115 = vadd.f32 %v1067, %v1107
        %v1116 = vadd.f32 %v1068, %v1108
        %v1117 = vadd.f32 %v1069, %v1109
        %v1118 = vadd.f32 %v1070, %v1110
        %v1119 = vadd.f32 %v1071, %v1111
        %v1120 = vadd.f32 %v1072, %v1112
        %v1121 = vlaneseq
        %v1122 = vshrl.u32 %v1121, 7
        %v1123 = vsub.s32 3, %v1122
        %v1124 = vrot.slane %v703, %v1123
        %v1125 = vlaneseq
        %v1126 = vshrl.u32 %v1125, 7
        %v1127 = vsub.s32 3, %v1126
        %v1128 = vrot.slane %v704, %v1127
        %v1129 = vlaneseq
        %v1130 = vshrl.u32 %v1129, 7
        %v1131 = vsub.s32 3, %v1130
        %v1132 = vrot.slane %v705, %v1131
        %v1133 = vlaneseq
        %v1134 = vshrl.u32 %v1133, 7
        %v1135 = vsub.s32 3, %v1134
        %v1136 = vrot.slane %v706, %v1135
        %v1137 = vlaneseq
        %v1138 = vshrl.u32 %v1137, 7
        %v1139 = vsub.s32 3, %v1138
        %v1140 = vrot.slane %v707, %v1139
        %v1141 = vlaneseq
        %v1142 = vshrl.u32 %v1141, 7
        %v1143 = vsub.s32 3, %v1142
        %v1144 = vrot.slane %v708, %v1143
        %v1145 = vlaneseq
        %v1146 = vshrl.u32 %v1145, 7
        %v1147 = vsub.s32 3, %v1146
        %v1148 = vrot.slane %v709, %v1147
        %v1149 = vlaneseq
        %v1150 = vshrl.u32 %v1149, 7
        %v1151 = vsub.s32 3, %v1150
        %v1152 = vrot.slane %v710, %v1151
        %v1153 = vmul.f32 %v1124, %v972
        %v1154 = vmul.f32 %v1128, %v972
        %v1155 = vmul.f32 %v1132, %v972
        %v1156 = vmul.f32 %v1136, %v972
        %v1157 = vmul.f32 %v1140, %v972
        %v1158 = vmul.f32 %v1144, %v972
        %v1159 = vmul.f32 %v1148, %v972
        %v1160 = vmul.f32 %v1152, %v972
        %v1161 = vadd.f32 %v1113, %v1153
        %v1162 = vadd.f32 %v1114, %v1154
        %v1163 = vadd.f32 %v1115, %v1155
        %v1164 = vadd.f32 %v1116, %v1156
        %v1165 = vadd.f32 %v1117, %v1157
        %v1166 = vadd.f32 %v1118, %v1158
        %v1167 = vadd.f32 %v1119, %v1159
        %v1168 = vadd.f32 %v1120, %v1160
        %v1169 = vlaneseq
        %v1170 = vshrl.u32 %v1169, 7
        %v1171 = vsub.s32 4, %v1170
        %v1172 = vrot.slane %v703, %v1171
        %v1173 = vlaneseq
        %v1174 = vshrl.u32 %v1173, 7
        %v1175 = vsub.s32 4, %v1174
        %v1176 = vrot.slane %v704, %v1175
        %v1177 = vlaneseq
        %v1178 = vshrl.u32 %v1177, 7
        %v1179 = vsub.s32 4, %v1178
        %v1180 = vrot.slane %v705, %v1179
        %v1181 = vlaneseq
        %v1182 = vshrl.u32 %v1181, 7
        %v1183 = vsub.s32 4, %v1182
        %v1184 = vrot.slane %v706, %v1183
        %v1185 = vlaneseq
        %v1186 = vshrl.u32 %v1185, 7
        %v1187 = vsub.s32 4, %v1186
        %v1188 = vrot.slane %v707, %v1187
        %v1189 = vlaneseq
        %v1190 = vshrl.u32 %v1189, 7
        %v1191 = vsub.s32 4, %v1190
        %v1192 = vrot.slane %v708, %v1191
        %v1193 = vlaneseq
        %v1194 = vshrl.u32 %v1193, 7
        %v1195 = vsub.s32 4, %v1194
        %v1196 = vrot.slane %v709, %v1195
        %v1197 = vlaneseq
        %v1198 = vshrl.u32 %v1197, 7
        %v1199 = vsub.s32 4, %v1198
        %v1200 = vrot.slane %v710, %v1199
        %v1201 = vmul.f32 %v1172, %v973
        %v1202 = vmul.f32 %v1176, %v973
        %v1203 = vmul.f32 %v1180, %v973
        %v1204 = vmul.f32 %v1184, %v973
        %v1205 = vmul.f32 %v1188, %v973
        %v1206 = vmul.f32 %v1192, %v973
        %v1207 = vmul.f32 %v1196, %v973
        %v1208 = vmul.f32 %v1200, %v973
        %v1209 = vadd.f32 %v1161, %v1201
        %v1210 = vadd.f32 %v1162, %v1202
        %v1211 = vadd.f32 %v1163, %v1203
        %v1212 = vadd.f32 %v1164, %v1204
        %v1213 = vadd.f32 %v1165, %v1205
        %v1214 = vadd.f32 %v1166, %v1206
        %v1215 = vadd.f32 %v1167, %v1207
        %v1216 = vadd.f32 %v1168, %v1208
        %v1217 = vlaneseq
        %v1218 = vshrl.u32 %v1217, 7
        %v1219 = vsub.s32 5, %v1218
        %v1220 = vrot.slane %v703, %v1219
        %v1221 = vlaneseq
        %v1222 = vshrl.u32 %v1221, 7
        %v1223 = vsub.s32 5, %v1222
        %v1224 = vrot.slane %v704, %v1223
        %v1225 = vlaneseq
        %v1226 = vshrl.u32 %v1225, 7
        %v1227 = vsub.s32 5, %v1226
        %v1228 = vrot.slane %v705, %v1227
        %v1229 = vlaneseq
        %v1230 = vshrl.u32 %v1229, 7
        %v1231 = vsub.s32 5, %v1230
        %v1232 = vrot.slane %v706, %v1231
        %v1233 = vlaneseq
        %v1234 = vshrl.u32 %v1233, 7
        %v1235 = vsub.s32 5, %v1234
        %v1236 = vrot.slane %v707, %v1235
        %v1237 = vlaneseq
        %v1238 = vshrl.u32 %v1237, 7
        %v1239 = vsub.s32 5, %v1238
        %v1240 = vrot.slane %v708, %v1239
        %v1241 = vlaneseq
        %v1242 = vshrl.u32 %v1241, 7
        %v1243 = vsub.s32 5, %v1242
        %v1244 = vrot.slane %v709, %v1243
        %v1245 = vlaneseq
        %v1246 = vshrl.u32 %v1245, 7
        %v1247 = vsub.s32 5, %v1246
        %v1248 = vrot.slane %v710, %v1247
        %v1249 = vmul.f32 %v1220, %v974
        %v1250 = vmul.f32 %v1224, %v974
        %v1251 = vmul.f32 %v1228, %v974
        %v1252 = vmul.f32 %v1232, %v974
        %v1253 = vmul.f32 %v1236, %v974
        %v1254 = vmul.f32 %v1240, %v974
        %v1255 = vmul.f32 %v1244, %v974
        %v1256 = vmul.f32 %v1248, %v974
        %v1257 = vadd.f32 %v1209, %v1249
        %v1258 = vadd.f32 %v1210, %v1250
        %v1259 = vadd.f32 %v1211, %v1251
        %v1260 = vadd.f32 %v1212, %v1252
        %v1261 = vadd.f32 %v1213, %v1253
        %v1262 = vadd.f32 %v1214, %v1254
        %v1263 = vadd.f32 %v1215, %v1255
        %v1264 = vadd.f32 %v1216, %v1256
        %v1265 = vlaneseq
        %v1266 = vshrl.u32 %v1265, 7
        %v1267 = vsub.s32 6, %v1266
        %v1268 = vrot.slane %v703, %v1267
        %v1269 = vlaneseq
        %v1270 = vshrl.u32 %v1269, 7
        %v1271 = vsub.s32 6, %v1270
        %v1272 = vrot.slane %v704, %v1271
        %v1273 = vlaneseq
        %v1274 = vshrl.u32 %v1273, 7
        %v1275 = vsub.s32 6, %v1274
        %v1276 = vrot.slane %v705, %v1275
        %v1277 = vlaneseq
        %v1278 = vshrl.u32 %v1277, 7
        %v1279 = vsub.s32 6, %v1278
        %v1280 = vrot.slane %v706, %v1279
        %v1281 = vlaneseq
        %v1282 = vshrl.u32 %v1281, 7
        %v1283 = vsub.s32 6, %v1282
        %v1284 = vrot.slane %v707, %v1283
        %v1285 = vlaneseq
        %v1286 = vshrl.u32 %v1285, 7
        %v1287 = vsub.s32 6, %v1286
        %v1288 = vrot.slane %v708, %v1287
        %v1289 = vlaneseq
        %v1290 = vshrl.u32 %v1289, 7
        %v1291 = vsub.s32 6, %v1290
        %v1292 = vrot.slane %v709, %v1291
        %v1293 = vlaneseq
        %v1294 = vshrl.u32 %v1293, 7
        %v1295 = vsub.s32 6, %v1294
        %v1296 = vrot.slane %v710, %v1295
        %v1297 = vmul.f32 %v1268, %v975
        %v1298 = vmul.f32 %v1272, %v975
        %v1299 = vmul.f32 %v1276, %v975
        %v1300 = vmul.f32 %v1280, %v975
        %v1301 = vmul.f32 %v1284, %v975
        %v1302 = vmul.f32 %v1288, %v975
        %v1303 = vmul.f32 %v1292, %v975
        %v1304 = vmul.f32 %v1296, %v975
        %v1305 = vadd.f32 %v1257, %v1297
        %v1306 = vadd.f32 %v1258, %v1298
        %v1307 = vadd.f32 %v1259, %v1299
        %v1308 = vadd.f32 %v1260, %v1300
        %v1309 = vadd.f32 %v1261, %v1301
        %v1310 = vadd.f32 %v1262, %v1302
        %v1311 = vadd.f32 %v1263, %v1303
        %v1312 = vadd.f32 %v1264, %v1304
        %v1313 = vlaneseq
        %v1314 = vshrl.u32 %v1313, 7
        %v1315 = vsub.s32 7, %v1314
        %v1316 = vrot.slane %v703, %v1315
        %v1317 = vlaneseq
        %v1318 = vshrl.u32 %v1317, 7
        %v1319 = vsub.s32 7, %v1318
        %v1320 = vrot.slane %v704, %v1319
        %v1321 = vlaneseq
        %v1322 = vshrl.u32 %v1321, 7
        %v1323 = vsub.s32 7, %v1322
        %v1324 = vrot.slane %v705, %v1323
        %v1325 = vlaneseq
        %v1326 = vshrl.u32 %v1325, 7
        %v1327 = vsub.s32 7, %v1326
        %v1328 = vrot.slane %v706, %v1327
        %v1329 = vlaneseq
        %v1330 = vshrl.u32 %v1329, 7
        %v1331 = vsub.s32 7, %v1330
        %v1332 = vrot.slane %v707, %v1331
        %v1333 = vlaneseq
        %v1334 = vshrl.u32 %v1333, 7
        %v1335 = vsub.s32 7, %v1334
        %v1336 = vrot.slane %v708, %v1335
        %v1337 = vlaneseq
        %v1338 = vshrl.u32 %v1337, 7
        %v1339 = vsub.s32 7, %v1338
        %v1340 = vrot.slane %v709, %v1339
        %v1341 = vlaneseq
        %v1342 = vshrl.u32 %v1341, 7
        %v1343 = vsub.s32 7, %v1342
        %v1344 = vrot.slane %v710, %v1343
        %v1345 = vmul.f32 %v1316, %v976
        %v1346 = vmul.f32 %v1320, %v976
        %v1347 = vmul.f32 %v1324, %v976
        %v1348 = vmul.f32 %v1328, %v976
        %v1349 = vmul.f32 %v1332, %v976
        %v1350 = vmul.f32 %v1336, %v976
        %v1351 = vmul.f32 %v1340, %v976
        %v1352 = vmul.f32 %v1344, %v976
        %v1353 = vadd.f32 %v1305, %v1345
        %v1354 = vadd.f32 %v1306, %v1346
        %v1355 = vadd.f32 %v1307, %v1347
        %v1356 = vadd.f32 %v1308, %v1348
        %v1357 = vadd.f32 %v1309, %v1349
        %v1358 = vadd.f32 %v1310, %v1350
        %v1359 = vadd.f32 %v1311, %v1351
        %v1360 = vadd.f32 %v1312, %v1352
        %v1361 = vld [vmem:[%s9] sm:$0xff]
        %v1362 = vld [vmem:[%s10] sm:$0xff]
        %v1364 = vsel %vm428, %v1353, 0
        %v1367 = vsel %vm428, %v1354, 0
        %v1370 = vsel %vm428, %v1355, 0
        %v1373 = vsel %vm428, %v1356, 0
        %v1376 = vsel %vm428, %v1357, 0
        %v1379 = vsel %vm428, %v1358, 0
        %v1382 = vsel %vm428, %v1359, 0
        %v1385 = vsel %vm428, %v1360, 0
        %1387 = vmatprep.subr.mxu0 0.0
        %1388 = vmatpush1.msra.mxu0 0.0
        %1389 = vmatprep.subr.mxu0 0.0
        %1390 = vmatpush1.msra.mxu0 0.0
        %1391 = vmatprep.subr.mxu0 0.0
        %1392 = vmatpush1.msra.mxu0 0.0
        %1393 = vmatprep.subr.mxu0 0.0
        %1394 = vmatpush1.msra.mxu0 0.0
        %1395 = vmatprep.subr.mxu0 0.0
        %1396 = vmatpush1.msra.mxu0 0.0
        %1397 = vmatprep.subr.mxu0 0.0
        %1398 = vmatpush1.msra.mxu0 0.0
        %1399 = vmatprep.subr.mxu0 0.0
        %1400 = vmatpush1.msra.mxu0 0.0
        %1401 = vmatprep.subr.mxu0 0.0
        %1402 = vmatpush1.msra.mxu0 0.0
        %1403 = vmatprep.subr.mxu0 0.0
        %1404 = vmatpush1.msra.mxu0 0.0
        %1405 = vmatprep.subr.mxu0 0.0
        %1406 = vmatpush1.msra.mxu0 0.0
        %1407 = vmatprep.subr.mxu0 0.0
        %1408 = vmatpush1.msra.mxu0 0.0
        %1409 = vmatprep.subr.mxu0 0.0
        %1410 = vmatpush1.msra.mxu0 0.0
        %1411 = vmatprep.subr.mxu0 0.0
        %1412 = vmatpush1.msra.mxu0 0.0
        %1413 = vmatprep.subr.mxu0 0.0
        %1414 = vmatpush1.msra.mxu0 0.0
        %1415 = vmatprep.subr.mxu0 0.0
        %1416 = vmatpush1.msra.mxu0 0.0
        %1417 = vmatprep.subr.mxu0 0.0
        %1418 = vmatpush1.msra.mxu0 %v1362
        %1419 = vmatprep.subr.mxu0 0.0
        %1420 = vmatpush2.msra.mxu0 0.0
        %1421 = vmatprep.subr.mxu0 0.0
        %1422 = vmatpush2.msra.mxu0 0.0
        %1423 = vmatprep.subr.mxu0 0.0
        %1424 = vmatpush2.msra.mxu0 0.0
        %1425 = vmatprep.subr.mxu0 0.0
        %1426 = vmatpush2.msra.mxu0 0.0
        %1427 = vmatprep.subr.mxu0 0.0
        %1428 = vmatpush2.msra.mxu0 0.0
        %1429 = vmatprep.subr.mxu0 0.0
        %1430 = vmatpush2.msra.mxu0 0.0
        %1431 = vmatprep.subr.mxu0 0.0
        %1432 = vmatpush2.msra.mxu0 0.0
        %1433 = vmatprep.subr.mxu0 0.0
        %1434 = vmatpush2.msra.mxu0 0.0
        %1435 = vmatprep.subr.mxu0 0.0
        %1436 = vmatpush2.msra.mxu0 0.0
        %1437 = vmatprep.subr.mxu0 0.0
        %1438 = vmatpush2.msra.mxu0 0.0
        %1439 = vmatprep.subr.mxu0 0.0
        %1440 = vmatpush2.msra.mxu0 0.0
        %1441 = vmatprep.subr.mxu0 0.0
        %1442 = vmatpush2.msra.mxu0 0.0
        %1443 = vmatprep.subr.mxu0 0.0
        %1444 = vmatpush2.msra.mxu0 0.0
        %1445 = vmatprep.subr.mxu0 0.0
        %1446 = vmatpush2.msra.mxu0 0.0
        %1447 = vmatprep.subr.mxu0 0.0
        %1448 = vmatpush2.msra.mxu0 0.0
        %1449 = vmatprep.subr.mxu0 0.0
        %1450 = vmatpush2.msra.mxu0 0.0
        %1451 = vmatprep.mubr.f32.mxu0 0.0
        %1452 = vmatmul.mubr.f32.gmra.mxu0 %v1364
        %v1453 = vpop.f32.mrf.mxu0
        %v1454 = vadd.f32 0.0, %v1453
        %v1455 = vpop.f32.mrf.mxu0
        %1456 = vmatprep.mubr.f32.mxu0 0.0
        %1457 = vmatmul.mubr.f32.gmra.mxu0 %v1367
        %v1458 = vpop.f32.mrf.mxu0
        %v1459 = vadd.f32 0.0, %v1458
        %v1460 = vpop.f32.mrf.mxu0
        %1461 = vmatprep.mubr.f32.mxu0 0.0
        %1462 = vmatmul.mubr.f32.gmra.mxu0 %v1370
        %v1463 = vpop.f32.mrf.mxu0
        %v1464 = vadd.f32 0.0, %v1463
        %v1465 = vpop.f32.mrf.mxu0
        %1466 = vmatprep.mubr.f32.mxu0 0.0
        %1467 = vmatmul.mubr.f32.gmra.mxu0 %v1373
        %v1468 = vpop.f32.mrf.mxu0
        %v1469 = vadd.f32 0.0, %v1468
        %v1470 = vpop.f32.mrf.mxu0
        %1471 = vmatprep.mubr.f32.mxu0 0.0
        %1472 = vmatmul.mubr.f32.gmra.mxu0 %v1376
        %v1473 = vpop.f32.mrf.mxu0
        %v1474 = vadd.f32 0.0, %v1473
        %v1475 = vpop.f32.mrf.mxu0
        %1476 = vmatprep.mubr.f32.mxu0 0.0
        %1477 = vmatmul.mubr.f32.gmra.mxu0 %v1379
        %v1478 = vpop.f32.mrf.mxu0
        %v1479 = vadd.f32 0.0, %v1478
        %v1480 = vpop.f32.mrf.mxu0
        %1481 = vmatprep.mubr.f32.mxu0 0.0
        %1482 = vmatmul.mubr.f32.gmra.mxu0 %v1382
        %v1483 = vpop.f32.mrf.mxu0
        %v1484 = vadd.f32 0.0, %v1483
        %v1485 = vpop.f32.mrf.mxu0
        %1486 = vmatprep.mubr.f32.mxu0 0.0
        %1487 = vmatmul.mubr.f32.gmra.mxu0 %v1385
        %v1488 = vpop.f32.mrf.mxu0
        %v1489 = vadd.f32 0.0, %v1488
        %v1490 = vpop.f32.mrf.mxu0
        %1491 = vdwg.mxu0
        %1492 = vmatprep.subr.mxu0 0.0
        %1493 = vmatpush1.msra.mxu0 0.0
        %1494 = vmatprep.subr.mxu0 0.0
        %1495 = vmatpush1.msra.mxu0 0.0
        %1496 = vmatprep.subr.mxu0 0.0
        %1497 = vmatpush1.msra.mxu0 0.0
        %1498 = vmatprep.subr.mxu0 0.0
        %1499 = vmatpush1.msra.mxu0 0.0
        %1500 = vmatprep.subr.mxu0 0.0
        %1501 = vmatpush1.msra.mxu0 0.0
        %1502 = vmatprep.subr.mxu0 0.0
        %1503 = vmatpush1.msra.mxu0 0.0
        %1504 = vmatprep.subr.mxu0 0.0
        %1505 = vmatpush1.msra.mxu0 0.0
        %1506 = vmatprep.subr.mxu0 0.0
        %1507 = vmatpush1.msra.mxu0 0.0
        %1508 = vmatprep.subr.mxu0 0.0
        %1509 = vmatpush1.msra.mxu0 0.0
        %1510 = vmatprep.subr.mxu0 0.0
        %1511 = vmatpush1.msra.mxu0 0.0
        %1512 = vmatprep.subr.mxu0 0.0
        %1513 = vmatpush1.msra.mxu0 0.0
        %1514 = vmatprep.subr.mxu0 0.0
        %1515 = vmatpush1.msra.mxu0 0.0
        %1516 = vmatprep.subr.mxu0 0.0
        %1517 = vmatpush1.msra.mxu0 0.0
        %1518 = vmatprep.subr.mxu0 0.0
        %1519 = vmatpush1.msra.mxu0 0.0
        %1520 = vmatprep.subr.mxu0 0.0
        %1521 = vmatpush1.msra.mxu0 0.0
        %1522 = vmatprep.subr.mxu0 0.0
        %1523 = vmatpush1.msra.mxu0 %v1361
        %1524 = vmatprep.subr.mxu0 0.0
        %1525 = vmatpush2.msra.mxu0 0.0
        %1526 = vmatprep.subr.mxu0 0.0
        %1527 = vmatpush2.msra.mxu0 0.0
        %1528 = vmatprep.subr.mxu0 0.0
        %1529 = vmatpush2.msra.mxu0 0.0
        %1530 = vmatprep.subr.mxu0 0.0
        %1531 = vmatpush2.msra.mxu0 0.0
        %1532 = vmatprep.subr.mxu0 0.0
        %1533 = vmatpush2.msra.mxu0 0.0
        %1534 = vmatprep.subr.mxu0 0.0
        %1535 = vmatpush2.msra.mxu0 0.0
        %1536 = vmatprep.subr.mxu0 0.0
        %1537 = vmatpush2.msra.mxu0 0.0
        %1538 = vmatprep.subr.mxu0 0.0
        %1539 = vmatpush2.msra.mxu0 0.0
        %1540 = vmatprep.subr.mxu0 0.0
        %1541 = vmatpush2.msra.mxu0 0.0
        %1542 = vmatprep.subr.mxu0 0.0
        %1543 = vmatpush2.msra.mxu0 0.0
        %1544 = vmatprep.subr.mxu0 0.0
        %1545 = vmatpush2.msra.mxu0 0.0
        %1546 = vmatprep.subr.mxu0 0.0
        %1547 = vmatpush2.msra.mxu0 0.0
        %1548 = vmatprep.subr.mxu0 0.0
        %1549 = vmatpush2.msra.mxu0 0.0
        %1550 = vmatprep.subr.mxu0 0.0
        %1551 = vmatpush2.msra.mxu0 0.0
        %1552 = vmatprep.subr.mxu0 0.0
        %1553 = vmatpush2.msra.mxu0 0.0
        %1554 = vmatprep.subr.mxu0 0.0
        %1555 = vmatpush2.msra.mxu0 0.0
        %1556 = vmatprep.mubr.f32.mxu0 0.0
        %1557 = vmatmul.mubr.f32.gmra.mxu0 %v430
        %v1558 = vpop.f32.mrf.mxu0
        %v1559 = vadd.f32 %v1454, %v1558
        %v1560 = vpop.f32.mrf.mxu0
        %1561 = vmatprep.mubr.f32.mxu0 0.0
        %1562 = vmatmul.mubr.f32.gmra.mxu0 %v433
        %v1563 = vpop.f32.mrf.mxu0
        %v1564 = vadd.f32 %v1459, %v1563
        %v1565 = vpop.f32.mrf.mxu0
        %1566 = vmatprep.mubr.f32.mxu0 0.0
        %1567 = vmatmul.mubr.f32.gmra.mxu0 %v436
        %v1568 = vpop.f32.mrf.mxu0
        %v1569 = vadd.f32 %v1464, %v1568
        %v1570 = vpop.f32.mrf.mxu0
        %1571 = vmatprep.mubr.f32.mxu0 0.0
        %1572 = vmatmul.mubr.f32.gmra.mxu0 %v439
        %v1573 = vpop.f32.mrf.mxu0
        %v1574 = vadd.f32 %v1469, %v1573
        %v1575 = vpop.f32.mrf.mxu0
        %1576 = vmatprep.mubr.f32.mxu0 0.0
        %1577 = vmatmul.mubr.f32.gmra.mxu0 %v442
        %v1578 = vpop.f32.mrf.mxu0
        %v1579 = vadd.f32 %v1474, %v1578
        %v1580 = vpop.f32.mrf.mxu0
        %1581 = vmatprep.mubr.f32.mxu0 0.0
        %1582 = vmatmul.mubr.f32.gmra.mxu0 %v445
        %v1583 = vpop.f32.mrf.mxu0
        %v1584 = vadd.f32 %v1479, %v1583
        %v1585 = vpop.f32.mrf.mxu0
        %1586 = vmatprep.mubr.f32.mxu0 0.0
        %1587 = vmatmul.mubr.f32.gmra.mxu0 %v448
        %v1588 = vpop.f32.mrf.mxu0
        %v1589 = vadd.f32 %v1484, %v1588
        %v1590 = vpop.f32.mrf.mxu0
        %1591 = vmatprep.mubr.f32.mxu0 0.0
        %1592 = vmatmul.mubr.f32.gmra.mxu0 %v451
        %v1593 = vpop.f32.mrf.mxu0
        %v1594 = vadd.f32 %v1489, %v1593
        %v1595 = vpop.f32.mrf.mxu0
        %1596 = vdwg.mxu0
        %v1597 = vld [vmem:[%s11] sm:$0x1]
        %v1599 = vlaneseq
        %v1600 = vshrl.u32 %v1599, 7
        %v1601 = vsub.s32 0, %v1600
        %v1602 = vrot.slane %v1597, %v1601
        %v1604 = vadd.f32 %v1559, %v1602
        %v1605 = vadd.f32 %v1564, %v1602
        %v1606 = vadd.f32 %v1569, %v1602
        %v1607 = vadd.f32 %v1574, %v1602
        %v1608 = vadd.f32 %v1579, %v1602
        %v1609 = vadd.f32 %v1584, %v1602
        %v1610 = vadd.f32 %v1589, %v1602
        %v1611 = vadd.f32 %v1594, %v1602
        %1612 = vst.msk [vmem:[%s406] sm:$0xff] %vm428, %v1604
        %1613 = vst.msk [vmem:[%s406 + $0x8] sm:$0xff] %vm428, %v1605
        %1614 = vst.msk [vmem:[%s406 + $0x10] sm:$0xff] %vm428, %v1606
        %1615 = vst.msk [vmem:[%s406 + $0x18] sm:$0xff] %vm428, %v1607
        %1616 = vst.msk [vmem:[%s406 + $0x20] sm:$0xff] %vm428, %v1608
        %1617 = vst.msk [vmem:[%s406 + $0x28] sm:$0xff] %vm428, %v1609
        %1618 = vst.msk [vmem:[%s406 + $0x30] sm:$0xff] %vm428, %v1610
        %1619 = vst.msk [vmem:[%s406 + $0x38] sm:$0xff] %vm428, %v1611
        %s1620 = sand.u32 %s291, 1
        %s1621 = scalar_lea.sflag [#allocation3], %s1620
        %s1622 = sand.u32 %s291, 1
        %s1623 = smul.addr %s1622, 64
        %s1624 = scalar_lea.vmem [#allocation2], %s1623
        // Predicated region
        $region69: #{base_model_forward.3} parent=67 // pred_check
          %p1625 = pneg %p301
        $region70: #{base_model_forward.3} parent=67 // pred_check_branch
          %1627 = sbr.rel (%p1625) target = $region72
        $region71: #{base_model_forward.3} parent=67 // pred_region
          %s1629 = ssub.s32 1024, 1024
          %1630 = vsyncadd %s1621, %s1629
          %s1631 = smul.addr %s26, 8
          %s1632 = smul.addr %s1631, 128
          %s1633 = scalar_lea.hbm %s12, %s1632
          %s1634 = sshll.u32 %s1624, 4
          %s1635 = int_to_ptr.vmem [resolvable:$true] %s1634
          %1640 = dma.vmem_to_hbm [thread:$0]  %s1635, 1024, %s1633, %s1621, 128, 128, 8
        $region72: #{base_model_forward.3} parent=67 // pred_fallthru
          _
      $region68: #{base_model_forward.3} parent=5 // pred_fallthru
        _
      %p1641 = scmp.le.s32.totalorder 2, %s21
      // Predicated region
      $region73: #{base_model_forward.3} parent=5 // pred_check
        %p1642 = pneg %p1641
      $region74: #{base_model_forward.3} parent=5 // pred_check_branch
        %1644 = sbr.rel (%p1642) target = $region76
      $region75: #{base_model_forward.3} parent=5 // pred_region
        %s1645 = ssub.s32 %s21, 2
        // Predicated region
        $region77: #{base_model_forward.3} parent=75 // pred_check
          %p1646 = pneg %p307
        $region78: #{base_model_forward.3} parent=75 // pred_check_branch
          %1648 = sbr.rel (%p1646) target = $region80
        $region79: #{base_model_forward.3} parent=75 // pred_region
          %s1649 = sand.u32 %s292, 1
          %s1650 = scalar_lea.sflag [#allocation3], %s1649
          %s1651 = sand.u32 %s292, 1
          %s1652 = smul.addr %s1651, 64
          %s1653 = scalar_lea.vmem [#allocation2], %s1652
          %1654 = dma.done %s1650, 1024
        $region80: #{base_model_forward.3} parent=75 // pred_fallthru
          _
      $region76: #{base_model_forward.3} parent=5 // pred_fallthru
        _
    $region6: #{base_model_forward.3} parent=1 // loop_footer
      %s25 = sadd.s32 1, %s21
    $region7: #{base_model_forward.3} parent=1 // loop_footer_branch
      %20 = sbr.rel target = $region3
    $region8: #{base_model_forward.3} parent=1 // loop_exit
      _
    %1655 = vsyncpa [#allocation3], 1
    %s1656 = scalar_lea.sflag [#allocation3], 1
    %1657 = vsyncpa %s1656, 1

</llo_original>
